<compile_context>
chip_gen: v7x
topology: tpu7x:2x2x1
jax: 0.10.0
libtpu: 0.0.40
codegen_flags: <defaults>
</compile_context>

<pallas_src>
import functools

import jax
import jax.numpy as jnp
from jax.experimental import pallas as pl
from jax.experimental.pallas import tpu as pltpu


# Feed the MXU bf16 operands while keeping f32 VMEM accumulators (2-4x matmul throughput on
# v5e/v6e/v7x).  The correctness check below uses a tolerance sized for bf16 operands.
USE_BF16_MXU = True
# EUP vrcp for the softmax denominator (cheap; ~1e-3 relative). Set False for exact parity runs.
SOFTMAX_APPROX_RECIPROCAL = True


def _mxu(x):
    return x.astype(jnp.bfloat16) if USE_BF16_MXU else x


def _gelu_exact(x):
    # exact (erf-based) GELU, matching torch.nn.functional.gelu / ACT2FN['gelu']
    return 0.5 * x * (1.0 + jax.lax.erf(x * jnp.float32(0.7071067811865476)))


def _pick_tile(dim, target, align):
    """Largest tile <= target that is a multiple of `align` and divides `dim`.
    Falls back to the full dim (always a legal block shape).
    TODO(synk): pad awkward dims to a tile multiple (cdiv grid + masked epilogue) instead of
                silently falling back to one huge block."""
    if dim <= target:
        return dim
    t = (target // align) * align
    while t >= align:
        if dim % t == 0:
            return t
        t -= align
    return dim


# --------------------------------------------------------------------------------------
# Kernel 1: tiled matmul  y = act(x @ w + b) [+ residual]
# --------------------------------------------------------------------------------------

def _matmul_kernel(*refs, activation, has_residual):
    if has_residual:
        x_ref, w_ref, b_ref, r_ref, o_ref, acc_ref = refs
    else:
        x_ref, w_ref, b_ref, o_ref, acc_ref = refs
        r_ref = None
    k = pl.program_id(2)

    @pl.when(k == 0)
    def _():
        acc_ref[...] = jnp.zeros_like(acc_ref)

    acc_ref[...] += jnp.dot(_mxu(x_ref[...]), _mxu(w_ref[...]),
                            preferred_element_type=jnp.float32)

    @pl.when(k == pl.num_programs(2) - 1)
    def _():
        y = acc_ref[...] + b_ref[...].astype(jnp.float32)
        if activation == "gelu":
            y = _gelu_exact(y)
        if has_residual:
            y = y + r_ref[...].astype(jnp.float32)
        o_ref[...] = y.astype(o_ref.dtype)


def pallas_matmul(x, w, b, *, activation=None, residual=None, out_dtype=None,
                  tm_target=512, tn_target=256, tk_target=512):
    M, K = x.shape
    N = w.shape[1]
    out_dtype = x.dtype if out_dtype is None else out_dtype
    tm = _pick_tile(M, tm_target, 8)
    tn = _pick_tile(N, tn_target, 128)
    tk = _pick_tile(K, tk_target, 128)
    in_specs = [
        pl.BlockSpec((tm, tk), lambda i, j, k: (i, k)),
        pl.BlockSpec((tk, tn), lambda i, j, k: (k, j)),
        pl.BlockSpec((1, tn), lambda i, j, k: (0, j)),
    ]
    args = [x, w, b.reshape(1, N)]
    if residual is not None:
        in_specs.append(pl.BlockSpec((tm, tn), lambda i, j, k: (i, j)))
        args.append(residual)
    kernel = functools.partial(_matmul_kernel, activation=activation,
                               has_residual=residual is not None)
    return pl.pallas_call(
        kernel,
        out_shape=jax.ShapeDtypeStruct((M, N), out_dtype),
        grid=(M // tm, N // tn, K // tk),
        in_specs=in_specs,
        out_specs=pl.BlockSpec((tm, tn), lambda i, j, k: (i, j)),
        scratch_shapes=[pltpu.VMEM((tm, tn), jnp.float32)],
        compiler_params=pltpu.CompilerParams(
            dimension_semantics=("parallel", "parallel", "arbitrary")),
    )(*args)


# --------------------------------------------------------------------------------------
# Kernel 2: matmul with fused  act -> +residual -> LayerNorm  epilogue  (full N per tile)
# --------------------------------------------------------------------------------------

def _matmul_add_ln_kernel(x_ref, w_ref, b_ref, r_ref, g_ref, be_ref, o_ref, acc_ref,
                          *, activation, eps):
    k = pl.program_id(1)

    @pl.when(k == 0)
    def _():
        acc_ref[...] = jnp.zeros_like(acc_ref)

    acc_ref[...] += jnp.dot(_mxu(x_ref[...]), _mxu(w_ref[...]),
                            preferred_element_type=jnp.float32)

    @pl.when(k == pl.num_programs(1) - 1)
    def _():
        y = acc_ref[...] + b_ref[...].astype(jnp.float32)
        if activation == "gelu":
            y = _gelu_exact(y)
        y = y + r_ref[...].astype(jnp.float32)
        mean = jnp.mean(y, axis=-1, keepdims=True)
        c = y - mean
        var = jnp.mean(c * c, axis=-1, keepdims=True)
        yn = c * jax.lax.rsqrt(var + jnp.float32(eps))
        yn = yn * g_ref[...].astype(jnp.float32) + be_ref[...].astype(jnp.float32)
        o_ref[...] = yn.astype(o_ref.dtype)


def pallas_matmul_add_ln(x, w, b, residual, gamma, beta, *, activation=None, eps=1e-5,
                         out_dtype=None, tm_target=512, tk_target=512):
    M, K = x.shape
    N = w.shape[1]
    out_dtype = residual.dtype if out_dtype is None else out_dtype
    tm = _pick_tile(M, tm_target, 8)
    tk = _pick_tile(K, tk_target, 128)
    kernel = functools.partial(_matmul_add_ln_kernel, activation=activation, eps=eps)
    return pl.pallas_call(
        kernel,
        out_shape=jax.ShapeDtypeStruct((M, N), out_dtype),
        grid=(M // tm, K // tk),
        in_specs=[
            pl.BlockSpec((tm, tk), lambda i, k: (i, k)),
            pl.BlockSpec((tk, N), lambda i, k: (k, 0)),
            pl.BlockSpec((1, N), lambda i, k: (0, 0)),
            pl.BlockSpec((tm, N), lambda i, k: (i, 0)),
            pl.BlockSpec((1, N), lambda i, k: (0, 0)),
            pl.BlockSpec((1, N), lambda i, k: (0, 0)),
        ],
        out_specs=pl.BlockSpec((tm, N), lambda i, k: (i, 0)),
        scratch_shapes=[pltpu.VMEM((tm, N), jnp.float32)],
        compiler_params=pltpu.CompilerParams(
            dimension_semantics=("parallel", "arbitrary"),
            vmem_limit_bytes=48 * 1024 * 1024),
    )(x, w, b.reshape(1, N), residual, gamma.reshape(1, N), beta.reshape(1, N))


# --------------------------------------------------------------------------------------
# Kernel 3: fused FFN   y = LN( gelu(x @ W1 + b1) @ W2 + b2 + x ) * g + beta
#           (loops over F tiles; the (tm, tf) GELU intermediate never touches HBM)
# --------------------------------------------------------------------------------------

def _ffn_kernel(x_ref, w1_ref, b1_ref, w2_ref, b2_ref, g_ref, be_ref, o_ref, acc_ref, *, eps):
    f = pl.program_id(1)

    @pl.when(f == 0)
    def _():
        acc_ref[...] = jnp.zeros_like(acc_ref)

    h = jnp.dot(_mxu(x_ref[...]), _mxu(w1_ref[...]), preferred_element_type=jnp.float32)
    h = _gelu_exact(h + b1_ref[...].astype(jnp.float32))
    acc_ref[...] += jnp.dot(_mxu(h), _mxu(w2_ref[...]), preferred_element_type=jnp.float32)

    @pl.when(f == pl.num_programs(1) - 1)
    def _():
        # residual is the kernel input itself (same row tile), added in f32
        y = acc_ref[...] + b2_ref[...].astype(jnp.float32) + x_ref[...].astype(jnp.float32)
        mean = jnp.mean(y, axis=-1, keepdims=True)
        c = y - mean
        var = jnp.mean(c * c, axis=-1, keepdims=True)
        yn = c * jax.lax.rsqrt(var + jnp.float32(eps))
        yn = yn * g_ref[...].astype(jnp.float32) + be_ref[...].astype(jnp.float32)
        o_ref[...] = yn.astype(o_ref.dtype)


def pallas_ffn(x, w1, b1, w2, b2, gamma, beta, *, eps=1e-5, tm_target=512, tf_target=256):
    M, E = x.shape
    F = w1.shape[1]
    tm = _pick_tile(M, tm_target, 8)
    tf = _pick_tile(F, tf_target, 128)
    kernel = functools.partial(_ffn_kernel, eps=eps)
    return pl.pallas_call(
        kernel,
        out_shape=jax.ShapeDtypeStruct((M, E), x.dtype),
        grid=(M // tm, F // tf),
        in_specs=[
            pl.BlockSpec((tm, E), lambda i, f: (i, 0)),
            pl.BlockSpec((E, tf), lambda i, f: (0, f)),
            pl.BlockSpec((1, tf), lambda i, f: (0, f)),
            pl.BlockSpec((tf, E), lambda i, f: (f, 0)),
            pl.BlockSpec((1, E), lambda i, f: (0, 0)),
            pl.BlockSpec((1, E), lambda i, f: (0, 0)),
            pl.BlockSpec((1, E), lambda i, f: (0, 0)),
        ],
        out_specs=pl.BlockSpec((tm, E), lambda i, f: (i, 0)),
        scratch_shapes=[pltpu.VMEM((tm, E), jnp.float32)],
        compiler_params=pltpu.CompilerParams(
            dimension_semantics=("parallel", "arbitrary"),
            vmem_limit_bytes=48 * 1024 * 1024),
    )(x, w1, b1.reshape(1, F), w2, b2.reshape(1, E),
      gamma.reshape(1, E), beta.reshape(1, E))


# --------------------------------------------------------------------------------------
# Kernel 4: dual-input matmul  y = gelu(x1 @ W_top + x2 @ W_bot + b)
#           (plugin fc1 over the *implicit* concat([hidden, pos]) — no HBM concat)
# TODO(synk): convert to the tiled-accumulator pattern if the plugin dims ever get large.
# --------------------------------------------------------------------------------------

def _dual_matmul_gelu_kernel(x1_ref, x2_ref, w1_ref, w2_ref, b_ref, o_ref):
    y = jnp.dot(_mxu(x1_ref[...]), _mxu(w1_ref[...]), preferred_element_type=jnp.float32)
    y += jnp.dot(_mxu(x2_ref[...]), _mxu(w2_ref[...]), preferred_element_type=jnp.float32)
    y = _gelu_exact(y + b_ref[...].astype(jnp.float32))
    o_ref[...] = y.astype(o_ref.dtype)


def pallas_dual_matmul_gelu(x1, x2, w1, w2, b, *, tm_target=256):
    M, K1 = x1.shape
    K2 = x2.shape[1]
    N = w1.shape[1]
    tm = _pick_tile(M, tm_target, 8)
    return pl.pallas_call(
        _dual_matmul_gelu_kernel,
        out_shape=jax.ShapeDtypeStruct((M, N), x1.dtype),
        grid=(M // tm,),
        in_specs=[
            pl.BlockSpec((tm, K1), lambda i: (i, 0)),
            pl.BlockSpec((tm, K2), lambda i: (i, 0)),
            pl.BlockSpec((K1, N), lambda i: (0, 0)),
            pl.BlockSpec((K2, N), lambda i: (0, 0)),
            pl.BlockSpec((1, N), lambda i: (0, 0)),
        ],
        out_specs=pl.BlockSpec((tm, N), lambda i: (i, 0)),
        compiler_params=pltpu.CompilerParams(dimension_semantics=("parallel",)),
    )(x1, x2, w1, w2, b.reshape(1, N))


# --------------------------------------------------------------------------------------
# Kernel 5: flash-style attention over the fused (B, T, 3E) QKV slab.
#   grid = (B, head_groups, q_tiles, kv_tiles); the KV axis is innermost / "arbitrary"; the
#   running max / denominator / output accumulator live in VMEM scratch, so no (T, T) score
#   matrix is ever resident.  When (G*d_head) is a 128 multiple, the Q/K/V blocks of a head
#   group are gathered lane-dense straight from the slab by the BlockSpec DMA; tiny shapes
#   fall back to one full-width group.
# --------------------------------------------------------------------------------------

def _flash_attn_kernel(*refs, G, d, E, grouped, has_mask, has_head_mask):
    i = 0
    q_ref = refs[i]; i += 1
    if grouped:
        k_ref = refs[i]; i += 1
        v_ref = refs[i]; i += 1
    else:
        kv_ref = refs[i]; i += 1
    mask_ref = None
    if has_mask:
        mask_ref = refs[i]; i += 1
    hm_ref = None
    if has_head_mask:
        hm_ref = refs[i]; i += 1
    o_ref = refs[i]; i += 1
    m_sc, l_sc, acc_sc = refs[i], refs[i + 1], refs[i + 2]

    ki = pl.program_id(3)

    @pl.when(ki == 0)
    def _():
        m_sc[...] = jnp.full(m_sc.shape, -jnp.inf, m_sc.dtype)
        l_sc[...] = jnp.zeros(l_sc.shape, l_sc.dtype)
        acc_sc[...] = jnp.zeros(acc_sc.shape, acc_sc.dtype)

    q_all = q_ref[0]                                       # (TQ, Gd) or (TQ, 3E)
    if grouped:
        k_all = k_ref[0]                                   # (TK, Gd)
        v_all = v_ref[0]
    else:
        kv_all = kv_ref[0]                                 # (TK, 3E)
    mask = mask_ref[0].astype(jnp.float32) if has_mask else None   # (TQ, TK)

    for h in range(G):                                     # static unroll over heads in group
        if grouped:
            q = q_all[:, h * d:(h + 1) * d]
            k = k_all[:, h * d:(h + 1) * d]
            v = v_all[:, h * d:(h + 1) * d]
        else:
            q = q_all[:, h * d:(h + 1) * d]
            k = kv_all[:, E + h * d:E + (h + 1) * d]
            v = kv_all[:, 2 * E + h * d:2 * E + (h + 1) * d]
        # contract last dims directly (no K transpose); q already carries the 1/sqrt(d) scale
        s = jax.lax.dot_general(_mxu(q), _mxu(k), (((1,), (1,)), ((), ())),
                                preferred_element_type=jnp.float32)       # (TQ, TK)
        if has_mask:
            s = s + mask
        m_prev = m_sc[h]                                   # (TQ, 1)
        m_new = jnp.maximum(m_prev, jnp.max(s, axis=-1, keepdims=True))
        alpha = jnp.exp(m_prev - m_new)
        p = jnp.exp(s - m_new)
        l_sc[h] = alpha * l_sc[h] + jnp.sum(p, axis=-1, keepdims=True)
        pv = jax.lax.dot_general(_mxu(p), _mxu(v), (((1,), (0,)), ((), ())),
                                 preferred_element_type=jnp.float32)      # (TQ, d)
        acc_sc[h] = alpha * acc_sc[h] + pv
        m_sc[h] = m_new

    @pl.when(ki == pl.num_programs(3) - 1)
    def _():
        outs = []
        for h in range(G):
            outs.append(acc_sc[h] * pl.reciprocal(l_sc[h],
                                                  approx=SOFTMAX_APPROX_RECIPROCAL))
        o = outs[0] if G == 1 else jnp.concatenate(outs, axis=-1)         # lane-dense block
        if has_head_mask:
            o = o * hm_ref[0]                               # (1, Gd) row, pre-expanded
        o_ref[0] = o.astype(o_ref.dtype)


def pallas_attention(qkv2d, B, T, embed_dim, num_heads, attention_mask=None,
                     head_mask=None, out_dtype=None, tq_target=256, tk_target=512):
    E = embed_dim
    d = E // num_heads
    out_dtype = qkv2d.dtype if out_dtype is None else out_dtype
    qkv = qkv2d.reshape(B, T, 3 * E)

    # head grouping: smallest G dividing H with lane-dense (G*d % 128 == 0) per-group blocks
    # (head pairs at d_head=64); fall back to one full-width group for tiny head dims.
    G = None
    for cand in range(1, num_heads + 1):
        if num_heads % cand == 0 and (cand * d) % 128 == 0:
            G = cand
            break
    grouped = G is not None
    if not grouped:
        G = num_heads
    NG = num_heads // G
    Gd = G * d

    TQ = _pick_tile(T, tq_target, 8)
    TK = _pick_tile(T, tk_target, 128)

    if grouped:
        args = [qkv, qkv, qkv]
        in_specs = [
            pl.BlockSpec((1, TQ, Gd), lambda b, g, qi, ki: (b, qi, g)),
            pl.BlockSpec((1, TK, Gd), lambda b, g, qi, ki: (b, ki, NG + g)),
            pl.BlockSpec((1, TK, Gd), lambda b, g, qi, ki: (b, ki, 2 * NG + g)),
        ]
        out_spec = pl.BlockSpec((1, TQ, Gd), lambda b, g, qi, ki: (b, qi, g))
    else:
        args = [qkv, qkv]
        in_specs = [
            pl.BlockSpec((1, TQ, 3 * E), lambda b, g, qi, ki: (b, qi, 0)),
            pl.BlockSpec((1, TK, 3 * E), lambda b, g, qi, ki: (b, ki, 0)),
        ]
        out_spec = pl.BlockSpec((1, TQ, E), lambda b, g, qi, ki: (b, qi, 0))

    has_mask = attention_mask is not None
    if has_mask:
        assert attention_mask.shape in ((B, 1, T, T), (B, T, T)), (
            "attention_mask must be (B, 1, T, T); per-head masks are unsupported")
        args.append(attention_mask.reshape(B, T, T))
        in_specs.append(pl.BlockSpec((1, TQ, TK), lambda b, g, qi, ki: (b, qi, ki)))

    has_head_mask = head_mask is not None
    if has_head_mask:
        # expand (H,) -> (NG, 1, G*d): lane-wise multiply on the assembled group output
        hm = jnp.repeat(head_mask.astype(jnp.float32), d).reshape(NG, 1, Gd)
        args.append(hm)
        in_specs.append(pl.BlockSpec((1, 1, Gd), lambda b, g, qi, ki: (g, 0, 0)))

    kernel = functools.partial(_flash_attn_kernel, G=G, d=d, E=E, grouped=grouped,
                               has_mask=has_mask, has_head_mask=has_head_mask)
    out = pl.pallas_call(
        kernel,
        out_shape=jax.ShapeDtypeStruct((B, T, E), out_dtype),
        grid=(B, NG, T // TQ, T // TK),
        in_specs=in_specs,
        out_specs=out_spec,
        scratch_shapes=[pltpu.VMEM((G, TQ, 1), jnp.float32),
                        pltpu.VMEM((G, TQ, 1), jnp.float32),
                        pltpu.VMEM((G, TQ, d), jnp.float32)],
        compiler_params=pltpu.CompilerParams(
            dimension_semantics=("parallel", "parallel", "parallel", "arbitrary")),
    )(*args)
    return out.reshape(B * T, E)


# --------------------------------------------------------------------------------------
# Module forward (glue in plain JAX, hot paths in the kernels above)
# --------------------------------------------------------------------------------------

def bb_bart_encoder_layer(hidden_states, attention_mask, layer_head_mask,
                          hidden_position_states, params, *, num_heads,
                          plugin_num_heads, use_plugin=True):
    """Forward of BbBartEncoderLayer (eval mode; dropouts are identity).
    `num_heads` / `plugin_num_heads` / `use_plugin` are static (bake via functools.partial)."""
    B, T, E = hidden_states.shape
    x2d = hidden_states.reshape(B * T, E)
    slab_dtype = jnp.bfloat16 if USE_BF16_MXU else hidden_states.dtype

    if attention_mask is not None:
        assert attention_mask.shape in ((B, 1, T, T), (B, T, T)), (
            "attention_mask must be (B, 1, T, T)")

    # --- self attention block (fused QKV -> flash attention -> out_proj + residual + LN1) ---
    pa = params["attn"]
    qkv = pallas_matmul(x2d, pa["wqkv"], pa["bqkv"], out_dtype=slab_dtype)
    attn = pallas_attention(qkv, B, T, E, num_heads, attention_mask, layer_head_mask)
    h = pallas_matmul_add_ln(attn, pa["wo"], pa["bo"], residual=x2d,
                             gamma=params["ln1_g"], beta=params["ln1_b"],
                             out_dtype=hidden_states.dtype)

    # --- feed-forward block (fc1 + GELU + fc2 + residual + LN2 fused) ---
    h = pallas_ffn(h, params["fc1_w"], params["fc1_b"], params["fc2_w"], params["fc2_b"],
                   gamma=params["ln2_g"], beta=params["ln2_b"])
    hidden_out = h.reshape(B, T, E)
    # TODO(synk): fp16 inf/nan clamp branch skipped (we run in float32/bf16-MXU).

    # --- plugin (ExtendEncoderLayer) ---
    hidden_position_out = None
    if hidden_position_states is not None:
        pp = params["plugin"]
        Ep = hidden_position_states.shape[-1]
        pos2d = hidden_position_states.reshape(B * T, Ep)
        # fc1 over concat([hidden, pos]) without materializing the concat in HBM
        p1 = pallas_dual_matmul_gelu(x2d, pos2d, pp["fc1_w_h"], pp["fc1_w_p"], pp["fc1_b"])
        if use_plugin:
            ppa = pp["attn"]
            qkv_p = pallas_matmul(p1, ppa["wqkv"], ppa["bqkv"], out_dtype=slab_dtype)
            # TODO(synk): torch forwards layer_head_mask (size H) to the plugin, which only
            #             type-checks when H == num_added_heads; we run the plugin unmasked.
            attn_p = pallas_attention(qkv_p, B, T, Ep, plugin_num_heads, attention_mask, None)
            # plugin: out_proj + residual add only (no layernorm after its attention)
            p2 = pallas_matmul(attn_p, ppa["wo"], ppa["bo"], residual=p1, out_dtype=p1.dtype)
            # final: LN(gelu(fc2(p2)) + p2)
            pout = pallas_matmul_add_ln(p2, pp["fc2_w"], pp["fc2_b"], residual=p2,
                                        gamma=pp["ln_g"], beta=pp["ln_b"],
                                        activation="gelu", out_dtype=p1.dtype)
            hidden_position_out = pout.reshape(B, T, Ep)
        else:
            hidden_position_out = p1.reshape(B, T, Ep)

    if hidden_position_out is not None:
        return hidden_out, hidden_position_out
    return (hidden_out,)


# --------------------------------------------------------------------------------------
# Parameter construction / preparation (arrays only — static config never enters the pytree)
# --------------------------------------------------------------------------------------

def make_params(key, E, H, F, num_added_heads, dtype=jnp.float32):
    """Raw (torch-like) parameters: individual q/k/v/out projections, fc, layernorms."""
    d = E // H
    Ep = d * num_added_heads
    outer = E + Ep
    keys = iter(jax.random.split(key, 64))

    def w(shape, std=0.02):
        return (std * jax.random.normal(next(keys), shape)).astype(dtype)

    def attn_params(dim):
        return dict(wq=w((dim, dim)), bq=w((dim,)),
                    wk=w((dim, dim)), bk=w((dim,)),
                    wv=w((dim, dim)), bv=w((dim,)),
                    wo=w((dim, dim)), bo=w((dim,)))

    return dict(
        attn=attn_params(E),
        ln1_g=jnp.ones((E,), dtype), ln1_b=jnp.zeros((E,), dtype),
        fc1_w=w((E, F)), fc1_b=w((F,)),
        fc2_w=w((F, E)), fc2_b=w((E,)),
        ln2_g=jnp.ones((E,), dtype), ln2_b=jnp.zeros((E,), dtype),
        plugin=dict(
            fc1_w=w((outer, Ep)), fc1_b=w((Ep,)),
            attn=attn_params(Ep),
            fc2_w=w((Ep, Ep)), fc2_b=w((Ep,)),
            ln_g=jnp.ones((Ep,), dtype), ln_b=jnp.zeros((Ep,), dtype),
        ),
    )


def prepare_kernel_params(raw, num_heads, plugin_num_heads):
    """One-time prep: fuse QKV weights (folding the 1/sqrt(d) Q scale) and split plugin fc1."""
    E = raw["attn"]["wq"].shape[0]

    def fuse_attn(a, nh):
        dim = a["wq"].shape[0]
        s = jnp.asarray((dim // nh) ** -0.5, a["wq"].dtype)
        wqkv = jnp.concatenate([a["wq"] * s, a["wk"], a["wv"]], axis=1)
        bqkv = jnp.concatenate([a["bq"] * s, a["bk"], a["bv"]], axis=0)
        return dict(wqkv=wqkv, bqkv=bqkv, wo=a["wo"], bo=a["bo"])

    p = raw["plugin"]
    return dict(
        attn=fuse_attn(raw["attn"], num_heads),
        ln1_g=raw["ln1_g"], ln1_b=raw["ln1_b"],
        fc1_w=raw["fc1_w"], fc1_b=raw["fc1_b"],
        fc2_w=raw["fc2_w"], fc2_b=raw["fc2_b"],
        ln2_g=raw["ln2_g"], ln2_b=raw["ln2_b"],
        plugin=dict(
            fc1_w_h=p["fc1_w"][:E], fc1_w_p=p["fc1_w"][E:], fc1_b=p["fc1_b"],
            attn=fuse_attn(p["attn"], plugin_num_heads),
            fc2_w=p["fc2_w"], fc2_b=p["fc2_b"],
            ln_g=p["ln_g"], ln_b=p["ln_b"],
        ),
    )


# --------------------------------------------------------------------------------------
# Pure-JAX reference (same math) for verification
# --------------------------------------------------------------------------------------

def _ref_gelu(x):
    return 0.5 * x * (1.0 + jax.scipy.special.erf(x * 0.7071067811865476))


def _ref_ln(x, g, b, eps=1e-5):
    m = jnp.mean(x, axis=-1, keepdims=True)
    v = jnp.mean((x - m) ** 2, axis=-1, keepdims=True)
    return (x - m) / jnp.sqrt(v + eps) * g + b


def _ref_mha(x2d, a, B, T, nheads, head_mask, mask):
    E_in = x2d.shape[1]
    dh = E_in // nheads
    sc = dh ** (-0.5)
    q = (x2d @ a["wq"] + a["bq"]) * sc
    k = x2d @ a["wk"] + a["bk"]
    v = x2d @ a["wv"] + a["bv"]

    def shp(t):
        return jnp.transpose(t.reshape(B, T, nheads, dh), (0, 2, 1, 3))

    q, k, v = shp(q), shp(k), shp(v)
    s = jnp.einsum("bhtd,bhsd->bhts", q, k)
    if mask is not None:
        s = s + mask
    w_ = jax.nn.softmax(s, axis=-1)
    if head_mask is not None:
        w_ = w_ * head_mask[None, :, None, None]
    o = jnp.einsum("bhts,bhsd->bhtd", w_, v)
    o = jnp.transpose(o, (0, 2, 1, 3)).reshape(B * T, E_in)
    return o @ a["wo"] + a["bo"]


def ref_forward(hidden_states, attention_mask, layer_head_mask, hidden_position_states,
                raw, num_heads, plugin_num_heads, use_plugin=True):
    B, T, E = hidden_states.shape
    x2d = hidden_states.reshape(B * T, E)
    mask = None if attention_mask is None else attention_mask.reshape(B, 1, T, T)

    attn_out = _ref_mha(x2d, raw["attn"], B, T, num_heads, layer_head_mask, mask)
    h = _ref_ln(attn_out + x2d, raw["ln1_g"], raw["ln1_b"])
    h2 = _ref_gelu(h @ raw["fc1_w"] + raw["fc1_b"]) @ raw["fc2_w"] + raw["fc2_b"]
    h = _ref_ln(h2 + h, raw["ln2_g"], raw["ln2_b"])
    hidden_out = h.reshape(B, T, E)

    pp = raw["plugin"]
    Ep = hidden_position_states.shape[-1]
    concat = jnp.concatenate([hidden_states, hidden_position_states],
                             axis=-1).reshape(B * T, E + Ep)
    p1 = _ref_gelu(concat @ pp["fc1_w"] + pp["fc1_b"])
    if use_plugin:
        attn_p = _ref_mha(p1, pp["attn"], B, T, plugin_num_heads, None, mask)
        p2 = p1 + attn_p
        p3 = _ref_gelu(p2 @ pp["fc2_w"] + pp["fc2_b"])
        pout = _ref_ln(p3 + p2, pp["ln_g"], pp["ln_b"])
    else:
        pout = p1
    return hidden_out, pout.reshape(B, T, Ep)


# --------------------------------------------------------------------------------------
# Example
# --------------------------------------------------------------------------------------

if __name__ == "__main__":
    key = jax.random.PRNGKey(0)
    B, T, E, H, F = 2, 8, 32, 4, 64          # d_model=32, heads=4, encoder_ffn_dim=64
    num_added_heads = 2                       # plugin embed_dim = (32/4)*2 = 16, outer_dim = 48
    kx, kp, kh = jax.random.split(key, 3)

    hidden_states = jax.random.normal(kx, (B, T, E), jnp.float32)
    Ep = (E // H) * num_added_heads
    hidden_position_states = jax.random.normal(kh, (B, T, Ep), jnp.float32)

    attention_mask = jnp.zeros((B, 1, T, T), jnp.float32)
    attention_mask = attention_mask.at[1, 0, :, T - 2:].set(-1e9)  # mask last 2 keys of batch 1
    layer_head_mask = jnp.array([1.0, 0.5, 0.0, 1.25], jnp.float32)

    raw_params = make_params(kp, E, H, F, num_added_heads)
    kparams = prepare_kernel_params(raw_params, H, num_added_heads)   # one-time fusion

    fwd = jax.jit(functools.partial(bb_bart_encoder_layer, num_heads=H,
                                    plugin_num_heads=num_added_heads, use_plugin=True))
    out_h, out_p = fwd(hidden_states, attention_mask, layer_head_mask,
                       hidden_position_states, kparams)
    jax.block_until_ready((out_h, out_p))

    ref_h, ref_p = ref_forward(hidden_states, attention_mask, layer_head_mask,
                               hidden_position_states, raw_params, H, num_added_heads,
                               use_plugin=True)

    assert out_h.shape == (B, T, E) and out_p.shape == (B, T, Ep)
    # tolerance covers bf16 MXU operands + pl.reciprocal(approx=True) softmax denominator
    assert jnp.allclose(out_h.astype(jnp.float32), ref_h, atol=5e-2, rtol=5e-2), \
        "main path mismatch"
    assert jnp.allclose(out_p.astype(jnp.float32), ref_p, atol=5e-2, rtol=5e-2), \
        "plugin path mismatch"

    print("KERNEL_OK")
</pallas_src>

<mosaic_0001>
module attributes {stable_mosaic.version = 11 : i64} {
  func.func @_flash_attn_kernel(%arg0: i32, %arg1: i32, %arg2: i32, %arg3: i32, %arg4: memref<1x8x96xbf16, #tpu.memory_space<vmem>>, %arg5: memref<1x8x96xbf16, #tpu.memory_space<vmem>>, %arg6: memref<1x8x8xf32, #tpu.memory_space<vmem>>, %arg7: memref<1x1x32xf32, #tpu.memory_space<vmem>>, %arg8: memref<1x8x32xbf16, #tpu.memory_space<vmem>>, %arg9: memref<4x8x1xf32, #tpu.memory_space<vmem>>, %arg10: memref<4x8x1xf32, #tpu.memory_space<vmem>>, %arg11: memref<4x8x8xf32, #tpu.memory_space<vmem>>) attributes {dimension_semantics = [#tpu.dimension_semantics<parallel>, #tpu.dimension_semantics<parallel>, #tpu.dimension_semantics<parallel>, #tpu.dimension_semantics<arbitrary>], iteration_bounds = array<i64: 2, 1, 1, 1>, scalar_prefetch = 0 : i64, scratch_operands = 3 : i64, tpu.core_type = #tpu.core_type<tc>, window_params = [{transform_indices = @transform_0, window_bounds = array<i64: 1, 8, 96>}, {transform_indices = @transform_1, window_bounds = array<i64: 1, 8, 96>}, {transform_indices = @transform_2, window_bounds = array<i64: 1, 8, 8>}, {transform_indices = @transform_3, window_bounds = array<i64: 1, 1, 32>}, {transform_indices = @transform_4, window_bounds = array<i64: 1, 8, 32>}]} {
    %c0_i32 = arith.constant 0 : i32
    %0 = arith.cmpi eq, %arg3, %c0_i32 : i32
    %1 = arith.extui %0 : i1 to i32
    %c0_i32_0 = arith.constant 0 : i32
    %2 = arith.cmpi ne, %1, %c0_i32_0 : i32
    scf.if %2 {
      %cst_95 = arith.constant 0xFF800000 : f32
      %160 = vector.broadcast %cst_95 : f32 to vector<4x8x1xf32>
      %c0_96 = arith.constant 0 : index
      %c0_97 = arith.constant 0 : index
      %c0_98 = arith.constant 0 : index
      %161 = vector.load %arg9[%c0_96, %c0_97, %c0_98] : memref<4x8x1xf32, #tpu.memory_space<vmem>>, vector<4x8x1xf32>
      tpu.vector_store %arg9[%c0_96, %c0_97, %c0_98], %160 {strides = array<i32>} : memref<4x8x1xf32, #tpu.memory_space<vmem>>, vector<4x8x1xf32>,
      %cst_99 = arith.constant 0.000000e+00 : f32
      %162 = vector.broadcast %cst_99 : f32 to vector<4x8x1xf32>
      %c0_100 = arith.constant 0 : index
      %c0_101 = arith.constant 0 : index
      %c0_102 = arith.constant 0 : index
      %163 = vector.load %arg10[%c0_100, %c0_101, %c0_102] : memref<4x8x1xf32, #tpu.memory_space<vmem>>, vector<4x8x1xf32>
      tpu.vector_store %arg10[%c0_100, %c0_101, %c0_102], %162 {strides = array<i32>} : memref<4x8x1xf32, #tpu.memory_space<vmem>>, vector<4x8x1xf32>,
      %cst_103 = arith.constant 0.000000e+00 : f32
      %164 = vector.broadcast %cst_103 : f32 to vector<4x8x8xf32>
      %c0_104 = arith.constant 0 : index
      %c0_105 = arith.constant 0 : index
      %c0_106 = arith.constant 0 : index
      %165 = vector.load %arg11[%c0_104, %c0_105, %c0_106] : memref<4x8x8xf32, #tpu.memory_space<vmem>>, vector<4x8x8xf32>
      tpu.vector_store %arg11[%c0_104, %c0_105, %c0_106], %164 {strides = array<i32>} : memref<4x8x8xf32, #tpu.memory_space<vmem>>, vector<4x8x8xf32>,
    } else {
    }
    %c0 = arith.constant 0 : index
    %c0_1 = arith.constant 0 : index
    %c0_2 = arith.constant 0 : index
    %3 = vector.load %arg4[%c0, %c0_1, %c0_2] : memref<1x8x96xbf16, #tpu.memory_space<vmem>>, vector<1x8x96xbf16>
    %4 = vector.shape_cast %3 : vector<1x8x96xbf16> to vector<8x96xbf16>
    %c0_3 = arith.constant 0 : index
    %c0_4 = arith.constant 0 : index
    %c0_5 = arith.constant 0 : index
    %5 = vector.load %arg5[%c0_3, %c0_4, %c0_5] : memref<1x8x96xbf16, #tpu.memory_space<vmem>>, vector<1x8x96xbf16>
    %6 = vector.shape_cast %5 : vector<1x8x96xbf16> to vector<8x96xbf16>
    %c0_6 = arith.constant 0 : index
    %c0_7 = arith.constant 0 : index
    %c0_8 = arith.constant 0 : index
    %7 = vector.load %arg6[%c0_6, %c0_7, %c0_8] : memref<1x8x8xf32, #tpu.memory_space<vmem>>, vector<1x8x8xf32>
    %8 = vector.shape_cast %7 : vector<1x8x8xf32> to vector<8x8xf32>
    %9 = vector.extract_strided_slice %4 {offsets = [0, 0], sizes = [8, 8], strides = [1, 1]} : vector<8x96xbf16> to vector<8x8xbf16>
    %10 = vector.extract_strided_slice %6 {offsets = [0, 32], sizes = [8, 8], strides = [1, 1]} : vector<8x96xbf16> to vector<8x8xbf16>
    %11 = vector.extract_strided_slice %6 {offsets = [0, 64], sizes = [8, 8], strides = [1, 1]} : vector<8x96xbf16> to vector<8x8xbf16>
    %cst = arith.constant dense<0.000000e+00> : vector<8x8xf32>
    %12 = tpu.matmul %9, %10, %cst {dimension_numbers = #tpu.dot_dimension_numbers<[1], [1], [0], [0], [0, 0, 1, 0], [], []>} : vector<8x8xbf16>, vector<8x8xbf16>, vector<8x8xf32> -> vector<8x8xf32>
    %13 = arith.addf %12, %8 : vector<8x8xf32>
    %c0_9 = arith.constant 0 : index
    %c0_10 = arith.constant 0 : index
    %c0_11 = arith.constant 0 : index
    %14 = vector.load %arg9[%c0_9, %c0_10, %c0_11] : memref<4x8x1xf32, #tpu.memory_space<vmem>>, vector<1x8x1xf32>
    %15 = vector.shape_cast %14 : vector<1x8x1xf32> to vector<8x1xf32>
    %cst_12 = arith.constant dense<0xFF800000> : vector<8xf32>
    %16 = vector.multi_reduction <maximumf>, %13, %cst_12 [1] : vector<8x8xf32> to vector<8xf32>
    %17 = vector.shape_cast %16 : vector<8xf32> to vector<8x1xf32>
    %18 = arith.maximumf %15, %17 : vector<8x1xf32>
    %19 = arith.subf %15, %18 : vector<8x1xf32>
    %20 = math.exp %19 : vector<8x1xf32>
    %21 = vector.broadcast %18 : vector<8x1xf32> to vector<8x8xf32>
    %22 = arith.subf %13, %21 : vector<8x8xf32>
    %23 = math.exp %22 : vector<8x8xf32>
    %c0_13 = arith.constant 0 : index
    %c0_14 = arith.constant 0 : index
    %c0_15 = arith.constant 0 : index
    %24 = vector.load %arg10[%c0_13, %c0_14, %c0_15] : memref<4x8x1xf32, #tpu.memory_space<vmem>>, vector<1x8x1xf32>
    %25 = vector.shape_cast %24 : vector<1x8x1xf32> to vector<8x1xf32>
    %26 = arith.mulf %20, %25 : vector<8x1xf32>
    %cst_16 = arith.constant dense<0.000000e+00> : vector<8xf32>
    %27 = vector.multi_reduction <add>, %23, %cst_16 [1] : vector<8x8xf32> to vector<8xf32>
    %28 = vector.shape_cast %27 : vector<8xf32> to vector<8x1xf32>
    %29 = arith.addf %26, %28 : vector<8x1xf32>
    %c0_17 = arith.constant 0 : index
    %c0_18 = arith.constant 0 : index
    %c0_19 = arith.constant 0 : index
    %30 = vector.load %arg10[%c0_17, %c0_18, %c0_19] : memref<4x8x1xf32, #tpu.memory_space<vmem>>, vector<1x8x1xf32>
    %31 = vector.shape_cast %30 : vector<1x8x1xf32> to vector<8x1xf32>
    %32 = vector.shape_cast %29 : vector<8x1xf32> to vector<1x8x1xf32>
    tpu.vector_store %arg10[%c0_17, %c0_18, %c0_19], %32 {strides = array<i32>} : memref<4x8x1xf32, #tpu.memory_space<vmem>>, vector<1x8x1xf32>,
    %33 = arith.truncf %23 : vector<8x8xf32> to vector<8x8xbf16>
    %cst_20 = arith.constant dense<0.000000e+00> : vector<8x8xf32>
    %34 = tpu.matmul %33, %11, %cst_20 {dimension_numbers = #tpu.dot_dimension_numbers<[1], [0], [0], [1], [0, 0, 1, 1], [], []>} : vector<8x8xbf16>, vector<8x8xbf16>, vector<8x8xf32> -> vector<8x8xf32>
    %c0_21 = arith.constant 0 : index
    %c0_22 = arith.constant 0 : index
    %c0_23 = arith.constant 0 : index
    %35 = vector.load %arg11[%c0_21, %c0_22, %c0_23] : memref<4x8x8xf32, #tpu.memory_space<vmem>>, vector<1x8x8xf32>
    %36 = vector.shape_cast %35 : vector<1x8x8xf32> to vector<8x8xf32>
    %37 = vector.broadcast %20 : vector<8x1xf32> to vector<8x8xf32>
    %38 = arith.mulf %37, %36 : vector<8x8xf32>
    %39 = arith.addf %38, %34 : vector<8x8xf32>
    %c0_24 = arith.constant 0 : index
    %c0_25 = arith.constant 0 : index
    %c0_26 = arith.constant 0 : index
    %40 = vector.load %arg11[%c0_24, %c0_25, %c0_26] : memref<4x8x8xf32, #tpu.memory_space<vmem>>, vector<1x8x8xf32>
    %41 = vector.shape_cast %40 : vector<1x8x8xf32> to vector<8x8xf32>
    %42 = vector.shape_cast %39 : vector<8x8xf32> to vector<1x8x8xf32>
    tpu.vector_store %arg11[%c0_24, %c0_25, %c0_26], %42 {strides = array<i32>} : memref<4x8x8xf32, #tpu.memory_space<vmem>>, vector<1x8x8xf32>,
    %c0_27 = arith.constant 0 : index
    %c0_28 = arith.constant 0 : index
    %c0_29 = arith.constant 0 : index
    %43 = vector.load %arg9[%c0_27, %c0_28, %c0_29] : memref<4x8x1xf32, #tpu.memory_space<vmem>>, vector<1x8x1xf32>
    %44 = vector.shape_cast %43 : vector<1x8x1xf32> to vector<8x1xf32>
    %45 = vector.shape_cast %18 : vector<8x1xf32> to vector<1x8x1xf32>
    tpu.vector_store %arg9[%c0_27, %c0_28, %c0_29], %45 {strides = array<i32>} : memref<4x8x1xf32, #tpu.memory_space<vmem>>, vector<1x8x1xf32>,
    %46 = vector.extract_strided_slice %4 {offsets = [0, 8], sizes = [8, 8], strides = [1, 1]} : vector<8x96xbf16> to vector<8x8xbf16>
    %47 = vector.extract_strided_slice %6 {offsets = [0, 40], sizes = [8, 8], strides = [1, 1]} : vector<8x96xbf16> to vector<8x8xbf16>
    %48 = vector.extract_strided_slice %6 {offsets = [0, 72], sizes = [8, 8], strides = [1, 1]} : vector<8x96xbf16> to vector<8x8xbf16>
    %cst_30 = arith.constant dense<0.000000e+00> : vector<8x8xf32>
    %49 = tpu.matmul %46, %47, %cst_30 {dimension_numbers = #tpu.dot_dimension_numbers<[1], [1], [0], [0], [0, 0, 1, 0], [], []>} : vector<8x8xbf16>, vector<8x8xbf16>, vector<8x8xf32> -> vector<8x8xf32>
    %50 = arith.addf %49, %8 : vector<8x8xf32>
    %c1 = arith.constant 1 : index
    %c0_31 = arith.constant 0 : index
    %c0_32 = arith.constant 0 : index
    %51 = vector.load %arg9[%c1, %c0_31, %c0_32] : memref<4x8x1xf32, #tpu.memory_space<vmem>>, vector<1x8x1xf32>
    %52 = vector.shape_cast %51 : vector<1x8x1xf32> to vector<8x1xf32>
    %cst_33 = arith.constant dense<0xFF800000> : vector<8xf32>
    %53 = vector.multi_reduction <maximumf>, %50, %cst_33 [1] : vector<8x8xf32> to vector<8xf32>
    %54 = vector.shape_cast %53 : vector<8xf32> to vector<8x1xf32>
    %55 = arith.maximumf %52, %54 : vector<8x1xf32>
    %56 = arith.subf %52, %55 : vector<8x1xf32>
    %57 = math.exp %56 : vector<8x1xf32>
    %58 = vector.broadcast %55 : vector<8x1xf32> to vector<8x8xf32>
    %59 = arith.subf %50, %58 : vector<8x8xf32>
    %60 = math.exp %59 : vector<8x8xf32>
    %c1_34 = arith.constant 1 : index
    %c0_35 = arith.constant 0 : index
    %c0_36 = arith.constant 0 : index
    %61 = vector.load %arg10[%c1_34, %c0_35, %c0_36] : memref<4x8x1xf32, #tpu.memory_space<vmem>>, vector<1x8x1xf32>
    %62 = vector.shape_cast %61 : vector<1x8x1xf32> to vector<8x1xf32>
    %63 = arith.mulf %57, %62 : vector<8x1xf32>
    %cst_37 = arith.constant dense<0.000000e+00> : vector<8xf32>
    %64 = vector.multi_reduction <add>, %60, %cst_37 [1] : vector<8x8xf32> to vector<8xf32>
    %65 = vector.shape_cast %64 : vector<8xf32> to vector<8x1xf32>
    %66 = arith.addf %63, %65 : vector<8x1xf32>
    %c1_38 = arith.constant 1 : index
    %c0_39 = arith.constant 0 : index
    %c0_40 = arith.constant 0 : index
    %67 = vector.load %arg10[%c1_38, %c0_39, %c0_40] : memref<4x8x1xf32, #tpu.memory_space<vmem>>, vector<1x8x1xf32>
    %68 = vector.shape_cast %67 : vector<1x8x1xf32> to vector<8x1xf32>
    %69 = vector.shape_cast %66 : vector<8x1xf32> to vector<1x8x1xf32>
    tpu.vector_store %arg10[%c1_38, %c0_39, %c0_40], %69 {strides = array<i32>} : memref<4x8x1xf32, #tpu.memory_space<vmem>>, vector<1x8x1xf32>,
    %70 = arith.truncf %60 : vector<8x8xf32> to vector<8x8xbf16>
    %cst_41 = arith.constant dense<0.000000e+00> : vector<8x8xf32>
    %71 = tpu.matmul %70, %48, %cst_41 {dimension_numbers = #tpu.dot_dimension_numbers<[1], [0], [0], [1], [0, 0, 1, 1], [], []>} : vector<8x8xbf16>, vector<8x8xbf16>, vector<8x8xf32> -> vector<8x8xf32>
    %c1_42 = arith.constant 1 : index
    %c0_43 = arith.constant 0 : index
    %c0_44 = arith.constant 0 : index
    %72 = vector.load %arg11[%c1_42, %c0_43, %c0_44] : memref<4x8x8xf32, #tpu.memory_space<vmem>>, vector<1x8x8xf32>
    %73 = vector.shape_cast %72 : vector<1x8x8xf32> to vector<8x8xf32>
    %74 = vector.broadcast %57 : vector<8x1xf32> to vector<8x8xf32>
    %75 = arith.mulf %74, %73 : vector<8x8xf32>
    %76 = arith.addf %75, %71 : vector<8x8xf32>
    %c1_45 = arith.constant 1 : index
    %c0_46 = arith.constant 0 : index
    %c0_47 = arith.constant 0 : index
    %77 = vector.load %arg11[%c1_45, %c0_46, %c0_47] : memref<4x8x8xf32, #tpu.memory_space<vmem>>, vector<1x8x8xf32>
    %78 = vector.shape_cast %77 : vector<1x8x8xf32> to vector<8x8xf32>
    %79 = vector.shape_cast %76 : vector<8x8xf32> to vector<1x8x8xf32>
    tpu.vector_store %arg11[%c1_45, %c0_46, %c0_47], %79 {strides = array<i32>} : memref<4x8x8xf32, #tpu.memory_space<vmem>>, vector<1x8x8xf32>,
    %c1_48 = arith.constant 1 : index
    %c0_49 = arith.constant 0 : index
    %c0_50 = arith.constant 0 : index
    %80 = vector.load %arg9[%c1_48, %c0_49, %c0_50] : memref<4x8x1xf32, #tpu.memory_space<vmem>>, vector<1x8x1xf32>
    %81 = vector.shape_cast %80 : vector<1x8x1xf32> to vector<8x1xf32>
    %82 = vector.shape_cast %55 : vector<8x1xf32> to vector<1x8x1xf32>
    tpu.vector_store %arg9[%c1_48, %c0_49, %c0_50], %82 {strides = array<i32>} : memref<4x8x1xf32, #tpu.memory_space<vmem>>, vector<1x8x1xf32>,
    %83 = vector.extract_strided_slice %4 {offsets = [0, 16], sizes = [8, 8], strides = [1, 1]} : vector<8x96xbf16> to vector<8x8xbf16>
    %84 = vector.extract_strided_slice %6 {offsets = [0, 48], sizes = [8, 8], strides = [1, 1]} : vector<8x96xbf16> to vector<8x8xbf16>
    %85 = vector.extract_strided_slice %6 {offsets = [0, 80], sizes = [8, 8], strides = [1, 1]} : vector<8x96xbf16> to vector<8x8xbf16>
    %cst_51 = arith.constant dense<0.000000e+00> : vector<8x8xf32>
    %86 = tpu.matmul %83, %84, %cst_51 {dimension_numbers = #tpu.dot_dimension_numbers<[1], [1], [0], [0], [0, 0, 1, 0], [], []>} : vector<8x8xbf16>, vector<8x8xbf16>, vector<8x8xf32> -> vector<8x8xf32>
    %87 = arith.addf %86, %8 : vector<8x8xf32>
    %c2 = arith.constant 2 : index
    %c0_52 = arith.constant 0 : index
    %c0_53 = arith.constant 0 : index
    %88 = vector.load %arg9[%c2, %c0_52, %c0_53] : memref<4x8x1xf32, #tpu.memory_space<vmem>>, vector<1x8x1xf32>
    %89 = vector.shape_cast %88 : vector<1x8x1xf32> to vector<8x1xf32>
    %cst_54 = arith.constant dense<0xFF800000> : vector<8xf32>
    %90 = vector.multi_reduction <maximumf>, %87, %cst_54 [1] : vector<8x8xf32> to vector<8xf32>
    %91 = vector.shape_cast %90 : vector<8xf32> to vector<8x1xf32>
    %92 = arith.maximumf %89, %91 : vector<8x1xf32>
    %93 = arith.subf %89, %92 : vector<8x1xf32>
    %94 = math.exp %93 : vector<8x1xf32>
    %95 = vector.broadcast %92 : vector<8x1xf32> to vector<8x8xf32>
    %96 = arith.subf %87, %95 : vector<8x8xf32>
    %97 = math.exp %96 : vector<8x8xf32>
    %c2_55 = arith.constant 2 : index
    %c0_56 = arith.constant 0 : index
    %c0_57 = arith.constant 0 : index
    %98 = vector.load %arg10[%c2_55, %c0_56, %c0_57] : memref<4x8x1xf32, #tpu.memory_space<vmem>>, vector<1x8x1xf32>
    %99 = vector.shape_cast %98 : vector<1x8x1xf32> to vector<8x1xf32>
    %100 = arith.mulf %94, %99 : vector<8x1xf32>
    %cst_58 = arith.constant dense<0.000000e+00> : vector<8xf32>
    %101 = vector.multi_reduction <add>, %97, %cst_58 [1] : vector<8x8xf32> to vector<8xf32>
    %102 = vector.shape_cast %101 : vector<8xf32> to vector<8x1xf32>
    %103 = arith.addf %100, %102 : vector<8x1xf32>
    %c2_59 = arith.constant 2 : index
    %c0_60 = arith.constant 0 : index
    %c0_61 = arith.constant 0 : index
    %104 = vector.load %arg10[%c2_59, %c0_60, %c0_61] : memref<4x8x1xf32, #tpu.memory_space<vmem>>, vector<1x8x1xf32>
    %105 = vector.shape_cast %104 : vector<1x8x1xf32> to vector<8x1xf32>
    %106 = vector.shape_cast %103 : vector<8x1xf32> to vector<1x8x1xf32>
    tpu.vector_store %arg10[%c2_59, %c0_60, %c0_61], %106 {strides = array<i32>} : memref<4x8x1xf32, #tpu.memory_space<vmem>>, vector<1x8x1xf32>,
    %107 = arith.truncf %97 : vector<8x8xf32> to vector<8x8xbf16>
    %cst_62 = arith.constant dense<0.000000e+00> : vector<8x8xf32>
    %108 = tpu.matmul %107, %85, %cst_62 {dimension_numbers = #tpu.dot_dimension_numbers<[1], [0], [0], [1], [0, 0, 1, 1], [], []>} : vector<8x8xbf16>, vector<8x8xbf16>, vector<8x8xf32> -> vector<8x8xf32>
    %c2_63 = arith.constant 2 : index
    %c0_64 = arith.constant 0 : index
    %c0_65 = arith.constant 0 : index
    %109 = vector.load %arg11[%c2_63, %c0_64, %c0_65] : memref<4x8x8xf32, #tpu.memory_space<vmem>>, vector<1x8x8xf32>
    %110 = vector.shape_cast %109 : vector<1x8x8xf32> to vector<8x8xf32>
    %111 = vector.broadcast %94 : vector<8x1xf32> to vector<8x8xf32>
    %112 = arith.mulf %111, %110 : vector<8x8xf32>
    %113 = arith.addf %112, %108 : vector<8x8xf32>
    %c2_66 = arith.constant 2 : index
    %c0_67 = arith.constant 0 : index
    %c0_68 = arith.constant 0 : index
    %114 = vector.load %arg11[%c2_66, %c0_67, %c0_68] : memref<4x8x8xf32, #tpu.memory_space<vmem>>, vector<1x8x8xf32>
    %115 = vector.shape_cast %114 : vector<1x8x8xf32> to vector<8x8xf32>
    %116 = vector.shape_cast %113 : vector<8x8xf32> to vector<1x8x8xf32>
    tpu.vector_store %arg11[%c2_66, %c0_67, %c0_68], %116 {strides = array<i32>} : memref<4x8x8xf32, #tpu.memory_space<vmem>>, vector<1x8x8xf32>,
    %c2_69 = arith.constant 2 : index
    %c0_70 = arith.constant 0 : index
    %c0_71 = arith.constant 0 : index
    %117 = vector.load %arg9[%c2_69, %c0_70, %c0_71] : memref<4x8x1xf32, #tpu.memory_space<vmem>>, vector<1x8x1xf32>
    %118 = vector.shape_cast %117 : vector<1x8x1xf32> to vector<8x1xf32>
    %119 = vector.shape_cast %92 : vector<8x1xf32> to vector<1x8x1xf32>
    tpu.vector_store %arg9[%c2_69, %c0_70, %c0_71], %119 {strides = array<i32>} : memref<4x8x1xf32, #tpu.memory_space<vmem>>, vector<1x8x1xf32>,
    %120 = vector.extract_strided_slice %4 {offsets = [0, 24], sizes = [8, 8], strides = [1, 1]} : vector<8x96xbf16> to vector<8x8xbf16>
    %121 = vector.extract_strided_slice %6 {offsets = [0, 56], sizes = [8, 8], strides = [1, 1]} : vector<8x96xbf16> to vector<8x8xbf16>
    %122 = vector.extract_strided_slice %6 {offsets = [0, 88], sizes = [8, 8], strides = [1, 1]} : vector<8x96xbf16> to vector<8x8xbf16>
    %cst_72 = arith.constant dense<0.000000e+00> : vector<8x8xf32>
    %123 = tpu.matmul %120, %121, %cst_72 {dimension_numbers = #tpu.dot_dimension_numbers<[1], [1], [0], [0], [0, 0, 1, 0], [], []>} : vector<8x8xbf16>, vector<8x8xbf16>, vector<8x8xf32> -> vector<8x8xf32>
    %124 = arith.addf %123, %8 : vector<8x8xf32>
    %c3 = arith.constant 3 : index
    %c0_73 = arith.constant 0 : index
    %c0_74 = arith.constant 0 : index
    %125 = vector.load %arg9[%c3, %c0_73, %c0_74] : memref<4x8x1xf32, #tpu.memory_space<vmem>>, vector<1x8x1xf32>
    %126 = vector.shape_cast %125 : vector<1x8x1xf32> to vector<8x1xf32>
    %cst_75 = arith.constant dense<0xFF800000> : vector<8xf32>
    %127 = vector.multi_reduction <maximumf>, %124, %cst_75 [1] : vector<8x8xf32> to vector<8xf32>
    %128 = vector.shape_cast %127 : vector<8xf32> to vector<8x1xf32>
    %129 = arith.maximumf %126, %128 : vector<8x1xf32>
    %130 = arith.subf %126, %129 : vector<8x1xf32>
    %131 = math.exp %130 : vector<8x1xf32>
    %132 = vector.broadcast %129 : vector<8x1xf32> to vector<8x8xf32>
    %133 = arith.subf %124, %132 : vector<8x8xf32>
    %134 = math.exp %133 : vector<8x8xf32>
    %c3_76 = arith.constant 3 : index
    %c0_77 = arith.constant 0 : index
    %c0_78 = arith.constant 0 : index
    %135 = vector.load %arg10[%c3_76, %c0_77, %c0_78] : memref<4x8x1xf32, #tpu.memory_space<vmem>>, vector<1x8x1xf32>
    %136 = vector.shape_cast %135 : vector<1x8x1xf32> to vector<8x1xf32>
    %137 = arith.mulf %131, %136 : vector<8x1xf32>
    %cst_79 = arith.constant dense<0.000000e+00> : vector<8xf32>
    %138 = vector.multi_reduction <add>, %134, %cst_79 [1] : vector<8x8xf32> to vector<8xf32>
    %139 = vector.shape_cast %138 : vector<8xf32> to vector<8x1xf32>
    %140 = arith.addf %137, %139 : vector<8x1xf32>
    %c3_80 = arith.constant 3 : index
    %c0_81 = arith.constant 0 : index
    %c0_82 = arith.constant 0 : index
    %141 = vector.load %arg10[%c3_80, %c0_81, %c0_82] : memref<4x8x1xf32, #tpu.memory_space<vmem>>, vector<1x8x1xf32>
    %142 = vector.shape_cast %141 : vector<1x8x1xf32> to vector<8x1xf32>
    %143 = vector.shape_cast %140 : vector<8x1xf32> to vector<1x8x1xf32>
    tpu.vector_store %arg10[%c3_80, %c0_81, %c0_82], %143 {strides = array<i32>} : memref<4x8x1xf32, #tpu.memory_space<vmem>>, vector<1x8x1xf32>,
    %144 = arith.truncf %134 : vector<8x8xf32> to vector<8x8xbf16>
    %cst_83 = arith.constant dense<0.000000e+00> : vector<8x8xf32>
    %145 = tpu.matmul %144, %122, %cst_83 {dimension_numbers = #tpu.dot_dimension_numbers<[1], [0], [0], [1], [0, 0, 1, 1], [], []>} : vector<8x8xbf16>, vector<8x8xbf16>, vector<8x8xf32> -> vector<8x8xf32>
    %c3_84 = arith.constant 3 : index
    %c0_85 = arith.constant 0 : index
    %c0_86 = arith.constant 0 : index
    %146 = vector.load %arg11[%c3_84, %c0_85, %c0_86] : memref<4x8x8xf32, #tpu.memory_space<vmem>>, vector<1x8x8xf32>
    %147 = vector.shape_cast %146 : vector<1x8x8xf32> to vector<8x8xf32>
    %148 = vector.broadcast %131 : vector<8x1xf32> to vector<8x8xf32>
    %149 = arith.mulf %148, %147 : vector<8x8xf32>
    %150 = arith.addf %149, %145 : vector<8x8xf32>
    %c3_87 = arith.constant 3 : index
    %c0_88 = arith.constant 0 : index
    %c0_89 = arith.constant 0 : index
    %151 = vector.load %arg11[%c3_87, %c0_88, %c0_89] : memref<4x8x8xf32, #tpu.memory_space<vmem>>, vector<1x8x8xf32>
    %152 = vector.shape_cast %151 : vector<1x8x8xf32> to vector<8x8xf32>
    %153 = vector.shape_cast %150 : vector<8x8xf32> to vector<1x8x8xf32>
    tpu.vector_store %arg11[%c3_87, %c0_88, %c0_89], %153 {strides = array<i32>} : memref<4x8x8xf32, #tpu.memory_space<vmem>>, vector<1x8x8xf32>,
    %c3_90 = arith.constant 3 : index
    %c0_91 = arith.constant 0 : index
    %c0_92 = arith.constant 0 : index
    %154 = vector.load %arg9[%c3_90, %c0_91, %c0_92] : memref<4x8x1xf32, #tpu.memory_space<vmem>>, vector<1x8x1xf32>
    %155 = vector.shape_cast %154 : vector<1x8x1xf32> to vector<8x1xf32>
    %156 = vector.shape_cast %129 : vector<8x1xf32> to vector<1x8x1xf32>
    tpu.vector_store %arg9[%c3_90, %c0_91, %c0_92], %156 {strides = array<i32>} : memref<4x8x1xf32, #tpu.memory_space<vmem>>, vector<1x8x1xf32>,
    %c0_i32_93 = arith.constant 0 : i32
    %157 = arith.cmpi eq, %arg3, %c0_i32_93 : i32
    %158 = arith.extui %157 : i1 to i32
    %c0_i32_94 = arith.constant 0 : i32
    %159 = arith.cmpi ne, %158, %c0_i32_94 : i32
    scf.if %159 {
      %c0_95 = arith.constant 0 : index
      %c0_96 = arith.constant 0 : index
      %c0_97 = arith.constant 0 : index
      %160 = vector.load %arg11[%c0_95, %c0_96, %c0_97] : memref<4x8x8xf32, #tpu.memory_space<vmem>>, vector<1x8x8xf32>
      %161 = vector.shape_cast %160 : vector<1x8x8xf32> to vector<8x8xf32>
      %c0_98 = arith.constant 0 : index
      %c0_99 = arith.constant 0 : index
      %c0_100 = arith.constant 0 : index
      %162 = vector.load %arg10[%c0_98, %c0_99, %c0_100] : memref<4x8x1xf32, #tpu.memory_space<vmem>>, vector<1x8x1xf32>
      %163 = vector.shape_cast %162 : vector<1x8x1xf32> to vector<8x1xf32>
      %164 = tpu.reciprocal %163 {approx = true} : vector<8x1xf32> -> vector<8x1xf32>
      %165 = vector.broadcast %164 : vector<8x1xf32> to vector<8x8xf32>
      %166 = arith.mulf %161, %165 : vector<8x8xf32>
      %c1_101 = arith.constant 1 : index
      %c0_102 = arith.constant 0 : index
      %c0_103 = arith.constant 0 : index
      %167 = vector.load %arg11[%c1_101, %c0_102, %c0_103] : memref<4x8x8xf32, #tpu.memory_space<vmem>>, vector<1x8x8xf32>
      %168 = vector.shape_cast %167 : vector<1x8x8xf32> to vector<8x8xf32>
      %c1_104 = arith.constant 1 : index
      %c0_105 = arith.constant 0 : index
      %c0_106 = arith.constant 0 : index
      %169 = vector.load %arg10[%c1_104, %c0_105, %c0_106] : memref<4x8x1xf32, #tpu.memory_space<vmem>>, vector<1x8x1xf32>
      %170 = vector.shape_cast %169 : vector<1x8x1xf32> to vector<8x1xf32>
      %171 = tpu.reciprocal %170 {approx = true} : vector<8x1xf32> -> vector<8x1xf32>
      %172 = vector.broadcast %171 : vector<8x1xf32> to vector<8x8xf32>
      %173 = arith.mulf %168, %172 : vector<8x8xf32>
      %c2_107 = arith.constant 2 : index
      %c0_108 = arith.constant 0 : index
      %c0_109 = arith.constant 0 : index
      %174 = vector.load %arg11[%c2_107, %c0_108, %c0_109] : memref<4x8x8xf32, #tpu.memory_space<vmem>>, vector<1x8x8xf32>
      %175 = vector.shape_cast %174 : vector<1x8x8xf32> to vector<8x8xf32>
      %c2_110 = arith.constant 2 : index
      %c0_111 = arith.constant 0 : index
      %c0_112 = arith.constant 0 : index
      %176 = vector.load %arg10[%c2_110, %c0_111, %c0_112] : memref<4x8x1xf32, #tpu.memory_space<vmem>>, vector<1x8x1xf32>
      %177 = vector.shape_cast %176 : vector<1x8x1xf32> to vector<8x1xf32>
      %178 = tpu.reciprocal %177 {approx = true} : vector<8x1xf32> -> vector<8x1xf32>
      %179 = vector.broadcast %178 : vector<8x1xf32> to vector<8x8xf32>
      %180 = arith.mulf %175, %179 : vector<8x8xf32>
      %c3_113 = arith.constant 3 : index
      %c0_114 = arith.constant 0 : index
      %c0_115 = arith.constant 0 : index
      %181 = vector.load %arg11[%c3_113, %c0_114, %c0_115] : memref<4x8x8xf32, #tpu.memory_space<vmem>>, vector<1x8x8xf32>
      %182 = vector.shape_cast %181 : vector<1x8x8xf32> to vector<8x8xf32>
      %c3_116 = arith.constant 3 : index
      %c0_117 = arith.constant 0 : index
      %c0_118 = arith.constant 0 : index
      %183 = vector.load %arg10[%c3_116, %c0_117, %c0_118] : memref<4x8x1xf32, #tpu.memory_space<vmem>>, vector<1x8x1xf32>
      %184 = vector.shape_cast %183 : vector<1x8x1xf32> to vector<8x1xf32>
      %185 = tpu.reciprocal %184 {approx = true} : vector<8x1xf32> -> vector<8x1xf32>
      %186 = vector.broadcast %185 : vector<8x1xf32> to vector<8x8xf32>
      %187 = arith.mulf %182, %186 : vector<8x8xf32>
      %188 = tpu.concatenate %166, %173, %180, %187 in 1 : vector<8x8xf32>, vector<8x8xf32>, vector<8x8xf32>, vector<8x8xf32> -> vector<8x32xf32>
      %c0_119 = arith.constant 0 : index
      %c0_120 = arith.constant 0 : index
      %c0_121 = arith.constant 0 : index
      %189 = vector.load %arg7[%c0_119, %c0_120, %c0_121] : memref<1x1x32xf32, #tpu.memory_space<vmem>>, vector<1x1x32xf32>
      %190 = vector.shape_cast %189 : vector<1x1x32xf32> to vector<1x32xf32>
      %191 = vector.broadcast %190 : vector<1x32xf32> to vector<8x32xf32>
      %192 = arith.mulf %188, %191 : vector<8x32xf32>
      %193 = arith.truncf %192 : vector<8x32xf32> to vector<8x32xbf16>
      %c0_122 = arith.constant 0 : index
      %c0_123 = arith.constant 0 : index
      %c0_124 = arith.constant 0 : index
      %194 = vector.load %arg8[%c0_122, %c0_123, %c0_124] : memref<1x8x32xbf16, #tpu.memory_space<vmem>>, vector<1x8x32xbf16>
      %195 = vector.shape_cast %194 : vector<1x8x32xbf16> to vector<8x32xbf16>
      %196 = vector.shape_cast %193 : vector<8x32xbf16> to vector<1x8x32xbf16>
      tpu.vector_store %arg8[%c0_122, %c0_123, %c0_124], %196 {strides = array<i32>} : memref<1x8x32xbf16, #tpu.memory_space<vmem>>, vector<1x8x32xbf16>,
    } else {
    }
    return
  }
  func.func @transform_0(%arg0: i32, %arg1: i32, %arg2: i32, %arg3: i32) -> (i32, i32, i32) {
    %c0_i32 = arith.constant 0 : i32
    %c0_i32_0 = arith.constant 0 : i32
    return %arg0, %arg2, %c0_i32 : i32, i32, i32
  }
  func.func @transform_1(%arg0: i32, %arg1: i32, %arg2: i32, %arg3: i32) -> (i32, i32, i32) {
    %c0_i32 = arith.constant 0 : i32
    %c0_i32_0 = arith.constant 0 : i32
    return %arg0, %arg3, %c0_i32 : i32, i32, i32
  }
  func.func @transform_2(%arg0: i32, %arg1: i32, %arg2: i32, %arg3: i32) -> (i32, i32, i32) {
    %c0_i32 = arith.constant 0 : i32
    return %arg0, %arg2, %arg3 : i32, i32, i32
  }
  func.func @transform_3(%arg0: i32, %arg1: i32, %arg2: i32, %arg3: i32) -> (i32, i32, i32) {
    %c0_i32 = arith.constant 0 : i32
    %c0_i32_0 = arith.constant 0 : i32
    %c0_i32_1 = arith.constant 0 : i32
    return %arg1, %c0_i32, %c0_i32_0 : i32, i32, i32
  }
  func.func @transform_4(%arg0: i32, %arg1: i32, %arg2: i32, %arg3: i32) -> (i32, i32, i32) {
    %c0_i32 = arith.constant 0 : i32
    %c0_i32_0 = arith.constant 0 : i32
    return %arg0, %arg2, %c0_i32 : i32, i32, i32
  }
}

module attributes {stable_mosaic.version = 11 : i64} {
  func.func @_matmul_kernel(%arg0: i32, %arg1: i32, %arg2: i32, %arg3: memref<16x32xf32, #tpu.memory_space<vmem>>, %arg4: memref<32x96xf32, #tpu.memory_space<vmem>>, %arg5: memref<1x96xf32, #tpu.memory_space<vmem>>, %arg6: memref<16x96xbf16, #tpu.memory_space<vmem>>, %arg7: memref<16x96xf32, #tpu.memory_space<vmem>>) attributes {dimension_semantics = [#tpu.dimension_semantics<parallel>, #tpu.dimension_semantics<parallel>, #tpu.dimension_semantics<arbitrary>], iteration_bounds = array<i64: 1, 1, 1>, scalar_prefetch = 0 : i64, scratch_operands = 1 : i64, tpu.core_type = #tpu.core_type<tc>, window_params = [{transform_indices = @transform_0, window_bounds = array<i64: 16, 32>}, {transform_indices = @transform_1, window_bounds = array<i64: 32, 96>}, {transform_indices = @transform_2, window_bounds = array<i64: 1, 96>}, {transform_indices = @transform_3, window_bounds = array<i64: 16, 96>}]} {
    %c0_i32 = arith.constant 0 : i32
    %0 = arith.cmpi eq, %arg2, %c0_i32 : i32
    %1 = arith.extui %0 : i1 to i32
    %c0_i32_0 = arith.constant 0 : i32
    %2 = arith.cmpi ne, %1, %c0_i32_0 : i32
    scf.if %2 {
      %cst_10 = arith.constant 0.000000e+00 : f32
      %14 = vector.broadcast %cst_10 : f32 to vector<16x96xf32>
      %c0_11 = arith.constant 0 : index
      %c0_12 = arith.constant 0 : index
      %15 = vector.load %arg7[%c0_11, %c0_12] : memref<16x96xf32, #tpu.memory_space<vmem>>, vector<16x96xf32>
      tpu.vector_store %arg7[%c0_11, %c0_12], %14 {strides = array<i32>} : memref<16x96xf32, #tpu.memory_space<vmem>>, vector<16x96xf32>,
    } else {
    }
    %c0 = arith.constant 0 : index
    %c0_1 = arith.constant 0 : index
    %3 = vector.load %arg7[%c0, %c0_1] : memref<16x96xf32, #tpu.memory_space<vmem>>, vector<16x96xf32>
    %c0_2 = arith.constant 0 : index
    %c0_3 = arith.constant 0 : index
    %4 = vector.load %arg3[%c0_2, %c0_3] : memref<16x32xf32, #tpu.memory_space<vmem>>, vector<16x32xf32>
    %5 = arith.truncf %4 : vector<16x32xf32> to vector<16x32xbf16>
    %c0_4 = arith.constant 0 : index
    %c0_5 = arith.constant 0 : index
    %6 = vector.load %arg4[%c0_4, %c0_5] : memref<32x96xf32, #tpu.memory_space<vmem>>, vector<32x96xf32>
    %7 = arith.truncf %6 : vector<32x96xf32> to vector<32x96xbf16>
    %cst = arith.constant dense<0.000000e+00> : vector<16x96xf32>
    %8 = tpu.matmul %5, %7, %cst {dimension_numbers = #tpu.dot_dimension_numbers<[1], [0], [0], [1], [0, 0, 1, 1], [], []>} : vector<16x32xbf16>, vector<32x96xbf16>, vector<16x96xf32> -> vector<16x96xf32>
    %9 = arith.addf %3, %8 : vector<16x96xf32>
    %c0_6 = arith.constant 0 : index
    %c0_7 = arith.constant 0 : index
    %10 = vector.load %arg7[%c0_6, %c0_7] : memref<16x96xf32, #tpu.memory_space<vmem>>, vector<16x96xf32>
    tpu.vector_store %arg7[%c0_6, %c0_7], %9 {strides = array<i32>} : memref<16x96xf32, #tpu.memory_space<vmem>>, vector<16x96xf32>,
    %c0_i32_8 = arith.constant 0 : i32
    %11 = arith.cmpi eq, %arg2, %c0_i32_8 : i32
    %12 = arith.extui %11 : i1 to i32
    %c0_i32_9 = arith.constant 0 : i32
    %13 = arith.cmpi ne, %12, %c0_i32_9 : i32
    scf.if %13 {
      %c0_10 = arith.constant 0 : index
      %c0_11 = arith.constant 0 : index
      %14 = vector.load %arg7[%c0_10, %c0_11] : memref<16x96xf32, #tpu.memory_space<vmem>>, vector<16x96xf32>
      %c0_12 = arith.constant 0 : index
      %c0_13 = arith.constant 0 : index
      %15 = vector.load %arg5[%c0_12, %c0_13] : memref<1x96xf32, #tpu.memory_space<vmem>>, vector<1x96xf32>
      %16 = vector.broadcast %15 : vector<1x96xf32> to vector<16x96xf32>
      %17 = arith.addf %14, %16 : vector<16x96xf32>
      %18 = arith.truncf %17 : vector<16x96xf32> to vector<16x96xbf16>
      %c0_14 = arith.constant 0 : index
      %c0_15 = arith.constant 0 : index
      %19 = vector.load %arg6[%c0_14, %c0_15] : memref<16x96xbf16, #tpu.memory_space<vmem>>, vector<16x96xbf16>
      tpu.vector_store %arg6[%c0_14, %c0_15], %18 {strides = array<i32>} : memref<16x96xbf16, #tpu.memory_space<vmem>>, vector<16x96xbf16>,
    } else {
    }
    return
  }
  func.func @transform_0(%arg0: i32, %arg1: i32, %arg2: i32) -> (i32, i32) {
    %c0_i32 = arith.constant 0 : i32
    return %arg0, %arg2 : i32, i32
  }
  func.func @transform_1(%arg0: i32, %arg1: i32, %arg2: i32) -> (i32, i32) {
    %c0_i32 = arith.constant 0 : i32
    return %arg2, %arg1 : i32, i32
  }
  func.func @transform_2(%arg0: i32, %arg1: i32, %arg2: i32) -> (i32, i32) {
    %c0_i32 = arith.constant 0 : i32
    %c0_i32_0 = arith.constant 0 : i32
    return %c0_i32, %arg1 : i32, i32
  }
  func.func @transform_3(%arg0: i32, %arg1: i32, %arg2: i32) -> (i32, i32) {
    %c0_i32 = arith.constant 0 : i32
    return %arg0, %arg1 : i32, i32
  }
}

module attributes {stable_mosaic.version = 11 : i64} {
  func.func @_matmul_add_ln_kernel(%arg0: i32, %arg1: i32, %arg2: memref<16x32xbf16, #tpu.memory_space<vmem>>, %arg3: memref<32x32xf32, #tpu.memory_space<vmem>>, %arg4: memref<1x32xf32, #tpu.memory_space<vmem>>, %arg5: memref<16x32xf32, #tpu.memory_space<vmem>>, %arg6: memref<1x32xf32, #tpu.memory_space<vmem>>, %arg7: memref<1x32xf32, #tpu.memory_space<vmem>>, %arg8: memref<16x32xf32, #tpu.memory_space<vmem>>, %arg9: memref<16x32xf32, #tpu.memory_space<vmem>>) attributes {dimension_semantics = [#tpu.dimension_semantics<parallel>, #tpu.dimension_semantics<arbitrary>], iteration_bounds = array<i64: 1, 1>, scalar_prefetch = 0 : i64, scratch_operands = 1 : i64, tpu.core_type = #tpu.core_type<tc>, window_params = [{transform_indices = @transform_0, window_bounds = array<i64: 16, 32>}, {transform_indices = @transform_1, window_bounds = array<i64: 32, 32>}, {pipeline_mode = #tpu.pipeline_mode<synchronous>, transform_indices = @transform_2, window_bounds = array<i64: 1, 32>}, {transform_indices = @transform_3, window_bounds = array<i64: 16, 32>}, {pipeline_mode = #tpu.pipeline_mode<synchronous>, transform_indices = @transform_4, window_bounds = array<i64: 1, 32>}, {pipeline_mode = #tpu.pipeline_mode<synchronous>, transform_indices = @transform_5, window_bounds = array<i64: 1, 32>}, {transform_indices = @transform_6, window_bounds = array<i64: 16, 32>}]} {
    %c0_i32 = arith.constant 0 : i32
    %0 = arith.cmpi eq, %arg1, %c0_i32 : i32
    %1 = arith.extui %0 : i1 to i32
    %c0_i32_0 = arith.constant 0 : i32
    %2 = arith.cmpi ne, %1, %c0_i32_0 : i32
    scf.if %2 {
      %cst_10 = arith.constant 0.000000e+00 : f32
      %13 = vector.broadcast %cst_10 : f32 to vector<16x32xf32>
      %c0_11 = arith.constant 0 : index
      %c0_12 = arith.constant 0 : index
      %14 = vector.load %arg9[%c0_11, %c0_12] : memref<16x32xf32, #tpu.memory_space<vmem>>, vector<16x32xf32>
      tpu.vector_store %arg9[%c0_11, %c0_12], %13 {strides = array<i32>} : memref<16x32xf32, #tpu.memory_space<vmem>>, vector<16x32xf32>,
    } else {
    }
    %c0 = arith.constant 0 : index
    %c0_1 = arith.constant 0 : index
    %3 = vector.load %arg9[%c0, %c0_1] : memref<16x32xf32, #tpu.memory_space<vmem>>, vector<16x32xf32>
    %c0_2 = arith.constant 0 : index
    %c0_3 = arith.constant 0 : index
    %4 = vector.load %arg2[%c0_2, %c0_3] : memref<16x32xbf16, #tpu.memory_space<vmem>>, vector<16x32xbf16>
    %c0_4 = arith.constant 0 : index
    %c0_5 = arith.constant 0 : index
    %5 = vector.load %arg3[%c0_4, %c0_5] : memref<32x32xf32, #tpu.memory_space<vmem>>, vector<32x32xf32>
    %6 = arith.truncf %5 : vector<32x32xf32> to vector<32x32xbf16>
    %cst = arith.constant dense<0.000000e+00> : vector<16x32xf32>
    %7 = tpu.matmul %4, %6, %cst {dimension_numbers = #tpu.dot_dimension_numbers<[1], [0], [0], [1], [0, 0, 1, 1], [], []>} : vector<16x32xbf16>, vector<32x32xbf16>, vector<16x32xf32> -> vector<16x32xf32>
    %8 = arith.addf %3, %7 : vector<16x32xf32>
    %c0_6 = arith.constant 0 : index
    %c0_7 = arith.constant 0 : index
    %9 = vector.load %arg9[%c0_6, %c0_7] : memref<16x32xf32, #tpu.memory_space<vmem>>, vector<16x32xf32>
    tpu.vector_store %arg9[%c0_6, %c0_7], %8 {strides = array<i32>} : memref<16x32xf32, #tpu.memory_space<vmem>>, vector<16x32xf32>,
    %c0_i32_8 = arith.constant 0 : i32
    %10 = arith.cmpi eq, %arg1, %c0_i32_8 : i32
    %11 = arith.extui %10 : i1 to i32
    %c0_i32_9 = arith.constant 0 : i32
    %12 = arith.cmpi ne, %11, %c0_i32_9 : i32
    scf.if %12 {
      %c0_10 = arith.constant 0 : index
      %c0_11 = arith.constant 0 : index
      %13 = vector.load %arg9[%c0_10, %c0_11] : memref<16x32xf32, #tpu.memory_space<vmem>>, vector<16x32xf32>
      %c0_12 = arith.constant 0 : index
      %c0_13 = arith.constant 0 : index
      %14 = vector.load %arg4[%c0_12, %c0_13] : memref<1x32xf32, #tpu.memory_space<vmem>>, vector<1x32xf32>
      %15 = vector.broadcast %14 : vector<1x32xf32> to vector<16x32xf32>
      %16 = arith.addf %13, %15 : vector<16x32xf32>
      %c0_14 = arith.constant 0 : index
      %c0_15 = arith.constant 0 : index
      %17 = vector.load %arg5[%c0_14, %c0_15] : memref<16x32xf32, #tpu.memory_space<vmem>>, vector<16x32xf32>
      %18 = arith.addf %16, %17 : vector<16x32xf32>
      %cst_16 = arith.constant dense<0.000000e+00> : vector<16xf32>
      %19 = vector.multi_reduction <add>, %18, %cst_16 [1] : vector<16x32xf32> to vector<16xf32>
      %20 = vector.shape_cast %19 : vector<16xf32> to vector<16x1xf32>
      %cst_17 = arith.constant 3.200000e+01 : f32
      %21 = vector.broadcast %cst_17 : f32 to vector<16x1xf32>
      %22 = arith.divf %20, %21 : vector<16x1xf32>
      %23 = vector.broadcast %22 : vector<16x1xf32> to vector<16x32xf32>
      %24 = arith.subf %18, %23 : vector<16x32xf32>
      %25 = arith.mulf %24, %24 : vector<16x32xf32>
      %cst_18 = arith.constant dense<0.000000e+00> : vector<16xf32>
      %26 = vector.multi_reduction <add>, %25, %cst_18 [1] : vector<16x32xf32> to vector<16xf32>
      %27 = vector.shape_cast %26 : vector<16xf32> to vector<16x1xf32>
      %cst_19 = arith.constant 3.200000e+01 : f32
      %28 = vector.broadcast %cst_19 : f32 to vector<16x1xf32>
      %29 = arith.divf %27, %28 : vector<16x1xf32>
      %cst_20 = arith.constant 9.99999974E-6 : f32
      %30 = vector.broadcast %cst_20 : f32 to vector<16x1xf32>
      %31 = arith.addf %29, %30 : vector<16x1xf32>
      %32 = math.rsqrt %31 : vector<16x1xf32>
      %33 = vector.broadcast %32 : vector<16x1xf32> to vector<16x32xf32>
      %34 = arith.mulf %24, %33 : vector<16x32xf32>
      %c0_21 = arith.constant 0 : index
      %c0_22 = arith.constant 0 : index
      %35 = vector.load %arg6[%c0_21, %c0_22] : memref<1x32xf32, #tpu.memory_space<vmem>>, vector<1x32xf32>
      %36 = vector.broadcast %35 : vector<1x32xf32> to vector<16x32xf32>
      %37 = arith.mulf %34, %36 : vector<16x32xf32>
      %c0_23 = arith.constant 0 : index
      %c0_24 = arith.constant 0 : index
      %38 = vector.load %arg7[%c0_23, %c0_24] : memref<1x32xf32, #tpu.memory_space<vmem>>, vector<1x32xf32>
      %39 = vector.broadcast %38 : vector<1x32xf32> to vector<16x32xf32>
      %40 = arith.addf %37, %39 : vector<16x32xf32>
      %c0_25 = arith.constant 0 : index
      %c0_26 = arith.constant 0 : index
      %41 = vector.load %arg8[%c0_25, %c0_26] : memref<16x32xf32, #tpu.memory_space<vmem>>, vector<16x32xf32>
      tpu.vector_store %arg8[%c0_25, %c0_26], %40 {strides = array<i32>} : memref<16x32xf32, #tpu.memory_space<vmem>>, vector<16x32xf32>,
    } else {
    }
    return
  }
  func.func @transform_0(%arg0: i32, %arg1: i32) -> (i32, i32) {
    %c0_i32 = arith.constant 0 : i32
    return %arg0, %arg1 : i32, i32
  }
  func.func @transform_1(%arg0: i32, %arg1: i32) -> (i32, i32) {
    %c0_i32 = arith.constant 0 : i32
    %c0_i32_0 = arith.constant 0 : i32
    return %arg1, %c0_i32 : i32, i32
  }
  func.func @transform_2(%arg0: i32, %arg1: i32) -> (i32, i32) {
    %c0_i32 = arith.constant 0 : i32
    %c0_i32_0 = arith.constant 0 : i32
    %c0_i32_1 = arith.constant 0 : i32
    return %c0_i32, %c0_i32_0 : i32, i32
  }
  func.func @transform_3(%arg0: i32, %arg1: i32) -> (i32, i32) {
    %c0_i32 = arith.constant 0 : i32
    %c0_i32_0 = arith.constant 0 : i32
    return %arg0, %c0_i32 : i32, i32
  }
  func.func @transform_4(%arg0: i32, %arg1: i32) -> (i32, i32) {
    %c0_i32 = arith.constant 0 : i32
    %c0_i32_0 = arith.constant 0 : i32
    %c0_i32_1 = arith.constant 0 : i32
    return %c0_i32, %c0_i32_0 : i32, i32
  }
  func.func @transform_5(%arg0: i32, %arg1: i32) -> (i32, i32) {
    %c0_i32 = arith.constant 0 : i32
    %c0_i32_0 = arith.constant 0 : i32
    %c0_i32_1 = arith.constant 0 : i32
    return %c0_i32, %c0_i32_0 : i32, i32
  }
  func.func @transform_6(%arg0: i32, %arg1: i32) -> (i32, i32) {
    %c0_i32 = arith.constant 0 : i32
    %c0_i32_0 = arith.constant 0 : i32
    return %arg0, %c0_i32 : i32, i32
  }
}

module attributes {stable_mosaic.version = 11 : i64} {
  func.func @_ffn_kernel(%arg0: i32, %arg1: i32, %arg2: memref<16x32xf32, #tpu.memory_space<vmem>>, %arg3: memref<32x64xf32, #tpu.memory_space<vmem>>, %arg4: memref<1x64xf32, #tpu.memory_space<vmem>>, %arg5: memref<64x32xf32, #tpu.memory_space<vmem>>, %arg6: memref<1x32xf32, #tpu.memory_space<vmem>>, %arg7: memref<1x32xf32, #tpu.memory_space<vmem>>, %arg8: memref<1x32xf32, #tpu.memory_space<vmem>>, %arg9: memref<16x32xf32, #tpu.memory_space<vmem>>, %arg10: memref<16x32xf32, #tpu.memory_space<vmem>>) attributes {dimension_semantics = [#tpu.dimension_semantics<parallel>, #tpu.dimension_semantics<arbitrary>], iteration_bounds = array<i64: 1, 1>, scalar_prefetch = 0 : i64, scratch_operands = 1 : i64, tpu.core_type = #tpu.core_type<tc>, window_params = [{transform_indices = @transform_0, window_bounds = array<i64: 16, 32>}, {transform_indices = @transform_1, window_bounds = array<i64: 32, 64>}, {transform_indices = @transform_2, window_bounds = array<i64: 1, 64>}, {transform_indices = @transform_3, window_bounds = array<i64: 64, 32>}, {pipeline_mode = #tpu.pipeline_mode<synchronous>, transform_indices = @transform_4, window_bounds = array<i64: 1, 32>}, {pipeline_mode = #tpu.pipeline_mode<synchronous>, transform_indices = @transform_5, window_bounds = array<i64: 1, 32>}, {pipeline_mode = #tpu.pipeline_mode<synchronous>, transform_indices = @transform_6, window_bounds = array<i64: 1, 32>}, {transform_indices = @transform_7, window_bounds = array<i64: 16, 32>}]} {
    %c0_i32 = arith.constant 0 : i32
    %0 = arith.cmpi eq, %arg1, %c0_i32 : i32
    %1 = arith.extui %0 : i1 to i32
    %c0_i32_0 = arith.constant 0 : i32
    %2 = arith.cmpi ne, %1, %c0_i32_0 : i32
    scf.if %2 {
      %cst_18 = arith.constant 0.000000e+00 : f32
      %29 = vector.broadcast %cst_18 : f32 to vector<16x32xf32>
      %c0_19 = arith.constant 0 : index
      %c0_20 = arith.constant 0 : index
      %30 = vector.load %arg10[%c0_19, %c0_20] : memref<16x32xf32, #tpu.memory_space<vmem>>, vector<16x32xf32>
      tpu.vector_store %arg10[%c0_19, %c0_20], %29 {strides = array<i32>} : memref<16x32xf32, #tpu.memory_space<vmem>>, vector<16x32xf32>,
    } else {
    }
    %c0 = arith.constant 0 : index
    %c0_1 = arith.constant 0 : index
    %3 = vector.load %arg2[%c0, %c0_1] : memref<16x32xf32, #tpu.memory_space<vmem>>, vector<16x32xf32>
    %4 = arith.truncf %3 : vector<16x32xf32> to vector<16x32xbf16>
    %c0_2 = arith.constant 0 : index
    %c0_3 = arith.constant 0 : index
    %5 = vector.load %arg3[%c0_2, %c0_3] : memref<32x64xf32, #tpu.memory_space<vmem>>, vector<32x64xf32>
    %6 = arith.truncf %5 : vector<32x64xf32> to vector<32x64xbf16>
    %cst = arith.constant dense<0.000000e+00> : vector<16x64xf32>
    %7 = tpu.matmul %4, %6, %cst {dimension_numbers = #tpu.dot_dimension_numbers<[1], [0], [0], [1], [0, 0, 1, 1], [], []>} : vector<16x32xbf16>, vector<32x64xbf16>, vector<16x64xf32> -> vector<16x64xf32>
    %c0_4 = arith.constant 0 : index
    %c0_5 = arith.constant 0 : index
    %8 = vector.load %arg4[%c0_4, %c0_5] : memref<1x64xf32, #tpu.memory_space<vmem>>, vector<1x64xf32>
    %9 = vector.broadcast %8 : vector<1x64xf32> to vector<16x64xf32>
    %10 = arith.addf %7, %9 : vector<16x64xf32>
    %cst_6 = arith.constant 5.000000e-01 : f32
    %11 = vector.broadcast %cst_6 : f32 to vector<16x64xf32>
    %12 = arith.mulf %11, %10 : vector<16x64xf32>
    %cst_7 = arith.constant 0.707106769 : f32
    %13 = vector.broadcast %cst_7 : f32 to vector<16x64xf32>
    %14 = arith.mulf %10, %13 : vector<16x64xf32>
    %15 = math.erf %14 : vector<16x64xf32>
    %cst_8 = arith.constant 1.000000e+00 : f32
    %16 = vector.broadcast %cst_8 : f32 to vector<16x64xf32>
    %17 = arith.addf %16, %15 : vector<16x64xf32>
    %18 = arith.mulf %12, %17 : vector<16x64xf32>
    %c0_9 = arith.constant 0 : index
    %c0_10 = arith.constant 0 : index
    %19 = vector.load %arg10[%c0_9, %c0_10] : memref<16x32xf32, #tpu.memory_space<vmem>>, vector<16x32xf32>
    %20 = arith.truncf %18 : vector<16x64xf32> to vector<16x64xbf16>
    %c0_11 = arith.constant 0 : index
    %c0_12 = arith.constant 0 : index
    %21 = vector.load %arg5[%c0_11, %c0_12] : memref<64x32xf32, #tpu.memory_space<vmem>>, vector<64x32xf32>
    %22 = arith.truncf %21 : vector<64x32xf32> to vector<64x32xbf16>
    %cst_13 = arith.constant dense<0.000000e+00> : vector<16x32xf32>
    %23 = tpu.matmul %20, %22, %cst_13 {dimension_numbers = #tpu.dot_dimension_numbers<[1], [0], [0], [1], [0, 0, 1, 1], [], []>} : vector<16x64xbf16>, vector<64x32xbf16>, vector<16x32xf32> -> vector<16x32xf32>
    %24 = arith.addf %19, %23 : vector<16x32xf32>
    %c0_14 = arith.constant 0 : index
    %c0_15 = arith.constant 0 : index
    %25 = vector.load %arg10[%c0_14, %c0_15] : memref<16x32xf32, #tpu.memory_space<vmem>>, vector<16x32xf32>
    tpu.vector_store %arg10[%c0_14, %c0_15], %24 {strides = array<i32>} : memref<16x32xf32, #tpu.memory_space<vmem>>, vector<16x32xf32>,
    %c0_i32_16 = arith.constant 0 : i32
    %26 = arith.cmpi eq, %arg1, %c0_i32_16 : i32
    %27 = arith.extui %26 : i1 to i32
    %c0_i32_17 = arith.constant 0 : i32
    %28 = arith.cmpi ne, %27, %c0_i32_17 : i32
    scf.if %28 {
      %c0_18 = arith.constant 0 : index
      %c0_19 = arith.constant 0 : index
      %29 = vector.load %arg10[%c0_18, %c0_19] : memref<16x32xf32, #tpu.memory_space<vmem>>, vector<16x32xf32>
      %c0_20 = arith.constant 0 : index
      %c0_21 = arith.constant 0 : index
      %30 = vector.load %arg6[%c0_20, %c0_21] : memref<1x32xf32, #tpu.memory_space<vmem>>, vector<1x32xf32>
      %31 = vector.broadcast %30 : vector<1x32xf32> to vector<16x32xf32>
      %32 = arith.addf %29, %31 : vector<16x32xf32>
      %c0_22 = arith.constant 0 : index
      %c0_23 = arith.constant 0 : index
      %33 = vector.load %arg2[%c0_22, %c0_23] : memref<16x32xf32, #tpu.memory_space<vmem>>, vector<16x32xf32>
      %34 = arith.addf %32, %33 : vector<16x32xf32>
      %cst_24 = arith.constant dense<0.000000e+00> : vector<16xf32>
      %35 = vector.multi_reduction <add>, %34, %cst_24 [1] : vector<16x32xf32> to vector<16xf32>
      %36 = vector.shape_cast %35 : vector<16xf32> to vector<16x1xf32>
      %cst_25 = arith.constant 3.200000e+01 : f32
      %37 = vector.broadcast %cst_25 : f32 to vector<16x1xf32>
      %38 = arith.divf %36, %37 : vector<16x1xf32>
      %39 = vector.broadcast %38 : vector<16x1xf32> to vector<16x32xf32>
      %40 = arith.subf %34, %39 : vector<16x32xf32>
      %41 = arith.mulf %40, %40 : vector<16x32xf32>
      %cst_26 = arith.constant dense<0.000000e+00> : vector<16xf32>
      %42 = vector.multi_reduction <add>, %41, %cst_26 [1] : vector<16x32xf32> to vector<16xf32>
      %43 = vector.shape_cast %42 : vector<16xf32> to vector<16x1xf32>
      %cst_27 = arith.constant 3.200000e+01 : f32
      %44 = vector.broadcast %cst_27 : f32 to vector<16x1xf32>
      %45 = arith.divf %43, %44 : vector<16x1xf32>
      %cst_28 = arith.constant 9.99999974E-6 : f32
      %46 = vector.broadcast %cst_28 : f32 to vector<16x1xf32>
      %47 = arith.addf %45, %46 : vector<16x1xf32>
      %48 = math.rsqrt %47 : vector<16x1xf32>
      %49 = vector.broadcast %48 : vector<16x1xf32> to vector<16x32xf32>
      %50 = arith.mulf %40, %49 : vector<16x32xf32>
      %c0_29 = arith.constant 0 : index
      %c0_30 = arith.constant 0 : index
      %51 = vector.load %arg7[%c0_29, %c0_30] : memref<1x32xf32, #tpu.memory_space<vmem>>, vector<1x32xf32>
      %52 = vector.broadcast %51 : vector<1x32xf32> to vector<16x32xf32>
      %53 = arith.mulf %50, %52 : vector<16x32xf32>
      %c0_31 = arith.constant 0 : index
      %c0_32 = arith.constant 0 : index
      %54 = vector.load %arg8[%c0_31, %c0_32] : memref<1x32xf32, #tpu.memory_space<vmem>>, vector<1x32xf32>
      %55 = vector.broadcast %54 : vector<1x32xf32> to vector<16x32xf32>
      %56 = arith.addf %53, %55 : vector<16x32xf32>
      %c0_33 = arith.constant 0 : index
      %c0_34 = arith.constant 0 : index
      %57 = vector.load %arg9[%c0_33, %c0_34] : memref<16x32xf32, #tpu.memory_space<vmem>>, vector<16x32xf32>
      tpu.vector_store %arg9[%c0_33, %c0_34], %56 {strides = array<i32>} : memref<16x32xf32, #tpu.memory_space<vmem>>, vector<16x32xf32>,
    } else {
    }
    return
  }
  func.func @transform_0(%arg0: i32, %arg1: i32) -> (i32, i32) {
    %c0_i32 = arith.constant 0 : i32
    %c0_i32_0 = arith.constant 0 : i32
    return %arg0, %c0_i32 : i32, i32
  }
  func.func @transform_1(%arg0: i32, %arg1: i32) -> (i32, i32) {
    %c0_i32 = arith.constant 0 : i32
    %c0_i32_0 = arith.constant 0 : i32
    return %c0_i32, %arg1 : i32, i32
  }
  func.func @transform_2(%arg0: i32, %arg1: i32) -> (i32, i32) {
    %c0_i32 = arith.constant 0 : i32
    %c0_i32_0 = arith.constant 0 : i32
    return %c0_i32, %arg1 : i32, i32
  }
  func.func @transform_3(%arg0: i32, %arg1: i32) -> (i32, i32) {
    %c0_i32 = arith.constant 0 : i32
    %c0_i32_0 = arith.constant 0 : i32
    return %arg1, %c0_i32 : i32, i32
  }
  func.func @transform_4(%arg0: i32, %arg1: i32) -> (i32, i32) {
    %c0_i32 = arith.constant 0 : i32
    %c0_i32_0 = arith.constant 0 : i32
    %c0_i32_1 = arith.constant 0 : i32
    return %c0_i32, %c0_i32_0 : i32, i32
  }
  func.func @transform_5(%arg0: i32, %arg1: i32) -> (i32, i32) {
    %c0_i32 = arith.constant 0 : i32
    %c0_i32_0 = arith.constant 0 : i32
    %c0_i32_1 = arith.constant 0 : i32
    return %c0_i32, %c0_i32_0 : i32, i32
  }
  func.func @transform_6(%arg0: i32, %arg1: i32) -> (i32, i32) {
    %c0_i32 = arith.constant 0 : i32
    %c0_i32_0 = arith.constant 0 : i32
    %c0_i32_1 = arith.constant 0 : i32
    return %c0_i32, %c0_i32_0 : i32, i32
  }
  func.func @transform_7(%arg0: i32, %arg1: i32) -> (i32, i32) {
    %c0_i32 = arith.constant 0 : i32
    %c0_i32_0 = arith.constant 0 : i32
    return %arg0, %c0_i32 : i32, i32
  }
}

module attributes {stable_mosaic.version = 11 : i64} {
  func.func @_dual_matmul_gelu_kernel(%arg0: i32, %arg1: memref<16x32xf32, #tpu.memory_space<vmem>>, %arg2: memref<16x16xf32, #tpu.memory_space<vmem>>, %arg3: memref<32x16xf32, #tpu.memory_space<vmem>>, %arg4: memref<16x16xf32, #tpu.memory_space<vmem>>, %arg5: memref<1x16xf32, #tpu.memory_space<vmem>>, %arg6: memref<16x16xf32, #tpu.memory_space<vmem>>) attributes {dimension_semantics = [#tpu.dimension_semantics<parallel>], iteration_bounds = array<i64: 1>, scalar_prefetch = 0 : i64, scratch_operands = 0 : i64, tpu.core_type = #tpu.core_type<tc>, window_params = [{transform_indices = @transform_0, window_bounds = array<i64: 16, 32>}, {transform_indices = @transform_1, window_bounds = array<i64: 16, 16>}, {pipeline_mode = #tpu.pipeline_mode<synchronous>, transform_indices = @transform_2, window_bounds = array<i64: 32, 16>}, {pipeline_mode = #tpu.pipeline_mode<synchronous>, transform_indices = @transform_3, window_bounds = array<i64: 16, 16>}, {pipeline_mode = #tpu.pipeline_mode<synchronous>, transform_indices = @transform_4, window_bounds = array<i64: 1, 16>}, {transform_indices = @transform_5, window_bounds = array<i64: 16, 16>}]} {
    %c0 = arith.constant 0 : index
    %c0_0 = arith.constant 0 : index
    %0 = vector.load %arg1[%c0, %c0_0] : memref<16x32xf32, #tpu.memory_space<vmem>>, vector<16x32xf32>
    %1 = arith.truncf %0 : vector<16x32xf32> to vector<16x32xbf16>
    %c0_1 = arith.constant 0 : index
    %c0_2 = arith.constant 0 : index
    %2 = vector.load %arg3[%c0_1, %c0_2] : memref<32x16xf32, #tpu.memory_space<vmem>>, vector<32x16xf32>
    %3 = arith.truncf %2 : vector<32x16xf32> to vector<32x16xbf16>
    %cst = arith.constant dense<0.000000e+00> : vector<16x16xf32>
    %4 = tpu.matmul %1, %3, %cst {dimension_numbers = #tpu.dot_dimension_numbers<[1], [0], [0], [1], [0, 0, 1, 1], [], []>} : vector<16x32xbf16>, vector<32x16xbf16>, vector<16x16xf32> -> vector<16x16xf32>
    %c0_3 = arith.constant 0 : index
    %c0_4 = arith.constant 0 : index
    %5 = vector.load %arg2[%c0_3, %c0_4] : memref<16x16xf32, #tpu.memory_space<vmem>>, vector<16x16xf32>
    %6 = arith.truncf %5 : vector<16x16xf32> to vector<16x16xbf16>
    %c0_5 = arith.constant 0 : index
    %c0_6 = arith.constant 0 : index
    %7 = vector.load %arg4[%c0_5, %c0_6] : memref<16x16xf32, #tpu.memory_space<vmem>>, vector<16x16xf32>
    %8 = arith.truncf %7 : vector<16x16xf32> to vector<16x16xbf16>
    %cst_7 = arith.constant dense<0.000000e+00> : vector<16x16xf32>
    %9 = tpu.matmul %6, %8, %cst_7 {dimension_numbers = #tpu.dot_dimension_numbers<[1], [0], [0], [1], [0, 0, 1, 1], [], []>} : vector<16x16xbf16>, vector<16x16xbf16>, vector<16x16xf32> -> vector<16x16xf32>
    %10 = arith.addf %4, %9 : vector<16x16xf32>
    %c0_8 = arith.constant 0 : index
    %c0_9 = arith.constant 0 : index
    %11 = vector.load %arg5[%c0_8, %c0_9] : memref<1x16xf32, #tpu.memory_space<vmem>>, vector<1x16xf32>
    %12 = vector.broadcast %11 : vector<1x16xf32> to vector<16x16xf32>
    %13 = arith.addf %10, %12 : vector<16x16xf32>
    %cst_10 = arith.constant 5.000000e-01 : f32
    %14 = vector.broadcast %cst_10 : f32 to vector<16x16xf32>
    %15 = arith.mulf %14, %13 : vector<16x16xf32>
    %cst_11 = arith.constant 0.707106769 : f32
    %16 = vector.broadcast %cst_11 : f32 to vector<16x16xf32>
    %17 = arith.mulf %13, %16 : vector<16x16xf32>
    %18 = math.erf %17 : vector<16x16xf32>
    %cst_12 = arith.constant 1.000000e+00 : f32
    %19 = vector.broadcast %cst_12 : f32 to vector<16x16xf32>
    %20 = arith.addf %19, %18 : vector<16x16xf32>
    %21 = arith.mulf %15, %20 : vector<16x16xf32>
    %c0_13 = arith.constant 0 : index
    %c0_14 = arith.constant 0 : index
    %22 = vector.load %arg6[%c0_13, %c0_14] : memref<16x16xf32, #tpu.memory_space<vmem>>, vector<16x16xf32>
    tpu.vector_store %arg6[%c0_13, %c0_14], %21 {strides = array<i32>} : memref<16x16xf32, #tpu.memory_space<vmem>>, vector<16x16xf32>,
    return
  }
  func.func @transform_0(%arg0: i32) -> (i32, i32) {
    %c0_i32 = arith.constant 0 : i32
    %c0_i32_0 = arith.constant 0 : i32
    return %arg0, %c0_i32 : i32, i32
  }
  func.func @transform_1(%arg0: i32) -> (i32, i32) {
    %c0_i32 = arith.constant 0 : i32
    %c0_i32_0 = arith.constant 0 : i32
    return %arg0, %c0_i32 : i32, i32
  }
  func.func @transform_2(%arg0: i32) -> (i32, i32) {
    %c0_i32 = arith.constant 0 : i32
    %c0_i32_0 = arith.constant 0 : i32
    %c0_i32_1 = arith.constant 0 : i32
    return %c0_i32, %c0_i32_0 : i32, i32
  }
  func.func @transform_3(%arg0: i32) -> (i32, i32) {
    %c0_i32 = arith.constant 0 : i32
    %c0_i32_0 = arith.constant 0 : i32
    %c0_i32_1 = arith.constant 0 : i32
    return %c0_i32, %c0_i32_0 : i32, i32
  }
  func.func @transform_4(%arg0: i32) -> (i32, i32) {
    %c0_i32 = arith.constant 0 : i32
    %c0_i32_0 = arith.constant 0 : i32
    %c0_i32_1 = arith.constant 0 : i32
    return %c0_i32, %c0_i32_0 : i32, i32
  }
  func.func @transform_5(%arg0: i32) -> (i32, i32) {
    %c0_i32 = arith.constant 0 : i32
    %c0_i32_0 = arith.constant 0 : i32
    return %arg0, %c0_i32 : i32, i32
  }
}

module attributes {stable_mosaic.version = 11 : i64} {
  func.func @_matmul_kernel(%arg0: i32, %arg1: i32, %arg2: i32, %arg3: memref<16x16xf32, #tpu.memory_space<vmem>>, %arg4: memref<16x48xf32, #tpu.memory_space<vmem>>, %arg5: memref<1x48xf32, #tpu.memory_space<vmem>>, %arg6: memref<16x48xbf16, #tpu.memory_space<vmem>>, %arg7: memref<16x48xf32, #tpu.memory_space<vmem>>) attributes {dimension_semantics = [#tpu.dimension_semantics<parallel>, #tpu.dimension_semantics<parallel>, #tpu.dimension_semantics<arbitrary>], iteration_bounds = array<i64: 1, 1, 1>, scalar_prefetch = 0 : i64, scratch_operands = 1 : i64, tpu.core_type = #tpu.core_type<tc>, window_params = [{transform_indices = @transform_0, window_bounds = array<i64: 16, 16>}, {transform_indices = @transform_1, window_bounds = array<i64: 16, 48>}, {transform_indices = @transform_2, window_bounds = array<i64: 1, 48>}, {transform_indices = @transform_3, window_bounds = array<i64: 16, 48>}]} {
    %c0_i32 = arith.constant 0 : i32
    %0 = arith.cmpi eq, %arg2, %c0_i32 : i32
    %1 = arith.extui %0 : i1 to i32
    %c0_i32_0 = arith.constant 0 : i32
    %2 = arith.cmpi ne, %1, %c0_i32_0 : i32
    scf.if %2 {
      %cst_10 = arith.constant 0.000000e+00 : f32
      %14 = vector.broadcast %cst_10 : f32 to vector<16x48xf32>
      %c0_11 = arith.constant 0 : index
      %c0_12 = arith.constant 0 : index
      %15 = vector.load %arg7[%c0_11, %c0_12] : memref<16x48xf32, #tpu.memory_space<vmem>>, vector<16x48xf32>
      tpu.vector_store %arg7[%c0_11, %c0_12], %14 {strides = array<i32>} : memref<16x48xf32, #tpu.memory_space<vmem>>, vector<16x48xf32>,
    } else {
    }
    %c0 = arith.constant 0 : index
    %c0_1 = arith.constant 0 : index
    %3 = vector.load %arg7[%c0, %c0_1] : memref<16x48xf32, #tpu.memory_space<vmem>>, vector<16x48xf32>
    %c0_2 = arith.constant 0 : index
    %c0_3 = arith.constant 0 : index
    %4 = vector.load %arg3[%c0_2, %c0_3] : memref<16x16xf32, #tpu.memory_space<vmem>>, vector<16x16xf32>
    %5 = arith.truncf %4 : vector<16x16xf32> to vector<16x16xbf16>
    %c0_4 = arith.constant 0 : index
    %c0_5 = arith.constant 0 : index
    %6 = vector.load %arg4[%c0_4, %c0_5] : memref<16x48xf32, #tpu.memory_space<vmem>>, vector<16x48xf32>
    %7 = arith.truncf %6 : vector<16x48xf32> to vector<16x48xbf16>
    %cst = arith.constant dense<0.000000e+00> : vector<16x48xf32>
    %8 = tpu.matmul %5, %7, %cst {dimension_numbers = #tpu.dot_dimension_numbers<[1], [0], [0], [1], [0, 0, 1, 1], [], []>} : vector<16x16xbf16>, vector<16x48xbf16>, vector<16x48xf32> -> vector<16x48xf32>
    %9 = arith.addf %3, %8 : vector<16x48xf32>
    %c0_6 = arith.constant 0 : index
    %c0_7 = arith.constant 0 : index
    %10 = vector.load %arg7[%c0_6, %c0_7] : memref<16x48xf32, #tpu.memory_space<vmem>>, vector<16x48xf32>
    tpu.vector_store %arg7[%c0_6, %c0_7], %9 {strides = array<i32>} : memref<16x48xf32, #tpu.memory_space<vmem>>, vector<16x48xf32>,
    %c0_i32_8 = arith.constant 0 : i32
    %11 = arith.cmpi eq, %arg2, %c0_i32_8 : i32
    %12 = arith.extui %11 : i1 to i32
    %c0_i32_9 = arith.constant 0 : i32
    %13 = arith.cmpi ne, %12, %c0_i32_9 : i32
    scf.if %13 {
      %c0_10 = arith.constant 0 : index
      %c0_11 = arith.constant 0 : index
      %14 = vector.load %arg7[%c0_10, %c0_11] : memref<16x48xf32, #tpu.memory_space<vmem>>, vector<16x48xf32>
      %c0_12 = arith.constant 0 : index
      %c0_13 = arith.constant 0 : index
      %15 = vector.load %arg5[%c0_12, %c0_13] : memref<1x48xf32, #tpu.memory_space<vmem>>, vector<1x48xf32>
      %16 = vector.broadcast %15 : vector<1x48xf32> to vector<16x48xf32>
      %17 = arith.addf %14, %16 : vector<16x48xf32>
      %18 = arith.truncf %17 : vector<16x48xf32> to vector<16x48xbf16>
      %c0_14 = arith.constant 0 : index
      %c0_15 = arith.constant 0 : index
      %19 = vector.load %arg6[%c0_14, %c0_15] : memref<16x48xbf16, #tpu.memory_space<vmem>>, vector<16x48xbf16>
      tpu.vector_store %arg6[%c0_14, %c0_15], %18 {strides = array<i32>} : memref<16x48xbf16, #tpu.memory_space<vmem>>, vector<16x48xbf16>,
    } else {
    }
    return
  }
  func.func @transform_0(%arg0: i32, %arg1: i32, %arg2: i32) -> (i32, i32) {
    %c0_i32 = arith.constant 0 : i32
    return %arg0, %arg2 : i32, i32
  }
  func.func @transform_1(%arg0: i32, %arg1: i32, %arg2: i32) -> (i32, i32) {
    %c0_i32 = arith.constant 0 : i32
    return %arg2, %arg1 : i32, i32
  }
  func.func @transform_2(%arg0: i32, %arg1: i32, %arg2: i32) -> (i32, i32) {
    %c0_i32 = arith.constant 0 : i32
    %c0_i32_0 = arith.constant 0 : i32
    return %c0_i32, %arg1 : i32, i32
  }
  func.func @transform_3(%arg0: i32, %arg1: i32, %arg2: i32) -> (i32, i32) {
    %c0_i32 = arith.constant 0 : i32
    return %arg0, %arg1 : i32, i32
  }
}

module attributes {stable_mosaic.version = 11 : i64} {
  func.func @_matmul_kernel(%arg0: i32, %arg1: i32, %arg2: i32, %arg3: memref<16x16xbf16, #tpu.memory_space<vmem>>, %arg4: memref<16x16xf32, #tpu.memory_space<vmem>>, %arg5: memref<1x16xf32, #tpu.memory_space<vmem>>, %arg6: memref<16x16xf32, #tpu.memory_space<vmem>>, %arg7: memref<16x16xf32, #tpu.memory_space<vmem>>, %arg8: memref<16x16xf32, #tpu.memory_space<vmem>>) attributes {dimension_semantics = [#tpu.dimension_semantics<parallel>, #tpu.dimension_semantics<parallel>, #tpu.dimension_semantics<arbitrary>], iteration_bounds = array<i64: 1, 1, 1>, scalar_prefetch = 0 : i64, scratch_operands = 1 : i64, tpu.core_type = #tpu.core_type<tc>, window_params = [{transform_indices = @transform_0, window_bounds = array<i64: 16, 16>}, {transform_indices = @transform_1, window_bounds = array<i64: 16, 16>}, {transform_indices = @transform_2, window_bounds = array<i64: 1, 16>}, {transform_indices = @transform_3, window_bounds = array<i64: 16, 16>}, {transform_indices = @transform_4, window_bounds = array<i64: 16, 16>}]} {
    %c0_i32 = arith.constant 0 : i32
    %0 = arith.cmpi eq, %arg2, %c0_i32 : i32
    %1 = arith.extui %0 : i1 to i32
    %c0_i32_0 = arith.constant 0 : i32
    %2 = arith.cmpi ne, %1, %c0_i32_0 : i32
    scf.if %2 {
      %cst_10 = arith.constant 0.000000e+00 : f32
      %13 = vector.broadcast %cst_10 : f32 to vector<16x16xf32>
      %c0_11 = arith.constant 0 : index
      %c0_12 = arith.constant 0 : index
      %14 = vector.load %arg8[%c0_11, %c0_12] : memref<16x16xf32, #tpu.memory_space<vmem>>, vector<16x16xf32>
      tpu.vector_store %arg8[%c0_11, %c0_12], %13 {strides = array<i32>} : memref<16x16xf32, #tpu.memory_space<vmem>>, vector<16x16xf32>,
    } else {
    }
    %c0 = arith.constant 0 : index
    %c0_1 = arith.constant 0 : index
    %3 = vector.load %arg8[%c0, %c0_1] : memref<16x16xf32, #tpu.memory_space<vmem>>, vector<16x16xf32>
    %c0_2 = arith.constant 0 : index
    %c0_3 = arith.constant 0 : index
    %4 = vector.load %arg3[%c0_2, %c0_3] : memref<16x16xbf16, #tpu.memory_space<vmem>>, vector<16x16xbf16>
    %c0_4 = arith.constant 0 : index
    %c0_5 = arith.constant 0 : index
    %5 = vector.load %arg4[%c0_4, %c0_5] : memref<16x16xf32, #tpu.memory_space<vmem>>, vector<16x16xf32>
    %6 = arith.truncf %5 : vector<16x16xf32> to vector<16x16xbf16>
    %cst = arith.constant dense<0.000000e+00> : vector<16x16xf32>
    %7 = tpu.matmul %4, %6, %cst {dimension_numbers = #tpu.dot_dimension_numbers<[1], [0], [0], [1], [0, 0, 1, 1], [], []>} : vector<16x16xbf16>, vector<16x16xbf16>, vector<16x16xf32> -> vector<16x16xf32>
    %8 = arith.addf %3, %7 : vector<16x16xf32>
    %c0_6 = arith.constant 0 : index
    %c0_7 = arith.constant 0 : index
    %9 = vector.load %arg8[%c0_6, %c0_7] : memref<16x16xf32, #tpu.memory_space<vmem>>, vector<16x16xf32>
    tpu.vector_store %arg8[%c0_6, %c0_7], %8 {strides = array<i32>} : memref<16x16xf32, #tpu.memory_space<vmem>>, vector<16x16xf32>,
    %c0_i32_8 = arith.constant 0 : i32
    %10 = arith.cmpi eq, %arg2, %c0_i32_8 : i32
    %11 = arith.extui %10 : i1 to i32
    %c0_i32_9 = arith.constant 0 : i32
    %12 = arith.cmpi ne, %11, %c0_i32_9 : i32
    scf.if %12 {
      %c0_10 = arith.constant 0 : index
      %c0_11 = arith.constant 0 : index
      %13 = vector.load %arg8[%c0_10, %c0_11] : memref<16x16xf32, #tpu.memory_space<vmem>>, vector<16x16xf32>
      %c0_12 = arith.constant 0 : index
      %c0_13 = arith.constant 0 : index
      %14 = vector.load %arg5[%c0_12, %c0_13] : memref<1x16xf32, #tpu.memory_space<vmem>>, vector<1x16xf32>
      %15 = vector.broadcast %14 : vector<1x16xf32> to vector<16x16xf32>
      %16 = arith.addf %13, %15 : vector<16x16xf32>
      %c0_14 = arith.constant 0 : index
      %c0_15 = arith.constant 0 : index
      %17 = vector.load %arg6[%c0_14, %c0_15] : memref<16x16xf32, #tpu.memory_space<vmem>>, vector<16x16xf32>
      %18 = arith.addf %16, %17 : vector<16x16xf32>
      %c0_16 = arith.constant 0 : index
      %c0_17 = arith.constant 0 : index
      %19 = vector.load %arg7[%c0_16, %c0_17] : memref<16x16xf32, #tpu.memory_space<vmem>>, vector<16x16xf32>
      tpu.vector_store %arg7[%c0_16, %c0_17], %18 {strides = array<i32>} : memref<16x16xf32, #tpu.memory_space<vmem>>, vector<16x16xf32>,
    } else {
    }
    return
  }
  func.func @transform_0(%arg0: i32, %arg1: i32, %arg2: i32) -> (i32, i32) {
    %c0_i32 = arith.constant 0 : i32
    return %arg0, %arg2 : i32, i32
  }
  func.func @transform_1(%arg0: i32, %arg1: i32, %arg2: i32) -> (i32, i32) {
    %c0_i32 = arith.constant 0 : i32
    return %arg2, %arg1 : i32, i32
  }
  func.func @transform_2(%arg0: i32, %arg1: i32, %arg2: i32) -> (i32, i32) {
    %c0_i32 = arith.constant 0 : i32
    %c0_i32_0 = arith.constant 0 : i32
    return %c0_i32, %arg1 : i32, i32
  }
  func.func @transform_3(%arg0: i32, %arg1: i32, %arg2: i32) -> (i32, i32) {
    %c0_i32 = arith.constant 0 : i32
    return %arg0, %arg1 : i32, i32
  }
  func.func @transform_4(%arg0: i32, %arg1: i32, %arg2: i32) -> (i32, i32) {
    %c0_i32 = arith.constant 0 : i32
    return %arg0, %arg1 : i32, i32
  }
}

module attributes {stable_mosaic.version = 11 : i64} {
  func.func @_flash_attn_kernel(%arg0: i32, %arg1: i32, %arg2: i32, %arg3: i32, %arg4: memref<1x8x48xbf16, #tpu.memory_space<vmem>>, %arg5: memref<1x8x48xbf16, #tpu.memory_space<vmem>>, %arg6: memref<1x8x8xf32, #tpu.memory_space<vmem>>, %arg7: memref<1x8x16xbf16, #tpu.memory_space<vmem>>, %arg8: memref<2x8x1xf32, #tpu.memory_space<vmem>>, %arg9: memref<2x8x1xf32, #tpu.memory_space<vmem>>, %arg10: memref<2x8x8xf32, #tpu.memory_space<vmem>>) attributes {dimension_semantics = [#tpu.dimension_semantics<parallel>, #tpu.dimension_semantics<parallel>, #tpu.dimension_semantics<parallel>, #tpu.dimension_semantics<arbitrary>], iteration_bounds = array<i64: 2, 1, 1, 1>, scalar_prefetch = 0 : i64, scratch_operands = 3 : i64, tpu.core_type = #tpu.core_type<tc>, window_params = [{transform_indices = @transform_0, window_bounds = array<i64: 1, 8, 48>}, {transform_indices = @transform_1, window_bounds = array<i64: 1, 8, 48>}, {transform_indices = @transform_2, window_bounds = array<i64: 1, 8, 8>}, {transform_indices = @transform_3, window_bounds = array<i64: 1, 8, 16>}]} {
    %c0_i32 = arith.constant 0 : i32
    %0 = arith.cmpi eq, %arg3, %c0_i32 : i32
    %1 = arith.extui %0 : i1 to i32
    %c0_i32_0 = arith.constant 0 : i32
    %2 = arith.cmpi ne, %1, %c0_i32_0 : i32
    scf.if %2 {
      %cst_53 = arith.constant 0xFF800000 : f32
      %86 = vector.broadcast %cst_53 : f32 to vector<2x8x1xf32>
      %c0_54 = arith.constant 0 : index
      %c0_55 = arith.constant 0 : index
      %c0_56 = arith.constant 0 : index
      %87 = vector.load %arg8[%c0_54, %c0_55, %c0_56] : memref<2x8x1xf32, #tpu.memory_space<vmem>>, vector<2x8x1xf32>
      tpu.vector_store %arg8[%c0_54, %c0_55, %c0_56], %86 {strides = array<i32>} : memref<2x8x1xf32, #tpu.memory_space<vmem>>, vector<2x8x1xf32>,
      %cst_57 = arith.constant 0.000000e+00 : f32
      %88 = vector.broadcast %cst_57 : f32 to vector<2x8x1xf32>
      %c0_58 = arith.constant 0 : index
      %c0_59 = arith.constant 0 : index
      %c0_60 = arith.constant 0 : index
      %89 = vector.load %arg9[%c0_58, %c0_59, %c0_60] : memref<2x8x1xf32, #tpu.memory_space<vmem>>, vector<2x8x1xf32>
      tpu.vector_store %arg9[%c0_58, %c0_59, %c0_60], %88 {strides = array<i32>} : memref<2x8x1xf32, #tpu.memory_space<vmem>>, vector<2x8x1xf32>,
      %cst_61 = arith.constant 0.000000e+00 : f32
      %90 = vector.broadcast %cst_61 : f32 to vector<2x8x8xf32>
      %c0_62 = arith.constant 0 : index
      %c0_63 = arith.constant 0 : index
      %c0_64 = arith.constant 0 : index
      %91 = vector.load %arg10[%c0_62, %c0_63, %c0_64] : memref<2x8x8xf32, #tpu.memory_space<vmem>>, vector<2x8x8xf32>
      tpu.vector_store %arg10[%c0_62, %c0_63, %c0_64], %90 {strides = array<i32>} : memref<2x8x8xf32, #tpu.memory_space<vmem>>, vector<2x8x8xf32>,
    } else {
    }
    %c0 = arith.constant 0 : index
    %c0_1 = arith.constant 0 : index
    %c0_2 = arith.constant 0 : index
    %3 = vector.load %arg4[%c0, %c0_1, %c0_2] : memref<1x8x48xbf16, #tpu.memory_space<vmem>>, vector<1x8x48xbf16>
    %4 = vector.shape_cast %3 : vector<1x8x48xbf16> to vector<8x48xbf16>
    %c0_3 = arith.constant 0 : index
    %c0_4 = arith.constant 0 : index
    %c0_5 = arith.constant 0 : index
    %5 = vector.load %arg5[%c0_3, %c0_4, %c0_5] : memref<1x8x48xbf16, #tpu.memory_space<vmem>>, vector<1x8x48xbf16>
    %6 = vector.shape_cast %5 : vector<1x8x48xbf16> to vector<8x48xbf16>
    %c0_6 = arith.constant 0 : index
    %c0_7 = arith.constant 0 : index
    %c0_8 = arith.constant 0 : index
    %7 = vector.load %arg6[%c0_6, %c0_7, %c0_8] : memref<1x8x8xf32, #tpu.memory_space<vmem>>, vector<1x8x8xf32>
    %8 = vector.shape_cast %7 : vector<1x8x8xf32> to vector<8x8xf32>
    %9 = vector.extract_strided_slice %4 {offsets = [0, 0], sizes = [8, 8], strides = [1, 1]} : vector<8x48xbf16> to vector<8x8xbf16>
    %10 = vector.extract_strided_slice %6 {offsets = [0, 16], sizes = [8, 8], strides = [1, 1]} : vector<8x48xbf16> to vector<8x8xbf16>
    %11 = vector.extract_strided_slice %6 {offsets = [0, 32], sizes = [8, 8], strides = [1, 1]} : vector<8x48xbf16> to vector<8x8xbf16>
    %cst = arith.constant dense<0.000000e+00> : vector<8x8xf32>
    %12 = tpu.matmul %9, %10, %cst {dimension_numbers = #tpu.dot_dimension_numbers<[1], [1], [0], [0], [0, 0, 1, 0], [], []>} : vector<8x8xbf16>, vector<8x8xbf16>, vector<8x8xf32> -> vector<8x8xf32>
    %13 = arith.addf %12, %8 : vector<8x8xf32>
    %c0_9 = arith.constant 0 : index
    %c0_10 = arith.constant 0 : index
    %c0_11 = arith.constant 0 : index
    %14 = vector.load %arg8[%c0_9, %c0_10, %c0_11] : memref<2x8x1xf32, #tpu.memory_space<vmem>>, vector<1x8x1xf32>
    %15 = vector.shape_cast %14 : vector<1x8x1xf32> to vector<8x1xf32>
    %cst_12 = arith.constant dense<0xFF800000> : vector<8xf32>
    %16 = vector.multi_reduction <maximumf>, %13, %cst_12 [1] : vector<8x8xf32> to vector<8xf32>
    %17 = vector.shape_cast %16 : vector<8xf32> to vector<8x1xf32>
    %18 = arith.maximumf %15, %17 : vector<8x1xf32>
    %19 = arith.subf %15, %18 : vector<8x1xf32>
    %20 = math.exp %19 : vector<8x1xf32>
    %21 = vector.broadcast %18 : vector<8x1xf32> to vector<8x8xf32>
    %22 = arith.subf %13, %21 : vector<8x8xf32>
    %23 = math.exp %22 : vector<8x8xf32>
    %c0_13 = arith.constant 0 : index
    %c0_14 = arith.constant 0 : index
    %c0_15 = arith.constant 0 : index
    %24 = vector.load %arg9[%c0_13, %c0_14, %c0_15] : memref<2x8x1xf32, #tpu.memory_space<vmem>>, vector<1x8x1xf32>
    %25 = vector.shape_cast %24 : vector<1x8x1xf32> to vector<8x1xf32>
    %26 = arith.mulf %20, %25 : vector<8x1xf32>
    %cst_16 = arith.constant dense<0.000000e+00> : vector<8xf32>
    %27 = vector.multi_reduction <add>, %23, %cst_16 [1] : vector<8x8xf32> to vector<8xf32>
    %28 = vector.shape_cast %27 : vector<8xf32> to vector<8x1xf32>
    %29 = arith.addf %26, %28 : vector<8x1xf32>
    %c0_17 = arith.constant 0 : index
    %c0_18 = arith.constant 0 : index
    %c0_19 = arith.constant 0 : index
    %30 = vector.load %arg9[%c0_17, %c0_18, %c0_19] : memref<2x8x1xf32, #tpu.memory_space<vmem>>, vector<1x8x1xf32>
    %31 = vector.shape_cast %30 : vector<1x8x1xf32> to vector<8x1xf32>
    %32 = vector.shape_cast %29 : vector<8x1xf32> to vector<1x8x1xf32>
    tpu.vector_store %arg9[%c0_17, %c0_18, %c0_19], %32 {strides = array<i32>} : memref<2x8x1xf32, #tpu.memory_space<vmem>>, vector<1x8x1xf32>,
    %33 = arith.truncf %23 : vector<8x8xf32> to vector<8x8xbf16>
    %cst_20 = arith.constant dense<0.000000e+00> : vector<8x8xf32>
    %34 = tpu.matmul %33, %11, %cst_20 {dimension_numbers = #tpu.dot_dimension_numbers<[1], [0], [0], [1], [0, 0, 1, 1], [], []>} : vector<8x8xbf16>, vector<8x8xbf16>, vector<8x8xf32> -> vector<8x8xf32>
    %c0_21 = arith.constant 0 : index
    %c0_22 = arith.constant 0 : index
    %c0_23 = arith.constant 0 : index
    %35 = vector.load %arg10[%c0_21, %c0_22, %c0_23] : memref<2x8x8xf32, #tpu.memory_space<vmem>>, vector<1x8x8xf32>
    %36 = vector.shape_cast %35 : vector<1x8x8xf32> to vector<8x8xf32>
    %37 = vector.broadcast %20 : vector<8x1xf32> to vector<8x8xf32>
    %38 = arith.mulf %37, %36 : vector<8x8xf32>
    %39 = arith.addf %38, %34 : vector<8x8xf32>
    %c0_24 = arith.constant 0 : index
    %c0_25 = arith.constant 0 : index
    %c0_26 = arith.constant 0 : index
    %40 = vector.load %arg10[%c0_24, %c0_25, %c0_26] : memref<2x8x8xf32, #tpu.memory_space<vmem>>, vector<1x8x8xf32>
    %41 = vector.shape_cast %40 : vector<1x8x8xf32> to vector<8x8xf32>
    %42 = vector.shape_cast %39 : vector<8x8xf32> to vector<1x8x8xf32>
    tpu.vector_store %arg10[%c0_24, %c0_25, %c0_26], %42 {strides = array<i32>} : memref<2x8x8xf32, #tpu.memory_space<vmem>>, vector<1x8x8xf32>,
    %c0_27 = arith.constant 0 : index
    %c0_28 = arith.constant 0 : index
    %c0_29 = arith.constant 0 : index
    %43 = vector.load %arg8[%c0_27, %c0_28, %c0_29] : memref<2x8x1xf32, #tpu.memory_space<vmem>>, vector<1x8x1xf32>
    %44 = vector.shape_cast %43 : vector<1x8x1xf32> to vector<8x1xf32>
    %45 = vector.shape_cast %18 : vector<8x1xf32> to vector<1x8x1xf32>
    tpu.vector_store %arg8[%c0_27, %c0_28, %c0_29], %45 {strides = array<i32>} : memref<2x8x1xf32, #tpu.memory_space<vmem>>, vector<1x8x1xf32>,
    %46 = vector.extract_strided_slice %4 {offsets = [0, 8], sizes = [8, 8], strides = [1, 1]} : vector<8x48xbf16> to vector<8x8xbf16>
    %47 = vector.extract_strided_slice %6 {offsets = [0, 24], sizes = [8, 8], strides = [1, 1]} : vector<8x48xbf16> to vector<8x8xbf16>
    %48 = vector.extract_strided_slice %6 {offsets = [0, 40], sizes = [8, 8], strides = [1, 1]} : vector<8x48xbf16> to vector<8x8xbf16>
    %cst_30 = arith.constant dense<0.000000e+00> : vector<8x8xf32>
    %49 = tpu.matmul %46, %47, %cst_30 {dimension_numbers = #tpu.dot_dimension_numbers<[1], [1], [0], [0], [0, 0, 1, 0], [], []>} : vector<8x8xbf16>, vector<8x8xbf16>, vector<8x8xf32> -> vector<8x8xf32>
    %50 = arith.addf %49, %8 : vector<8x8xf32>
    %c1 = arith.constant 1 : index
    %c0_31 = arith.constant 0 : index
    %c0_32 = arith.constant 0 : index
    %51 = vector.load %arg8[%c1, %c0_31, %c0_32] : memref<2x8x1xf32, #tpu.memory_space<vmem>>, vector<1x8x1xf32>
    %52 = vector.shape_cast %51 : vector<1x8x1xf32> to vector<8x1xf32>
    %cst_33 = arith.constant dense<0xFF800000> : vector<8xf32>
    %53 = vector.multi_reduction <maximumf>, %50, %cst_33 [1] : vector<8x8xf32> to vector<8xf32>
    %54 = vector.shape_cast %53 : vector<8xf32> to vector<8x1xf32>
    %55 = arith.maximumf %52, %54 : vector<8x1xf32>
    %56 = arith.subf %52, %55 : vector<8x1xf32>
    %57 = math.exp %56 : vector<8x1xf32>
    %58 = vector.broadcast %55 : vector<8x1xf32> to vector<8x8xf32>
    %59 = arith.subf %50, %58 : vector<8x8xf32>
    %60 = math.exp %59 : vector<8x8xf32>
    %c1_34 = arith.constant 1 : index
    %c0_35 = arith.constant 0 : index
    %c0_36 = arith.constant 0 : index
    %61 = vector.load %arg9[%c1_34, %c0_35, %c0_36] : memref<2x8x1xf32, #tpu.memory_space<vmem>>, vector<1x8x1xf32>
    %62 = vector.shape_cast %61 : vector<1x8x1xf32> to vector<8x1xf32>
    %63 = arith.mulf %57, %62 : vector<8x1xf32>
    %cst_37 = arith.constant dense<0.000000e+00> : vector<8xf32>
    %64 = vector.multi_reduction <add>, %60, %cst_37 [1] : vector<8x8xf32> to vector<8xf32>
    %65 = vector.shape_cast %64 : vector<8xf32> to vector<8x1xf32>
    %66 = arith.addf %63, %65 : vector<8x1xf32>
    %c1_38 = arith.constant 1 : index
    %c0_39 = arith.constant 0 : index
    %c0_40 = arith.constant 0 : index
    %67 = vector.load %arg9[%c1_38, %c0_39, %c0_40] : memref<2x8x1xf32, #tpu.memory_space<vmem>>, vector<1x8x1xf32>
    %68 = vector.shape_cast %67 : vector<1x8x1xf32> to vector<8x1xf32>
    %69 = vector.shape_cast %66 : vector<8x1xf32> to vector<1x8x1xf32>
    tpu.vector_store %arg9[%c1_38, %c0_39, %c0_40], %69 {strides = array<i32>} : memref<2x8x1xf32, #tpu.memory_space<vmem>>, vector<1x8x1xf32>,
    %70 = arith.truncf %60 : vector<8x8xf32> to vector<8x8xbf16>
    %cst_41 = arith.constant dense<0.000000e+00> : vector<8x8xf32>
    %71 = tpu.matmul %70, %48, %cst_41 {dimension_numbers = #tpu.dot_dimension_numbers<[1], [0], [0], [1], [0, 0, 1, 1], [], []>} : vector<8x8xbf16>, vector<8x8xbf16>, vector<8x8xf32> -> vector<8x8xf32>
    %c1_42 = arith.constant 1 : index
    %c0_43 = arith.constant 0 : index
    %c0_44 = arith.constant 0 : index
    %72 = vector.load %arg10[%c1_42, %c0_43, %c0_44] : memref<2x8x8xf32, #tpu.memory_space<vmem>>, vector<1x8x8xf32>
    %73 = vector.shape_cast %72 : vector<1x8x8xf32> to vector<8x8xf32>
    %74 = vector.broadcast %57 : vector<8x1xf32> to vector<8x8xf32>
    %75 = arith.mulf %74, %73 : vector<8x8xf32>
    %76 = arith.addf %75, %71 : vector<8x8xf32>
    %c1_45 = arith.constant 1 : index
    %c0_46 = arith.constant 0 : index
    %c0_47 = arith.constant 0 : index
    %77 = vector.load %arg10[%c1_45, %c0_46, %c0_47] : memref<2x8x8xf32, #tpu.memory_space<vmem>>, vector<1x8x8xf32>
    %78 = vector.shape_cast %77 : vector<1x8x8xf32> to vector<8x8xf32>
    %79 = vector.shape_cast %76 : vector<8x8xf32> to vector<1x8x8xf32>
    tpu.vector_store %arg10[%c1_45, %c0_46, %c0_47], %79 {strides = array<i32>} : memref<2x8x8xf32, #tpu.memory_space<vmem>>, vector<1x8x8xf32>,
    %c1_48 = arith.constant 1 : index
    %c0_49 = arith.constant 0 : index
    %c0_50 = arith.constant 0 : index
    %80 = vector.load %arg8[%c1_48, %c0_49, %c0_50] : memref<2x8x1xf32, #tpu.memory_space<vmem>>, vector<1x8x1xf32>
    %81 = vector.shape_cast %80 : vector<1x8x1xf32> to vector<8x1xf32>
    %82 = vector.shape_cast %55 : vector<8x1xf32> to vector<1x8x1xf32>
    tpu.vector_store %arg8[%c1_48, %c0_49, %c0_50], %82 {strides = array<i32>} : memref<2x8x1xf32, #tpu.memory_space<vmem>>, vector<1x8x1xf32>,
    %c0_i32_51 = arith.constant 0 : i32
    %83 = arith.cmpi eq, %arg3, %c0_i32_51 : i32
    %84 = arith.extui %83 : i1 to i32
    %c0_i32_52 = arith.constant 0 : i32
    %85 = arith.cmpi ne, %84, %c0_i32_52 : i32
    scf.if %85 {
      %c0_53 = arith.constant 0 : index
      %c0_54 = arith.constant 0 : index
      %c0_55 = arith.constant 0 : index
      %86 = vector.load %arg10[%c0_53, %c0_54, %c0_55] : memref<2x8x8xf32, #tpu.memory_space<vmem>>, vector<1x8x8xf32>
      %87 = vector.shape_cast %86 : vector<1x8x8xf32> to vector<8x8xf32>
      %c0_56 = arith.constant 0 : index
      %c0_57 = arith.constant 0 : index
      %c0_58 = arith.constant 0 : index
      %88 = vector.load %arg9[%c0_56, %c0_57, %c0_58] : memref<2x8x1xf32, #tpu.memory_space<vmem>>, vector<1x8x1xf32>
      %89 = vector.shape_cast %88 : vector<1x8x1xf32> to vector<8x1xf32>
      %90 = tpu.reciprocal %89 {approx = true} : vector<8x1xf32> -> vector<8x1xf32>
      %91 = vector.broadcast %90 : vector<8x1xf32> to vector<8x8xf32>
      %92 = arith.mulf %87, %91 : vector<8x8xf32>
      %c1_59 = arith.constant 1 : index
      %c0_60 = arith.constant 0 : index
      %c0_61 = arith.constant 0 : index
      %93 = vector.load %arg10[%c1_59, %c0_60, %c0_61] : memref<2x8x8xf32, #tpu.memory_space<vmem>>, vector<1x8x8xf32>
      %94 = vector.shape_cast %93 : vector<1x8x8xf32> to vector<8x8xf32>
      %c1_62 = arith.constant 1 : index
      %c0_63 = arith.constant 0 : index
      %c0_64 = arith.constant 0 : index
      %95 = vector.load %arg9[%c1_62, %c0_63, %c0_64] : memref<2x8x1xf32, #tpu.memory_space<vmem>>, vector<1x8x1xf32>
      %96 = vector.shape_cast %95 : vector<1x8x1xf32> to vector<8x1xf32>
      %97 = tpu.reciprocal %96 {approx = true} : vector<8x1xf32> -> vector<8x1xf32>
      %98 = vector.broadcast %97 : vector<8x1xf32> to vector<8x8xf32>
      %99 = arith.mulf %94, %98 : vector<8x8xf32>
      %100 = tpu.concatenate %92, %99 in 1 : vector<8x8xf32>, vector<8x8xf32> -> vector<8x16xf32>
      %101 = arith.truncf %100 : vector<8x16xf32> to vector<8x16xbf16>
      %c0_65 = arith.constant 0 : index
      %c0_66 = arith.constant 0 : index
      %c0_67 = arith.constant 0 : index
      %102 = vector.load %arg7[%c0_65, %c0_66, %c0_67] : memref<1x8x16xbf16, #tpu.memory_space<vmem>>, vector<1x8x16xbf16>
      %103 = vector.shape_cast %102 : vector<1x8x16xbf16> to vector<8x16xbf16>
      %104 = vector.shape_cast %101 : vector<8x16xbf16> to vector<1x8x16xbf16>
      tpu.vector_store %arg7[%c0_65, %c0_66, %c0_67], %104 {strides = array<i32>} : memref<1x8x16xbf16, #tpu.memory_space<vmem>>, vector<1x8x16xbf16>,
    } else {
    }
    return
  }
  func.func @transform_0(%arg0: i32, %arg1: i32, %arg2: i32, %arg3: i32) -> (i32, i32, i32) {
    %c0_i32 = arith.constant 0 : i32
    %c0_i32_0 = arith.constant 0 : i32
    return %arg0, %arg2, %c0_i32 : i32, i32, i32
  }
  func.func @transform_1(%arg0: i32, %arg1: i32, %arg2: i32, %arg3: i32) -> (i32, i32, i32) {
    %c0_i32 = arith.constant 0 : i32
    %c0_i32_0 = arith.constant 0 : i32
    return %arg0, %arg3, %c0_i32 : i32, i32, i32
  }
  func.func @transform_2(%arg0: i32, %arg1: i32, %arg2: i32, %arg3: i32) -> (i32, i32, i32) {
    %c0_i32 = arith.constant 0 : i32
    return %arg0, %arg2, %arg3 : i32, i32, i32
  }
  func.func @transform_3(%arg0: i32, %arg1: i32, %arg2: i32, %arg3: i32) -> (i32, i32, i32) {
    %c0_i32 = arith.constant 0 : i32
    %c0_i32_0 = arith.constant 0 : i32
    return %arg0, %arg2, %c0_i32 : i32, i32, i32
  }
}

module attributes {stable_mosaic.version = 11 : i64} {
  func.func @_matmul_add_ln_kernel(%arg0: i32, %arg1: i32, %arg2: memref<16x16xf32, #tpu.memory_space<vmem>>, %arg3: memref<16x16xf32, #tpu.memory_space<vmem>>, %arg4: memref<1x16xf32, #tpu.memory_space<vmem>>, %arg5: memref<16x16xf32, #tpu.memory_space<vmem>>, %arg6: memref<1x16xf32, #tpu.memory_space<vmem>>, %arg7: memref<1x16xf32, #tpu.memory_space<vmem>>, %arg8: memref<16x16xf32, #tpu.memory_space<vmem>>, %arg9: memref<16x16xf32, #tpu.memory_space<vmem>>) attributes {dimension_semantics = [#tpu.dimension_semantics<parallel>, #tpu.dimension_semantics<arbitrary>], iteration_bounds = array<i64: 1, 1>, scalar_prefetch = 0 : i64, scratch_operands = 1 : i64, tpu.core_type = #tpu.core_type<tc>, window_params = [{transform_indices = @transform_0, window_bounds = array<i64: 16, 16>}, {transform_indices = @transform_1, window_bounds = array<i64: 16, 16>}, {pipeline_mode = #tpu.pipeline_mode<synchronous>, transform_indices = @transform_2, window_bounds = array<i64: 1, 16>}, {transform_indices = @transform_3, window_bounds = array<i64: 16, 16>}, {pipeline_mode = #tpu.pipeline_mode<synchronous>, transform_indices = @transform_4, window_bounds = array<i64: 1, 16>}, {pipeline_mode = #tpu.pipeline_mode<synchronous>, transform_indices = @transform_5, window_bounds = array<i64: 1, 16>}, {transform_indices = @transform_6, window_bounds = array<i64: 16, 16>}]} {
    %c0_i32 = arith.constant 0 : i32
    %0 = arith.cmpi eq, %arg1, %c0_i32 : i32
    %1 = arith.extui %0 : i1 to i32
    %c0_i32_0 = arith.constant 0 : i32
    %2 = arith.cmpi ne, %1, %c0_i32_0 : i32
    scf.if %2 {
      %cst_10 = arith.constant 0.000000e+00 : f32
      %14 = vector.broadcast %cst_10 : f32 to vector<16x16xf32>
      %c0_11 = arith.constant 0 : index
      %c0_12 = arith.constant 0 : index
      %15 = vector.load %arg9[%c0_11, %c0_12] : memref<16x16xf32, #tpu.memory_space<vmem>>, vector<16x16xf32>
      tpu.vector_store %arg9[%c0_11, %c0_12], %14 {strides = array<i32>} : memref<16x16xf32, #tpu.memory_space<vmem>>, vector<16x16xf32>,
    } else {
    }
    %c0 = arith.constant 0 : index
    %c0_1 = arith.constant 0 : index
    %3 = vector.load %arg9[%c0, %c0_1] : memref<16x16xf32, #tpu.memory_space<vmem>>, vector<16x16xf32>
    %c0_2 = arith.constant 0 : index
    %c0_3 = arith.constant 0 : index
    %4 = vector.load %arg2[%c0_2, %c0_3] : memref<16x16xf32, #tpu.memory_space<vmem>>, vector<16x16xf32>
    %5 = arith.truncf %4 : vector<16x16xf32> to vector<16x16xbf16>
    %c0_4 = arith.constant 0 : index
    %c0_5 = arith.constant 0 : index
    %6 = vector.load %arg3[%c0_4, %c0_5] : memref<16x16xf32, #tpu.memory_space<vmem>>, vector<16x16xf32>
    %7 = arith.truncf %6 : vector<16x16xf32> to vector<16x16xbf16>
    %cst = arith.constant dense<0.000000e+00> : vector<16x16xf32>
    %8 = tpu.matmul %5, %7, %cst {dimension_numbers = #tpu.dot_dimension_numbers<[1], [0], [0], [1], [0, 0, 1, 1], [], []>} : vector<16x16xbf16>, vector<16x16xbf16>, vector<16x16xf32> -> vector<16x16xf32>
    %9 = arith.addf %3, %8 : vector<16x16xf32>
    %c0_6 = arith.constant 0 : index
    %c0_7 = arith.constant 0 : index
    %10 = vector.load %arg9[%c0_6, %c0_7] : memref<16x16xf32, #tpu.memory_space<vmem>>, vector<16x16xf32>
    tpu.vector_store %arg9[%c0_6, %c0_7], %9 {strides = array<i32>} : memref<16x16xf32, #tpu.memory_space<vmem>>, vector<16x16xf32>,
    %c0_i32_8 = arith.constant 0 : i32
    %11 = arith.cmpi eq, %arg1, %c0_i32_8 : i32
    %12 = arith.extui %11 : i1 to i32
    %c0_i32_9 = arith.constant 0 : i32
    %13 = arith.cmpi ne, %12, %c0_i32_9 : i32
    scf.if %13 {
      %c0_10 = arith.constant 0 : index
      %c0_11 = arith.constant 0 : index
      %14 = vector.load %arg9[%c0_10, %c0_11] : memref<16x16xf32, #tpu.memory_space<vmem>>, vector<16x16xf32>
      %c0_12 = arith.constant 0 : index
      %c0_13 = arith.constant 0 : index
      %15 = vector.load %arg4[%c0_12, %c0_13] : memref<1x16xf32, #tpu.memory_space<vmem>>, vector<1x16xf32>
      %16 = vector.broadcast %15 : vector<1x16xf32> to vector<16x16xf32>
      %17 = arith.addf %14, %16 : vector<16x16xf32>
      %cst_14 = arith.constant 5.000000e-01 : f32
      %18 = vector.broadcast %cst_14 : f32 to vector<16x16xf32>
      %19 = arith.mulf %18, %17 : vector<16x16xf32>
      %cst_15 = arith.constant 0.707106769 : f32
      %20 = vector.broadcast %cst_15 : f32 to vector<16x16xf32>
      %21 = arith.mulf %17, %20 : vector<16x16xf32>
      %22 = math.erf %21 : vector<16x16xf32>
      %cst_16 = arith.constant 1.000000e+00 : f32
      %23 = vector.broadcast %cst_16 : f32 to vector<16x16xf32>
      %24 = arith.addf %23, %22 : vector<16x16xf32>
      %25 = arith.mulf %19, %24 : vector<16x16xf32>
      %c0_17 = arith.constant 0 : index
      %c0_18 = arith.constant 0 : index
      %26 = vector.load %arg5[%c0_17, %c0_18] : memref<16x16xf32, #tpu.memory_space<vmem>>, vector<16x16xf32>
      %27 = arith.addf %25, %26 : vector<16x16xf32>
      %cst_19 = arith.constant dense<0.000000e+00> : vector<16xf32>
      %28 = vector.multi_reduction <add>, %27, %cst_19 [1] : vector<16x16xf32> to vector<16xf32>
      %29 = vector.shape_cast %28 : vector<16xf32> to vector<16x1xf32>
      %cst_20 = arith.constant 1.600000e+01 : f32
      %30 = vector.broadcast %cst_20 : f32 to vector<16x1xf32>
      %31 = arith.divf %29, %30 : vector<16x1xf32>
      %32 = vector.broadcast %31 : vector<16x1xf32> to vector<16x16xf32>
      %33 = arith.subf %27, %32 : vector<16x16xf32>
      %34 = arith.mulf %33, %33 : vector<16x16xf32>
      %cst_21 = arith.constant dense<0.000000e+00> : vector<16xf32>
      %35 = vector.multi_reduction <add>, %34, %cst_21 [1] : vector<16x16xf32> to vector<16xf32>
      %36 = vector.shape_cast %35 : vector<16xf32> to vector<16x1xf32>
      %cst_22 = arith.constant 1.600000e+01 : f32
      %37 = vector.broadcast %cst_22 : f32 to vector<16x1xf32>
      %38 = arith.divf %36, %37 : vector<16x1xf32>
      %cst_23 = arith.constant 9.99999974E-6 : f32
      %39 = vector.broadcast %cst_23 : f32 to vector<16x1xf32>
      %40 = arith.addf %38, %39 : vector<16x1xf32>
      %41 = math.rsqrt %40 : vector<16x1xf32>
      %42 = vector.broadcast %41 : vector<16x1xf32> to vector<16x16xf32>
      %43 = arith.mulf %33, %42 : vector<16x16xf32>
      %c0_24 = arith.constant 0 : index
      %c0_25 = arith.constant 0 : index
      %44 = vector.load %arg6[%c0_24, %c0_25] : memref<1x16xf32, #tpu.memory_space<vmem>>, vector<1x16xf32>
      %45 = vector.broadcast %44 : vector<1x16xf32> to vector<16x16xf32>
      %46 = arith.mulf %43, %45 : vector<16x16xf32>
      %c0_26 = arith.constant 0 : index
      %c0_27 = arith.constant 0 : index
      %47 = vector.load %arg7[%c0_26, %c0_27] : memref<1x16xf32, #tpu.memory_space<vmem>>, vector<1x16xf32>
      %48 = vector.broadcast %47 : vector<1x16xf32> to vector<16x16xf32>
      %49 = arith.addf %46, %48 : vector<16x16xf32>
      %c0_28 = arith.constant 0 : index
      %c0_29 = arith.constant 0 : index
      %50 = vector.load %arg8[%c0_28, %c0_29] : memref<16x16xf32, #tpu.memory_space<vmem>>, vector<16x16xf32>
      tpu.vector_store %arg8[%c0_28, %c0_29], %49 {strides = array<i32>} : memref<16x16xf32, #tpu.memory_space<vmem>>, vector<16x16xf32>,
    } else {
    }
    return
  }
  func.func @transform_0(%arg0: i32, %arg1: i32) -> (i32, i32) {
    %c0_i32 = arith.constant 0 : i32
    return %arg0, %arg1 : i32, i32
  }
  func.func @transform_1(%arg0: i32, %arg1: i32) -> (i32, i32) {
    %c0_i32 = arith.constant 0 : i32
    %c0_i32_0 = arith.constant 0 : i32
    return %arg1, %c0_i32 : i32, i32
  }
  func.func @transform_2(%arg0: i32, %arg1: i32) -> (i32, i32) {
    %c0_i32 = arith.constant 0 : i32
    %c0_i32_0 = arith.constant 0 : i32
    %c0_i32_1 = arith.constant 0 : i32
    return %c0_i32, %c0_i32_0 : i32, i32
  }
  func.func @transform_3(%arg0: i32, %arg1: i32) -> (i32, i32) {
    %c0_i32 = arith.constant 0 : i32
    %c0_i32_0 = arith.constant 0 : i32
    return %arg0, %c0_i32 : i32, i32
  }
  func.func @transform_4(%arg0: i32, %arg1: i32) -> (i32, i32) {
    %c0_i32 = arith.constant 0 : i32
    %c0_i32_0 = arith.constant 0 : i32
    %c0_i32_1 = arith.constant 0 : i32
    return %c0_i32, %c0_i32_0 : i32, i32
  }
  func.func @transform_5(%arg0: i32, %arg1: i32) -> (i32, i32) {
    %c0_i32 = arith.constant 0 : i32
    %c0_i32_0 = arith.constant 0 : i32
    %c0_i32_1 = arith.constant 0 : i32
    return %c0_i32, %c0_i32_0 : i32, i32
  }
  func.func @transform_6(%arg0: i32, %arg1: i32) -> (i32, i32) {
    %c0_i32 = arith.constant 0 : i32
    %c0_i32_0 = arith.constant 0 : i32
    return %arg0, %c0_i32 : i32, i32
  }
}

</mosaic_0001>

<llo_original>
// kernel: bb_bart_encoder_layer.9
$region0: #{bb_bart_encoder_layer.9}
  #allocation0 [shape = 'u32[]', space=smem, size = 0x4, offset = 0x4, fixed_abs, tag = 'smem constant byte address 0x4 - core index']
  #allocation1 [shape = 'u32[144,128]{1,0:T(1,128)}', space=vmem, size = 0x12000, scoped, tag = 'internal scratch']
  #allocation2 [shape = 'f32[16,96]{1,0:T(8,128)}', space=vmem, size = 0x2000, scoped, tag = 'scratch operand']
  %s0 = inlined_call_operand.vmem [shape: f32[16,32], index: 0, kind: input, shape index: {}]
  %s1 = inlined_call_operand.vmem [shape: f32[32,96], index: 1, kind: input, shape index: {}]
  %s2 = inlined_call_operand.vmem [shape: f32[1,96], index: 2, kind: input, shape index: {}]
  %s3 = inlined_call_operand.vmem [shape: bf16[16,96], index: 3, kind: output, shape index: {}]
  %s4 = sld [smem:[#allocation0]]
  $region30: #{bb_bart_encoder_layer.9} parent=0
    _
  %s6 = ssub.s32 1, %s4
  %s7 = scalar_select 0, %s6, %s4
  // Predicated region
  $region2: #{bb_bart_encoder_layer.9} parent=0 // pred_check
    _
  $region3: #{bb_bart_encoder_layer.9} parent=0 // pred_check_branch
    %9 = sbr.rel (0) target = $region5
  $region4: #{bb_bart_encoder_layer.9} parent=0 // pred_region
    _
  $region5: #{bb_bart_encoder_layer.9} parent=0 // pred_fallthru
    _
  // Predicated region
  $region6: #{bb_bart_encoder_layer.9} parent=0 // pred_check
    _
  $region7: #{bb_bart_encoder_layer.9} parent=0 // pred_check_branch
    %11 = sbr.rel (0) target = $region9
  $region8: #{bb_bart_encoder_layer.9} parent=0 // pred_region
    _
  $region9: #{bb_bart_encoder_layer.9} parent=0 // pred_fallthru
    _
  // Predicated region
  $region10: #{bb_bart_encoder_layer.9} parent=0 // pred_check
    _
  $region11: #{bb_bart_encoder_layer.9} parent=0 // pred_check_branch
    %13 = sbr.rel (0) target = $region13
  $region12: #{bb_bart_encoder_layer.9} parent=0 // pred_region
    _
  $region13: #{bb_bart_encoder_layer.9} parent=0 // pred_fallthru
    _
  %p15 = scmp.eq.s32.totalorder 0, 0
  // Predicated region
  $region14: #{bb_bart_encoder_layer.9} parent=0 // pred_check
    %p16 = pneg %p15
  $region15: #{bb_bart_encoder_layer.9} parent=0 // pred_check_branch
    %18 = sbr.rel (%p16) target = $region17
  $region16: #{bb_bart_encoder_layer.9} parent=0 // pred_region
    %vm19 = vcmask 785408
    %20 = vst.msk [vmem:[#allocation2] sm:$0xff] %vm19, 0.0
    %21 = vst.msk [vmem:[#allocation2 + $0x8] sm:$0xff] %vm19, 0.0
  $region17: #{bb_bart_encoder_layer.9} parent=0 // pred_fallthru
    _
  %v22 = vld [vmem:[#allocation2] sm:$0xff]
  %v23 = vld [vmem:[#allocation2 + $0x8] sm:$0xff]
  %v24 = vld [vmem:[%s0] sm:$0xff]
  %v25 = vld [vmem:[%s0 + $0x8] sm:$0xff]
  %v26 = vpack.c.bf16 %v25, %v24
  %v27 = vld [vmem:[%s1] sm:$0xff]
  %v28 = vld [vmem:[%s1 + $0x8] sm:$0xff]
  %v29 = vld [vmem:[%s1 + $0x10] sm:$0xff]
  %v30 = vld [vmem:[%s1 + $0x18] sm:$0xff]
  %v31 = vpack.c.bf16 %v28, %v27
  %v32 = vpack.c.bf16 %v30, %v29
  %vm33 = vcmask 261120
  %v35 = vsel %vm33, %v26, 0
  %37 = vmatprep.subr.bf16.mxu0 0
  %38 = vmatpush1.bf16.msra.mxu0 %v31
  %39 = vmatprep.subr.bf16.mxu0 0
  %40 = vmatpush1.bf16.msra.mxu0 %v32
  %41 = vmatprep.subr.bf16.mxu0 0
  %42 = vmatpush1.bf16.msra.mxu0 0
  %43 = vmatprep.subr.bf16.mxu0 0
  %44 = vmatpush1.bf16.msra.mxu0 0
  %45 = vmatprep.subr.bf16.mxu0 0
  %46 = vmatpush1.bf16.msra.mxu0 0
  %47 = vmatprep.subr.bf16.mxu0 0
  %48 = vmatpush1.bf16.msra.mxu0 0
  %49 = vmatprep.subr.bf16.mxu0 0
  %50 = vmatpush1.bf16.msra.mxu0 0
  %51 = vmatprep.subr.bf16.mxu0 0
  %52 = vmatpush1.bf16.msra.mxu0 0
  %53 = vmatprep.subr.bf16.mxu0 0
  %54 = vmatpush1.bf16.msra.mxu0 0
  %55 = vmatprep.subr.bf16.mxu0 0
  %56 = vmatpush1.bf16.msra.mxu0 0
  %57 = vmatprep.subr.bf16.mxu0 0
  %58 = vmatpush1.bf16.msra.mxu0 0
  %59 = vmatprep.subr.bf16.mxu0 0
  %60 = vmatpush1.bf16.msra.mxu0 0
  %61 = vmatprep.subr.bf16.mxu0 0
  %62 = vmatpush1.bf16.msra.mxu0 0
  %63 = vmatprep.subr.bf16.mxu0 0
  %64 = vmatpush1.bf16.msra.mxu0 0
  %65 = vmatprep.subr.bf16.mxu0 0
  %66 = vmatpush1.bf16.msra.mxu0 0
  %67 = vmatprep.subr.bf16.mxu0 0
  %68 = vmatpush1.bf16.msra.mxu0 0
  %69 = vmatprep.mubr.bf16.mxu0 0
  %70 = vmatmul.mubr.bf16.gmra.mrb[0].mxu0 %v35
  %v71 = vpop.f32.mrb[0].mxu0
  %v72 = vadd.f32 0.0, %v71
  %v73 = vpop.f32.mrb[0].mxu0
  %v74 = vpop.f32.mrb[0].mxu0
  %v75 = vadd.f32 0.0, %v74
  %v76 = vpop.f32.mrb[0].mxu0
  %77 = vdwg.mxu0
  %v78 = vadd.f32 %v22, %v72
  %v79 = vadd.f32 %v23, %v75
  %vm80 = vcmask 785408
  %81 = vst.msk [vmem:[#allocation2] sm:$0xff] %vm80, %v78
  %82 = vst.msk [vmem:[#allocation2 + $0x8] sm:$0xff] %vm80, %v79
  // Predicated region
  $region18: #{bb_bart_encoder_layer.9} parent=0 // pred_check
    %p83 = pneg %p15
  $region19: #{bb_bart_encoder_layer.9} parent=0 // pred_check_branch
    %85 = sbr.rel (%p83) target = $region21
  $region20: #{bb_bart_encoder_layer.9} parent=0 // pred_region
    %v86 = vld [vmem:[#allocation2] sm:$0xff]
    %v87 = vld [vmem:[#allocation2 + $0x8] sm:$0xff]
    %v88 = vld [vmem:[%s2] sm:$0x1]
    %v90 = vlaneseq
    %v91 = vshrl.u32 %v90, 7
    %v92 = vsub.s32 0, %v91
    %v93 = vrot.slane %v88, %v92
    %v95 = vadd.f32 %v86, %v93
    %v96 = vadd.f32 %v87, %v93
    %v97 = vpack.c.bf16 %v96, %v95
    %v99 = vunpack.c.l.b16 %v97
    %v100 = vunpack.c.h.b16 %v97
    %v101 = vpack.c.b16 %v99, %v99
    %v102 = vpack.c.b16 %v100, %v100
    %vm105 = vcmask 781312
    %106 = vst.msk [vmem:[%s3] sm:$0xf] %vm105, %v101
    %107 = vst.msk [vmem:[%s3 + $0x4] sm:$0xf] %vm105, %v102
  $region21: #{bb_bart_encoder_layer.9} parent=0 // pred_fallthru
    _
  // Predicated region
  $region22: #{bb_bart_encoder_layer.9} parent=0 // pred_check
    _
  $region23: #{bb_bart_encoder_layer.9} parent=0 // pred_check_branch
    %109 = sbr.rel (0) target = $region25
  $region24: #{bb_bart_encoder_layer.9} parent=0 // pred_region
    _
  $region25: #{bb_bart_encoder_layer.9} parent=0 // pred_fallthru
    _
  // Predicated region
  $region26: #{bb_bart_encoder_layer.9} parent=0 // pred_check
    _
  $region27: #{bb_bart_encoder_layer.9} parent=0 // pred_check_branch
    %111 = sbr.rel (0) target = $region29
  $region28: #{bb_bart_encoder_layer.9} parent=0 // pred_region
    _
  $region29: #{bb_bart_encoder_layer.9} parent=0 // pred_fallthru
    _

// kernel: bb_bart_encoder_layer.11
$region0: #{bb_bart_encoder_layer.11}
  #allocation0 [shape = 'u32[]', space=smem, size = 0x4, offset = 0x4, fixed_abs, tag = 'smem constant byte address 0x4 - core index']
  #allocation1 [shape = 'u32[144,128]{1,0:T(1,128)}', space=vmem, size = 0x12000, scoped, tag = 'internal scratch']
  #allocation2 [shape = 'f32[16,32]{1,0:T(8,128)}', space=vmem, size = 0x2000, scoped, tag = 'scratch operand']
  %s0 = inlined_call_operand.vmem [shape: bf16[16,32], index: 0, kind: input, shape index: {}]
  %s1 = inlined_call_operand.vmem [shape: f32[32,32], index: 1, kind: input, shape index: {}]
  %s2 = inlined_call_operand.vmem [shape: f32[1,32], index: 2, kind: input, shape index: {}]
  %s3 = inlined_call_operand.vmem [shape: f32[16,32], index: 3, kind: input, shape index: {}]
  %s4 = inlined_call_operand.vmem [shape: f32[1,32], index: 4, kind: input, shape index: {}]
  %s5 = inlined_call_operand.vmem [shape: f32[1,32], index: 5, kind: input, shape index: {}]
  %s6 = inlined_call_operand.vmem [shape: f32[16,32], index: 6, kind: output, shape index: {}]
  %s7 = sld [smem:[#allocation0]]
  $region42: #{bb_bart_encoder_layer.11} parent=0
    _
  %s9 = ssub.s32 1, %s7
  %s10 = scalar_select 0, %s9, %s7
  // Predicated region
  $region2: #{bb_bart_encoder_layer.11} parent=0 // pred_check
    _
  $region3: #{bb_bart_encoder_layer.11} parent=0 // pred_check_branch
    %12 = sbr.rel (0) target = $region5
  $region4: #{bb_bart_encoder_layer.11} parent=0 // pred_region
    _
  $region5: #{bb_bart_encoder_layer.11} parent=0 // pred_fallthru
    _
  // Predicated region
  $region6: #{bb_bart_encoder_layer.11} parent=0 // pred_check
    _
  $region7: #{bb_bart_encoder_layer.11} parent=0 // pred_check_branch
    %14 = sbr.rel (0) target = $region9
  $region8: #{bb_bart_encoder_layer.11} parent=0 // pred_region
    _
  $region9: #{bb_bart_encoder_layer.11} parent=0 // pred_fallthru
    _
  // Predicated region
  $region10: #{bb_bart_encoder_layer.11} parent=0 // pred_check
    _
  $region11: #{bb_bart_encoder_layer.11} parent=0 // pred_check_branch
    %16 = sbr.rel (0) target = $region13
  $region12: #{bb_bart_encoder_layer.11} parent=0 // pred_region
    _
  $region13: #{bb_bart_encoder_layer.11} parent=0 // pred_fallthru
    _
  // Predicated region
  $region14: #{bb_bart_encoder_layer.11} parent=0 // pred_check
    _
  $region15: #{bb_bart_encoder_layer.11} parent=0 // pred_check_branch
    %18 = sbr.rel (0) target = $region17
  $region16: #{bb_bart_encoder_layer.11} parent=0 // pred_region
    _
  $region17: #{bb_bart_encoder_layer.11} parent=0 // pred_fallthru
    _
  // Predicated region
  $region18: #{bb_bart_encoder_layer.11} parent=0 // pred_check
    _
  $region19: #{bb_bart_encoder_layer.11} parent=0 // pred_check_branch
    %20 = sbr.rel (0) target = $region21
  $region20: #{bb_bart_encoder_layer.11} parent=0 // pred_region
    _
  $region21: #{bb_bart_encoder_layer.11} parent=0 // pred_fallthru
    _
  // Predicated region
  $region22: #{bb_bart_encoder_layer.11} parent=0 // pred_check
    _
  $region23: #{bb_bart_encoder_layer.11} parent=0 // pred_check_branch
    %22 = sbr.rel (0) target = $region25
  $region24: #{bb_bart_encoder_layer.11} parent=0 // pred_region
    _
  $region25: #{bb_bart_encoder_layer.11} parent=0 // pred_fallthru
    _
  %p24 = scmp.eq.s32.totalorder 0, 0
  // Predicated region
  $region26: #{bb_bart_encoder_layer.11} parent=0 // pred_check
    %p25 = pneg %p24
  $region27: #{bb_bart_encoder_layer.11} parent=0 // pred_check_branch
    %27 = sbr.rel (%p25) target = $region29
  $region28: #{bb_bart_encoder_layer.11} parent=0 // pred_region
    %vm28 = vcmask 261120
    %29 = vst.msk [vmem:[#allocation2] sm:$0xff] %vm28, 0.0
    %30 = vst.msk [vmem:[#allocation2 + $0x8] sm:$0xff] %vm28, 0.0
  $region29: #{bb_bart_encoder_layer.11} parent=0 // pred_fallthru
    _
  %v31 = vld [vmem:[#allocation2] sm:$0xff]
  %v32 = vld [vmem:[#allocation2 + $0x8] sm:$0xff]
  %v33 = vld [vmem:[%s0] sm:$0xf]
  %v34 = vld [vmem:[%s0 + $0x4] sm:$0xf]
  %v35 = vld [vmem:[%s1] sm:$0xff]
  %v36 = vld [vmem:[%s1 + $0x8] sm:$0xff]
  %v37 = vld [vmem:[%s1 + $0x10] sm:$0xff]
  %v38 = vld [vmem:[%s1 + $0x18] sm:$0xff]
  %v39 = vpack.c.bf16 %v36, %v35
  %v40 = vpack.c.bf16 %v38, %v37
  %v43 = vunpack.c.l.b16 %v33
  %v44 = vunpack.c.l.b16 %v34
  %v45 = vpack.c.b16 %v44, %v43
  %vm46 = vcmask 261120
  %v48 = vsel %vm46, %v45, 0
  %50 = vmatprep.subr.bf16.mxu0 0
  %51 = vmatpush1.bf16.msra.mxu0 %v39
  %52 = vmatprep.subr.bf16.mxu0 0
  %53 = vmatpush1.bf16.msra.mxu0 %v40
  %54 = vmatprep.subr.bf16.mxu0 0
  %55 = vmatpush1.bf16.msra.mxu0 0
  %56 = vmatprep.subr.bf16.mxu0 0
  %57 = vmatpush1.bf16.msra.mxu0 0
  %58 = vmatprep.subr.bf16.mxu0 0
  %59 = vmatpush1.bf16.msra.mxu0 0
  %60 = vmatprep.subr.bf16.mxu0 0
  %61 = vmatpush1.bf16.msra.mxu0 0
  %62 = vmatprep.subr.bf16.mxu0 0
  %63 = vmatpush1.bf16.msra.mxu0 0
  %64 = vmatprep.subr.bf16.mxu0 0
  %65 = vmatpush1.bf16.msra.mxu0 0
  %66 = vmatprep.subr.bf16.mxu0 0
  %67 = vmatpush1.bf16.msra.mxu0 0
  %68 = vmatprep.subr.bf16.mxu0 0
  %69 = vmatpush1.bf16.msra.mxu0 0
  %70 = vmatprep.subr.bf16.mxu0 0
  %71 = vmatpush1.bf16.msra.mxu0 0
  %72 = vmatprep.subr.bf16.mxu0 0
  %73 = vmatpush1.bf16.msra.mxu0 0
  %74 = vmatprep.subr.bf16.mxu0 0
  %75 = vmatpush1.bf16.msra.mxu0 0
  %76 = vmatprep.subr.bf16.mxu0 0
  %77 = vmatpush1.bf16.msra.mxu0 0
  %78 = vmatprep.subr.bf16.mxu0 0
  %79 = vmatpush1.bf16.msra.mxu0 0
  %80 = vmatprep.subr.bf16.mxu0 0
  %81 = vmatpush1.bf16.msra.mxu0 0
  %82 = vmatprep.mubr.bf16.mxu0 0
  %83 = vmatmul.mubr.bf16.gmra.mrb[0].mxu0 %v48
  %v84 = vpop.f32.mrb[0].mxu0
  %v85 = vadd.f32 0.0, %v84
  %v86 = vpop.f32.mrb[0].mxu0
  %v87 = vpop.f32.mrb[0].mxu0
  %v88 = vadd.f32 0.0, %v87
  %v89 = vpop.f32.mrb[0].mxu0
  %90 = vdwg.mxu0
  %v91 = vadd.f32 %v31, %v85
  %v92 = vadd.f32 %v32, %v88
  %93 = vst.msk [vmem:[#allocation2] sm:$0xff] %vm46, %v91
  %94 = vst.msk [vmem:[#allocation2 + $0x8] sm:$0xff] %vm46, %v92
  // Predicated region
  $region30: #{bb_bart_encoder_layer.11} parent=0 // pred_check
    %p95 = pneg %p24
  $region31: #{bb_bart_encoder_layer.11} parent=0 // pred_check_branch
    %97 = sbr.rel (%p95) target = $region33
  $region32: #{bb_bart_encoder_layer.11} parent=0 // pred_region
    %v98 = vld [vmem:[#allocation2] sm:$0xff]
    %v99 = vld [vmem:[#allocation2 + $0x8] sm:$0xff]
    %v100 = vld [vmem:[%s2] sm:$0x1]
    %v102 = vlaneseq
    %v103 = vshrl.u32 %v102, 7
    %v104 = vsub.s32 0, %v103
    %v105 = vrot.slane %v100, %v104
    %v107 = vadd.f32 %v98, %v105
    %v108 = vadd.f32 %v99, %v105
    %v109 = vld [vmem:[%s3] sm:$0xff]
    %v110 = vld [vmem:[%s3 + $0x8] sm:$0xff]
    %v111 = vadd.f32 %v107, %v109
    %v112 = vadd.f32 %v108, %v110
    %v113 = vsel %vm46, %v111, 0.0
    %114 = vadd.xlane.f32.xlu0 %v113
    %v115 = vpop.xlane.xlu0 %114
    %v116 = vsel %vm46, %v112, 0.0
    %117 = vadd.xlane.f32.xlu0 %v116
    %v118 = vpop.xlane.xlu0 %117
    %v119 = vrcp.pop 32.0
    %v120 = vmul.f32 %v115, %v119
    %v121 = vmul.f32 %v118, %v119
    %v122 = vsub.f32 %v111, %v120
    %v123 = vsub.f32 %v112, %v121
    %v124 = vmul.f32 %v122, %v122
    %v125 = vmul.f32 %v123, %v123
    %v126 = vsel %vm46, %v124, 0.0
    %127 = vadd.xlane.f32.xlu0 %v126
    %v128 = vpop.xlane.xlu0 %127
    %v129 = vsel %vm46, %v125, 0.0
    %130 = vadd.xlane.f32.xlu0 %v129
    %v131 = vpop.xlane.xlu0 %130
    %v132 = vmul.f32 %v128, %v119
    %v133 = vmul.f32 %v131, %v119
    %v134 = vadd.f32 %v132, 1e-05
    %v135 = vadd.f32 %v133, 1e-05
    %v136 = vrsqrt.pop %v134
    %v137 = vrsqrt.pop %v135
    %v138 = vmul.f32 %v122, %v136
    %v139 = vmul.f32 %v123, %v137
    %v140 = vld [vmem:[%s4] sm:$0x1]
    %v142 = vlaneseq
    %v143 = vshrl.u32 %v142, 7
    %v144 = vsub.s32 0, %v143
    %v145 = vrot.slane %v140, %v144
    %v147 = vmul.f32 %v138, %v145
    %v148 = vmul.f32 %v139, %v145
    %v149 = vld [vmem:[%s5] sm:$0x1]
    %v151 = vlaneseq
    %v152 = vshrl.u32 %v151, 7
    %v153 = vsub.s32 0, %v152
    %v154 = vrot.slane %v149, %v153
    %v156 = vadd.f32 %v147, %v154
    %v157 = vadd.f32 %v148, %v154
    %158 = vst.msk [vmem:[%s6] sm:$0xff] %vm46, %v156
    %159 = vst.msk [vmem:[%s6 + $0x8] sm:$0xff] %vm46, %v157
  $region33: #{bb_bart_encoder_layer.11} parent=0 // pred_fallthru
    _
  // Predicated region
  $region34: #{bb_bart_encoder_layer.11} parent=0 // pred_check
    _
  $region35: #{bb_bart_encoder_layer.11} parent=0 // pred_check_branch
    %161 = sbr.rel (0) target = $region37
  $region36: #{bb_bart_encoder_layer.11} parent=0 // pred_region
    _
  $region37: #{bb_bart_encoder_layer.11} parent=0 // pred_fallthru
    _
  // Predicated region
  $region38: #{bb_bart_encoder_layer.11} parent=0 // pred_check
    _
  $region39: #{bb_bart_encoder_layer.11} parent=0 // pred_check_branch
    %163 = sbr.rel (0) target = $region41
  $region40: #{bb_bart_encoder_layer.11} parent=0 // pred_region
    _
  $region41: #{bb_bart_encoder_layer.11} parent=0 // pred_fallthru
    _

// kernel: bb_bart_encoder_layer.10
$region0: #{bb_bart_encoder_layer.10}
  #allocation0 [shape = 'u32[]', space=smem, size = 0x4, offset = 0x4, fixed_abs, tag = 'smem constant byte address 0x4 - core index']
  #allocation1 [shape = 'u32[144,128]{1,0:T(1,128)}', space=vmem, size = 0x12000, scoped, tag = 'internal scratch']
  #allocation2 [shape = 'f32[4,8,1]{2,1,0:T(8,128)}', space=vmem, size = 0x4000, scoped, tag = 'scratch operand']
  #allocation3 [shape = 'f32[4,8,1]{2,1,0:T(8,128)}', space=vmem, size = 0x4000, scoped, tag = 'scratch operand']
  #allocation4 [shape = 'f32[4,8,8]{2,1,0:T(8,128)}', space=vmem, size = 0x4000, scoped, tag = 'scratch operand']
  %s0 = inlined_call_operand.vmem [shape: bf16[2,8,96], index: 0, kind: input, shape index: {}, may-alias: {0,1}]
  %s1 = inlined_call_operand.vmem [shape: bf16[2,8,96], index: 1, kind: input, shape index: {}, may-alias: {0,1}]
  %s2 = inlined_call_operand.vmem [shape: f32[2,8,8], index: 2, kind: input, shape index: {}]
  %s3 = inlined_call_operand.vmem [shape: f32[1,1,32], index: 3, kind: input, shape index: {}]
  %s4 = inlined_call_operand.vmem [shape: bf16[2,8,32], index: 4, kind: output, shape index: {}]
  %s5 = sld [smem:[#allocation0]]
  $region57: #{bb_bart_encoder_layer.10} parent=0
    _
  %s7 = ssub.s32 1, %s5
  %s8 = scalar_select 0, %s7, %s5
  loop: start=0, step=1, limit=4
  $region2: #{bb_bart_encoder_layer.10} parent=0 // loop_pre_header
    _
  $region3: #{bb_bart_encoder_layer.10} parent=0 // loop_header
    %s10 = sphi 0, %s14
    %p11 = scmp.ge.s32.totalorder %s10, 4
    %s17 = sphi 0, %s43
    %s18 = sphi 0, %s39
    %s19 = sphi 0, %s35
    %s20 = sphi 0, %s31
    %s21 = sphi 0, %s17
    %s22 = sphi 0, %s18
    %s23 = sphi 0, %s19
    %s24 = sphi 0, %s20
    %s25 = sphi 0, %s21
    %s26 = sphi 0, %s22
    %s27 = sphi 0, %s23
    %s28 = sphi 0, %s24
    %s48 = sphi 0, %s50
    %s51 = sphi 0, %s48
    %s52 = sphi 0, %s51
    %s68 = sphi 0, %s52
    %s76 = sphi 0, %s78
    %s79 = sphi 0, %s76
    %s80 = sphi 0, %s79
    %s96 = sphi 0, %s80
    %s106 = sphi 0, %s108
    %s109 = sphi 0, %s106
    %s110 = sphi 0, %s109
    %s126 = sphi 0, %s110
    %s132 = sphi 0, %s134
    %s135 = sphi 0, %s132
    %s136 = sphi 0, %s135
    %s152 = sphi 0, %s136
    %s160 = sphi 0, %s162
    %s163 = sphi 0, %s160
    %s164 = sphi 0, %s163
    %s180 = sphi 0, %s164
  $region4: #{bb_bart_encoder_layer.10} parent=0 // loop_header_branch
    %13 = sbr.rel (%p11) target = $region8
  $region5: #{bb_bart_encoder_layer.10} parent=0 // loop_body
    %s15 = ssub.s32 %s10, 1
    %s16 = ssub.s32 %s10, 2
    %s29 = sadd.s32 1, %s20
    %p30 = scmp.ge.s32.totalorder %s29, 1
    %s31 = scalar_select %p30, 0, %s29
    %s32 = sadd.s32 1, %s19
    %s33 = scalar_select %p30, %s32, %s19
    %p34 = scmp.ge.s32.totalorder %s33, 1
    %s35 = scalar_select %p34, 0, %s33
    %s36 = sadd.s32 1, %s18
    %s37 = scalar_select %p34, %s36, %s18
    %p38 = scmp.ge.s32.totalorder %s37, 1
    %s39 = scalar_select %p38, 0, %s37
    %s40 = sadd.s32 1, %s17
    %s41 = scalar_select %p38, %s40, %s17
    %p42 = scmp.ge.s32.totalorder %s41, 2
    %s43 = scalar_select %p42, 0, %s41
    %s44 = ssub.s32 %s17, %s43
    %s45 = ssub.s32 %s19, %s35
    %s46 = sor.u32 %s44, %s45
    %p47 = scmp.eq.s32.totalorder %s46, 0
    %s49 = sadd.s32 %s48, 1
    %s50 = scalar_select %p47, %s48, %s49
    %p53 = pneg %p47
    %p54 = scmp.eq.s32.totalorder %s10, 1
    %p55 = por %p53, %p54
    %p56 = scmp.ne.s32.totalorder %s48, %s51
    %p57 = scmp.eq.s32.totalorder %s10, 0
    %p58 = por %p56, %p57
    %p59 = scmp.ne.s32.totalorder %s48, %s51
    %p60 = scmp.eq.s32.totalorder %s15, 1
    %p61 = por %p59, %p60
    %p62 = scmp.ne.s32.totalorder %s51, %s52
    %p63 = scmp.eq.s32.totalorder %s15, 0
    %p64 = por %p62, %p63
    %p65 = scmp.ne.s32.totalorder %s51, %s52
    %p66 = scmp.eq.s32.totalorder %s16, 1
    %p67 = por %p65, %p66
    %p69 = scmp.ne.s32.totalorder %s52, %s68
    %p70 = scmp.eq.s32.totalorder %s16, 0
    %p71 = por %p69, %p70
    %s72 = ssub.s32 %s17, %s43
    %s73 = ssub.s32 %s20, %s31
    %s74 = sor.u32 %s72, %s73
    %p75 = scmp.eq.s32.totalorder %s74, 0
    %s77 = sadd.s32 %s76, 1
    %s78 = scalar_select %p75, %s76, %s77
    %p81 = pneg %p75
    %p82 = scmp.eq.s32.totalorder %s10, 1
    %p83 = por %p81, %p82
    %p84 = scmp.ne.s32.totalorder %s76, %s79
    %p85 = scmp.eq.s32.totalorder %s10, 0
    %p86 = por %p84, %p85
    %p87 = scmp.ne.s32.totalorder %s76, %s79
    %p88 = scmp.eq.s32.totalorder %s15, 1
    %p89 = por %p87, %p88
    %p90 = scmp.ne.s32.totalorder %s79, %s80
    %p91 = scmp.eq.s32.totalorder %s15, 0
    %p92 = por %p90, %p91
    %p93 = scmp.ne.s32.totalorder %s79, %s80
    %p94 = scmp.eq.s32.totalorder %s16, 1
    %p95 = por %p93, %p94
    %p97 = scmp.ne.s32.totalorder %s80, %s96
    %p98 = scmp.eq.s32.totalorder %s16, 0
    %p99 = por %p97, %p98
    %s100 = ssub.s32 %s17, %s43
    %s101 = ssub.s32 %s19, %s35
    %s102 = sor.u32 %s100, %s101
    %s103 = ssub.s32 %s20, %s31
    %s104 = sor.u32 %s102, %s103
    %p105 = scmp.eq.s32.totalorder %s104, 0
    %s107 = sadd.s32 %s106, 1
    %s108 = scalar_select %p105, %s106, %s107
    %p111 = pneg %p105
    %p112 = scmp.eq.s32.totalorder %s10, 1
    %p113 = por %p111, %p112
    %p114 = scmp.ne.s32.totalorder %s106, %s109
    %p115 = scmp.eq.s32.totalorder %s10, 0
    %p116 = por %p114, %p115
    %p117 = scmp.ne.s32.totalorder %s106, %s109
    %p118 = scmp.eq.s32.totalorder %s15, 1
    %p119 = por %p117, %p118
    %p120 = scmp.ne.s32.totalorder %s109, %s110
    %p121 = scmp.eq.s32.totalorder %s15, 0
    %p122 = por %p120, %p121
    %p123 = scmp.ne.s32.totalorder %s109, %s110
    %p124 = scmp.eq.s32.totalorder %s16, 1
    %p125 = por %p123, %p124
    %p127 = scmp.ne.s32.totalorder %s110, %s126
    %p128 = scmp.eq.s32.totalorder %s16, 0
    %p129 = por %p127, %p128
    %s130 = ssub.s32 %s18, %s39
    %p131 = scmp.eq.s32.totalorder %s130, 0
    %s133 = sadd.s32 %s132, 1
    %s134 = scalar_select %p131, %s132, %s133
    %p137 = pneg %p131
    %p138 = scmp.eq.s32.totalorder %s10, 1
    %p139 = por %p137, %p138
    %p140 = scmp.ne.s32.totalorder %s132, %s135
    %p141 = scmp.eq.s32.totalorder %s10, 0
    %p142 = por %p140, %p141
    %p143 = scmp.ne.s32.totalorder %s132, %s135
    %p144 = scmp.eq.s32.totalorder %s15, 1
    %p145 = por %p143, %p144
    %p146 = scmp.ne.s32.totalorder %s135, %s136
    %p147 = scmp.eq.s32.totalorder %s15, 0
    %p148 = por %p146, %p147
    %p149 = scmp.ne.s32.totalorder %s135, %s136
    %p150 = scmp.eq.s32.totalorder %s16, 1
    %p151 = por %p149, %p150
    %p153 = scmp.ne.s32.totalorder %s136, %s152
    %p154 = scmp.eq.s32.totalorder %s16, 0
    %p155 = por %p153, %p154
    %s156 = ssub.s32 %s17, %s43
    %s157 = ssub.s32 %s19, %s35
    %s158 = sor.u32 %s156, %s157
    %p159 = scmp.eq.s32.totalorder %s158, 0
    %s161 = sadd.s32 %s160, 1
    %s162 = scalar_select %p159, %s160, %s161
    %p165 = pneg %p159
    %p166 = scmp.eq.s32.totalorder %s10, 1
    %p167 = por %p165, %p166
    %p168 = scmp.ne.s32.totalorder %s160, %s163
    %p169 = scmp.eq.s32.totalorder %s10, 0
    %p170 = por %p168, %p169
    %p171 = scmp.ne.s32.totalorder %s160, %s163
    %p172 = scmp.eq.s32.totalorder %s15, 1
    %p173 = por %p171, %p172
    %p174 = scmp.ne.s32.totalorder %s163, %s164
    %p175 = scmp.eq.s32.totalorder %s15, 0
    %p176 = por %p174, %p175
    %p177 = scmp.ne.s32.totalorder %s163, %s164
    %p178 = scmp.eq.s32.totalorder %s16, 1
    %p179 = por %p177, %p178
    %p181 = scmp.ne.s32.totalorder %s164, %s180
    %p182 = scmp.eq.s32.totalorder %s16, 0
    %p183 = por %p181, %p182
    %p184 = scmp.le.s32.totalorder 1, %s10
    %p185 = scmp.lt.s32.totalorder %s10, 3
    %p186 = pnand %p184, %p185
    %p187 = pneg %p186
    // Predicated region
    $region9: #{bb_bart_encoder_layer.10} parent=5 // pred_check
      _
    $region10: #{bb_bart_encoder_layer.10} parent=5 // pred_check_branch
      %189 = sbr.rel (%p186) target = $region12
    $region11: #{bb_bart_encoder_layer.10} parent=5 // pred_region
      %s190 = ssub.s32 %s10, 1
      // Predicated region
      $region13: #{bb_bart_encoder_layer.10} parent=11 // pred_check
        %p191 = pneg %p148
      $region14: #{bb_bart_encoder_layer.10} parent=11 // pred_check_branch
        %193 = sbr.rel (%p191) target = $region16
      $region15: #{bb_bart_encoder_layer.10} parent=11 // pred_region
        %p194 = scmp.lt.s32.totalorder %s22, 0
        %s195 = scalar_select %p194, %s22, 0
        %s196 = scalar_lea.vmem %s3, %s195
      $region16: #{bb_bart_encoder_layer.10} parent=11 // pred_fallthru
        _
    $region12: #{bb_bart_encoder_layer.10} parent=5 // pred_fallthru
      _
    %p197 = scmp.lt.s32.totalorder %s10, 2
    // Predicated region
    $region17: #{bb_bart_encoder_layer.10} parent=5 // pred_check
      %p198 = pneg %p197
    $region18: #{bb_bart_encoder_layer.10} parent=5 // pred_check_branch
      %200 = sbr.rel (%p198) target = $region20
    $region19: #{bb_bart_encoder_layer.10} parent=5 // pred_region
      // Predicated region
      $region21: #{bb_bart_encoder_layer.10} parent=19 // pred_check
        %p201 = pneg %p58
      $region22: #{bb_bart_encoder_layer.10} parent=19 // pred_check_branch
        %203 = sbr.rel (%p201) target = $region24
      $region23: #{bb_bart_encoder_layer.10} parent=19 // pred_region
        %p204 = scmp.lt.s32.totalorder %s17, 1
        %s205 = scalar_select %p204, %s17, 1
        %p206 = scmp.lt.s32.totalorder %s19, 0
        %s207 = scalar_select %p206, %s19, 0
        %s208 = sadd.s32 %s207, %s205
        %s209 = smul.addr %s208, 4
        %s210 = scalar_lea.vmem %s0, %s209
      $region24: #{bb_bart_encoder_layer.10} parent=19 // pred_fallthru
        _
      // Predicated region
      $region25: #{bb_bart_encoder_layer.10} parent=19 // pred_check
        %p211 = pneg %p86
      $region26: #{bb_bart_encoder_layer.10} parent=19 // pred_check_branch
        %213 = sbr.rel (%p211) target = $region28
      $region27: #{bb_bart_encoder_layer.10} parent=19 // pred_region
        %p214 = scmp.lt.s32.totalorder %s17, 1
        %s215 = scalar_select %p214, %s17, 1
        %p216 = scmp.lt.s32.totalorder %s20, 0
        %s217 = scalar_select %p216, %s20, 0
        %s218 = sadd.s32 %s217, %s215
        %s219 = smul.addr %s218, 4
        %s220 = scalar_lea.vmem %s1, %s219
      $region28: #{bb_bart_encoder_layer.10} parent=19 // pred_fallthru
        _
      // Predicated region
      $region29: #{bb_bart_encoder_layer.10} parent=19 // pred_check
        %p221 = pneg %p116
      $region30: #{bb_bart_encoder_layer.10} parent=19 // pred_check_branch
        %223 = sbr.rel (%p221) target = $region32
      $region31: #{bb_bart_encoder_layer.10} parent=19 // pred_region
        %p224 = scmp.lt.s32.totalorder %s17, 1
        %s225 = scalar_select %p224, %s17, 1
        %p226 = scmp.lt.s32.totalorder %s19, 0
        %s227 = scalar_select %p226, %s19, 0
        %p228 = scmp.lt.s32.totalorder %s20, 0
        %s229 = scalar_select %p228, %s20, 0
        %s230 = sadd.s32 %s229, %s227
        %s231 = sadd.s32 %s230, %s225
        %s232 = smul.addr %s231, 8
        %s233 = scalar_lea.vmem %s2, %s232
      $region32: #{bb_bart_encoder_layer.10} parent=19 // pred_fallthru
        _
    $region20: #{bb_bart_encoder_layer.10} parent=5 // pred_fallthru
      _
    %p234 = scmp.le.s32.totalorder 1, %s10
    %p235 = scmp.lt.s32.totalorder %s10, 3
    %p236 = pnand %p234, %p235
    %p237 = pneg %p236
    // Predicated region
    $region33: #{bb_bart_encoder_layer.10} parent=5 // pred_check
      _
    $region34: #{bb_bart_encoder_layer.10} parent=5 // pred_check_branch
      %239 = sbr.rel (%p236) target = $region36
    $region35: #{bb_bart_encoder_layer.10} parent=5 // pred_region
      %s240 = ssub.s32 %s10, 1
      %p241 = scmp.lt.s32.totalorder %s21, 1
      %s242 = scalar_select %p241, %s21, 1
      %p243 = scmp.lt.s32.totalorder %s23, 0
      %s244 = scalar_select %p243, %s23, 0
      %s245 = sadd.s32 %s244, %s242
      %s246 = smul.addr %s245, 4
      %s247 = scalar_lea.vmem %s0, %s246
      %p248 = pneg %p64
      %p249 = pneg %p61
      %p250 = scmp.lt.s32.totalorder %s21, 1
      %s251 = scalar_select %p250, %s21, 1
      %p252 = scmp.lt.s32.totalorder %s24, 0
      %s253 = scalar_select %p252, %s24, 0
      %s254 = sadd.s32 %s253, %s251
      %s255 = smul.addr %s254, 4
      %s256 = scalar_lea.vmem %s1, %s255
      %p257 = pneg %p92
      %p258 = pneg %p89
      %p259 = scmp.lt.s32.totalorder %s21, 1
      %s260 = scalar_select %p259, %s21, 1
      %p261 = scmp.lt.s32.totalorder %s23, 0
      %s262 = scalar_select %p261, %s23, 0
      %p263 = scmp.lt.s32.totalorder %s24, 0
      %s264 = scalar_select %p263, %s24, 0
      %s265 = sadd.s32 %s264, %s262
      %s266 = sadd.s32 %s265, %s260
      %s267 = smul.addr %s266, 8
      %s268 = scalar_lea.vmem %s2, %s267
      %p269 = pneg %p122
      %p270 = pneg %p119
      %p271 = scmp.lt.s32.totalorder %s22, 0
      %s272 = scalar_select %p271, %s22, 0
      %s273 = scalar_lea.vmem %s3, %s272
      %p274 = pneg %p148
      %p275 = pneg %p145
      %p276 = pneg %p176
      %p277 = pneg %p173
      %p278 = scmp.lt.s32.totalorder %s21, 1
      %s279 = scalar_select %p278, %s21, 1
      %p280 = scmp.lt.s32.totalorder %s23, 0
      %s281 = scalar_select %p280, %s23, 0
      %s282 = sadd.s32 %s281, %s279
      %s283 = smul.addr %s282, 4
      %s284 = scalar_lea.vmem %s4, %s283
      %p285 = scmp.lt.s32.totalorder %s21, 1
      %s286 = scalar_select %p285, %s21, 1
      %p287 = scmp.lt.s32.totalorder %s23, 0
      %s288 = scalar_select %p287, %s23, 0
      %s289 = sadd.s32 %s288, %s286
      %s290 = smul.addr %s289, 4
      %s291 = scalar_lea.vmem %s0, %s290
      %p292 = scmp.lt.s32.totalorder %s21, 1
      %s293 = scalar_select %p292, %s21, 1
      %p294 = scmp.lt.s32.totalorder %s24, 0
      %s295 = scalar_select %p294, %s24, 0
      %s296 = sadd.s32 %s295, %s293
      %s297 = smul.addr %s296, 4
      %s298 = scalar_lea.vmem %s1, %s297
      %p299 = scmp.lt.s32.totalorder %s21, 1
      %s300 = scalar_select %p299, %s21, 1
      %p301 = scmp.lt.s32.totalorder %s23, 0
      %s302 = scalar_select %p301, %s23, 0
      %p303 = scmp.lt.s32.totalorder %s24, 0
      %s304 = scalar_select %p303, %s24, 0
      %s305 = sadd.s32 %s304, %s302
      %s306 = sadd.s32 %s305, %s300
      %s307 = smul.addr %s306, 8
      %s308 = scalar_lea.vmem %s2, %s307
      %p309 = scmp.lt.s32.totalorder %s22, 0
      %s310 = scalar_select %p309, %s22, 0
      %s311 = scalar_lea.vmem %s3, %s310
      %p312 = scmp.lt.s32.totalorder %s21, 1
      %s313 = scalar_select %p312, %s21, 1
      %p314 = scmp.lt.s32.totalorder %s23, 0
      %s315 = scalar_select %p314, %s23, 0
      %s316 = sadd.s32 %s315, %s313
      %s317 = smul.addr %s316, 4
      %s318 = scalar_lea.vmem %s4, %s317
      %p320 = scmp.eq.s32.totalorder %s24, 0
      // Predicated region
      $region37: #{bb_bart_encoder_layer.10} parent=35 // pred_check
        %p321 = pneg %p320
      $region38: #{bb_bart_encoder_layer.10} parent=35 // pred_check_branch
        %323 = sbr.rel (%p321) target = $region40
      $region39: #{bb_bart_encoder_layer.10} parent=35 // pred_region
        %vm324 = vcmask 7168
        %325 = vst.msk [vmem:[#allocation2] sm:$0xff] %vm324, -inf
        %326 = vst.msk [vmem:[#allocation2 + $0x8] sm:$0xff] %vm324, -inf
        %327 = vst.msk [vmem:[#allocation2 + $0x10] sm:$0xff] %vm324, -inf
        %328 = vst.msk [vmem:[#allocation2 + $0x18] sm:$0xff] %vm324, -inf
        %329 = vst.msk [vmem:[#allocation3] sm:$0xff] %vm324, 0.0
        %330 = vst.msk [vmem:[#allocation3 + $0x8] sm:$0xff] %vm324, 0.0
        %331 = vst.msk [vmem:[#allocation3 + $0x10] sm:$0xff] %vm324, 0.0
        %332 = vst.msk [vmem:[#allocation3 + $0x18] sm:$0xff] %vm324, 0.0
        %vm333 = vcmask 64512
        %334 = vst.msk [vmem:[#allocation4] sm:$0xff] %vm333, 0.0
        %335 = vst.msk [vmem:[#allocation4 + $0x8] sm:$0xff] %vm333, 0.0
        %336 = vst.msk [vmem:[#allocation4 + $0x10] sm:$0xff] %vm333, 0.0
        %337 = vst.msk [vmem:[#allocation4 + $0x18] sm:$0xff] %vm333, 0.0
      $region40: #{bb_bart_encoder_layer.10} parent=35 // pred_fallthru
        _
      %v338 = vld [vmem:[%s291] sm:$0xf]
      %v339 = vld [vmem:[%s298] sm:$0xf]
      %v340 = vld [vmem:[%s308] sm:$0xff]
      %v342 = vunpack.c.l.b16 %v339
      %v343 = vpack.c.b16 %v342, %v342
      %344 = vrot.lane.b32.xlu0 %v343, 96
      %v345 = vpop.permute.xlu0 %344
      %vm346 = vcmask 64512
      %v348 = vsel %vm346, %v338, 0
      %v351 = vsel %vm346, %v345, 0
      %353 = vmatprep.subr.bf16.mxu0 0
      %354 = vmatpush1.bf16.xpose.msra.mxu0 %v351
      %355 = vmatprep.subr.bf16.mxu0 0
      %356 = vmatpush1.bf16.xpose.msra.mxu0 0
      %357 = vmatprep.subr.bf16.mxu0 0
      %358 = vmatpush1.bf16.xpose.msra.mxu0 0
      %359 = vmatprep.subr.bf16.mxu0 0
      %360 = vmatpush1.bf16.xpose.msra.mxu0 0
      %361 = vmatprep.subr.bf16.mxu0 0
      %362 = vmatpush1.bf16.xpose.msra.mxu0 0
      %363 = vmatprep.subr.bf16.mxu0 0
      %364 = vmatpush1.bf16.xpose.msra.mxu0 0
      %365 = vmatprep.subr.bf16.mxu0 0
      %366 = vmatpush1.bf16.xpose.msra.mxu0 0
      %367 = vmatprep.subr.bf16.mxu0 0
      %368 = vmatpush1.bf16.xpose.msra.mxu0 0
      %369 = vmatprep.subr.bf16.mxu0 0
      %370 = vmatpush1.bf16.xpose.msra.mxu0 0
      %371 = vmatprep.subr.bf16.mxu0 0
      %372 = vmatpush1.bf16.xpose.msra.mxu0 0
      %373 = vmatprep.subr.bf16.mxu0 0
      %374 = vmatpush1.bf16.xpose.msra.mxu0 0
      %375 = vmatprep.subr.bf16.mxu0 0
      %376 = vmatpush1.bf16.xpose.msra.mxu0 0
      %377 = vmatprep.subr.bf16.mxu0 0
      %378 = vmatpush1.bf16.xpose.msra.mxu0 0
      %379 = vmatprep.subr.bf16.mxu0 0
      %380 = vmatpush1.bf16.xpose.msra.mxu0 0
      %381 = vmatprep.subr.bf16.mxu0 0
      %382 = vmatpush1.bf16.xpose.msra.mxu0 0
      %383 = vmatprep.subr.bf16.mxu0 0
      %384 = vmatpush1.bf16.xpose.msra.mxu0 0
      %385 = vmatprep.mubr.bf16.mxu0 0
      %386 = vmatmul.mubr.bf16.gmra.mrb[0].mxu0 %v348
      %v387 = vpop.f32.mrb[0].mxu0
      %v388 = vadd.f32 %v340, %v387
      %v389 = vpop.f32.mrb[0].mxu0
      %v390 = vpop.f32.mrb[0].mxu0
      %v391 = vpop.f32.mrb[0].mxu0
      %392 = vdwg.mxu0
      %v393 = vld [vmem:[#allocation2] sm:$0xff]
      %v394 = vsel %vm346, %v388, -inf
      %395 = vmax.xlane.f32.xlu0 %v394
      %v396 = vpop.xlane.xlu0 %395
      %v397 = vmax.f32 %v393, %v396
      %v398 = vsub.f32 %v393, %v397
      %v399 = vmul.f32 %v398, 1.442695
      %v400 = vpow.pop %v399
      %402 = vset.pattern.permute.xlu0 0
      %403 = vperm.xlu0 %402, %v397
      %v404 = vpop.permute.xlu0 %403
      %v406 = vsub.f32 %v388, %v404
      %v407 = vmul.f32 %v406, 1.442695
      %v408 = vpow.pop %v407
      %v409 = vld [vmem:[#allocation3] sm:$0xff]
      %v410 = vmul.f32 %v400, %v409
      %v411 = vsel %vm346, %v408, 0.0
      %412 = vadd.xlane.f32.xlu0 %v411
      %v413 = vpop.xlane.xlu0 %412
      %v414 = vadd.f32 %v410, %v413
      %vm415 = vcmask 7168
      %416 = vst.msk [vmem:[#allocation3] sm:$0xff] %vm415, %v414
      %v417 = vpack.c.bf16 %v408, %v408
      %418 = vrot.lane.b32.xlu0 %v343, 64
      %v419 = vpop.permute.xlu0 %418
      %v421 = vsel %vm346, %v417, 0
      %vm423 = vcmask 1043456
      %v425 = vsel %vm423, %v419, 0
      %427 = vmatprep.subr.bf16.mxu0 0
      %428 = vmatpush1.bf16.msra.mxu0 %v425
      %429 = vmatprep.subr.bf16.mxu0 0
      %430 = vmatpush1.bf16.msra.mxu0 0
      %431 = vmatprep.subr.bf16.mxu0 0
      %432 = vmatpush1.bf16.msra.mxu0 0
      %433 = vmatprep.subr.bf16.mxu0 0
      %434 = vmatpush1.bf16.msra.mxu0 0
      %435 = vmatprep.subr.bf16.mxu0 0
      %436 = vmatpush1.bf16.msra.mxu0 0
      %437 = vmatprep.subr.bf16.mxu0 0
      %438 = vmatpush1.bf16.msra.mxu0 0
      %439 = vmatprep.subr.bf16.mxu0 0
      %440 = vmatpush1.bf16.msra.mxu0 0
      %441 = vmatprep.subr.bf16.mxu0 0
      %442 = vmatpush1.bf16.msra.mxu0 0
      %443 = vmatprep.subr.bf16.mxu0 0
      %444 = vmatpush1.bf16.msra.mxu0 0
      %445 = vmatprep.subr.bf16.mxu0 0
      %446 = vmatpush1.bf16.msra.mxu0 0
      %447 = vmatprep.subr.bf16.mxu0 0
      %448 = vmatpush1.bf16.msra.mxu0 0
      %449 = vmatprep.subr.bf16.mxu0 0
      %450 = vmatpush1.bf16.msra.mxu0 0
      %451 = vmatprep.subr.bf16.mxu0 0
      %452 = vmatpush1.bf16.msra.mxu0 0
      %453 = vmatprep.subr.bf16.mxu0 0
      %454 = vmatpush1.bf16.msra.mxu0 0
      %455 = vmatprep.subr.bf16.mxu0 0
      %456 = vmatpush1.bf16.msra.mxu0 0
      %457 = vmatprep.subr.bf16.mxu0 0
      %458 = vmatpush1.bf16.msra.mxu0 0
      %459 = vmatprep.mubr.bf16.mxu0 0
      %460 = vmatmul.mubr.bf16.gmra.mrb[0].mxu0 %v421
      %v461 = vpop.f32.mrb[0].mxu0
      %v462 = vadd.f32 0.0, %v461
      %v463 = vpop.f32.mrb[0].mxu0
      %v464 = vpop.f32.mrb[0].mxu0
      %v465 = vpop.f32.mrb[0].mxu0
      %466 = vdwg.mxu0
      %v467 = vld [vmem:[#allocation4] sm:$0xff]
      %469 = vset.pattern.permute.xlu0 0
      %470 = vperm.xlu0 %469, %v400
      %v471 = vpop.permute.xlu0 %470
      %v473 = vmul.f32 %v471, %v467
      %v474 = vadd.f32 %v473, %v462
      %475 = vst.msk [vmem:[#allocation4] sm:$0xff] %vm346, %v474
      %476 = vst.msk [vmem:[#allocation2] sm:$0xff] %vm415, %v397
      %v478 = vunpack.c.l.b16 %v338
      %v479 = vpack.c.b16 %v478, %v478
      %480 = vrot.lane.b32.xlu0 %v479, 120
      %v481 = vpop.permute.xlu0 %480
      %482 = vrot.lane.b32.xlu0 %v343, 88
      %v483 = vpop.permute.xlu0 %482
      %v485 = vsel %vm346, %v481, 0
      %v488 = vsel %vm346, %v483, 0
      %490 = vmatprep.subr.bf16.mxu0 0
      %491 = vmatpush1.bf16.xpose.msra.mxu0 %v488
      %492 = vmatprep.subr.bf16.mxu0 0
      %493 = vmatpush1.bf16.xpose.msra.mxu0 0
      %494 = vmatprep.subr.bf16.mxu0 0
      %495 = vmatpush1.bf16.xpose.msra.mxu0 0
      %496 = vmatprep.subr.bf16.mxu0 0
      %497 = vmatpush1.bf16.xpose.msra.mxu0 0
      %498 = vmatprep.subr.bf16.mxu0 0
      %499 = vmatpush1.bf16.xpose.msra.mxu0 0
      %500 = vmatprep.subr.bf16.mxu0 0
      %501 = vmatpush1.bf16.xpose.msra.mxu0 0
      %502 = vmatprep.subr.bf16.mxu0 0
      %503 = vmatpush1.bf16.xpose.msra.mxu0 0
      %504 = vmatprep.subr.bf16.mxu0 0
      %505 = vmatpush1.bf16.xpose.msra.mxu0 0
      %506 = vmatprep.subr.bf16.mxu0 0
      %507 = vmatpush1.bf16.xpose.msra.mxu0 0
      %508 = vmatprep.subr.bf16.mxu0 0
      %509 = vmatpush1.bf16.xpose.msra.mxu0 0
      %510 = vmatprep.subr.bf16.mxu0 0
      %511 = vmatpush1.bf16.xpose.msra.mxu0 0
      %512 = vmatprep.subr.bf16.mxu0 0
      %513 = vmatpush1.bf16.xpose.msra.mxu0 0
      %514 = vmatprep.subr.bf16.mxu0 0
      %515 = vmatpush1.bf16.xpose.msra.mxu0 0
      %516 = vmatprep.subr.bf16.mxu0 0
      %517 = vmatpush1.bf16.xpose.msra.mxu0 0
      %518 = vmatprep.subr.bf16.mxu0 0
      %519 = vmatpush1.bf16.xpose.msra.mxu0 0
      %520 = vmatprep.subr.bf16.mxu0 0
      %521 = vmatpush1.bf16.xpose.msra.mxu0 0
      %522 = vmatprep.mubr.bf16.mxu0 0
      %523 = vmatmul.mubr.bf16.gmra.mrb[0].mxu0 %v485
      %v524 = vpop.f32.mrb[0].mxu0
      %v525 = vadd.f32 %v340, %v524
      %v526 = vpop.f32.mrb[0].mxu0
      %v527 = vpop.f32.mrb[0].mxu0
      %v528 = vpop.f32.mrb[0].mxu0
      %529 = vdwg.mxu0
      %s530 = scalar_lea.vmem [#allocation2], 8
      %v531 = vld [vmem:[%s530] sm:$0xff]
      %v532 = vsel %vm346, %v525, -inf
      %533 = vmax.xlane.f32.xlu0 %v532
      %v534 = vpop.xlane.xlu0 %533
      %v535 = vmax.f32 %v531, %v534
      %v536 = vsub.f32 %v531, %v535
      %v537 = vmul.f32 %v536, 1.442695
      %v538 = vpow.pop %v537
      %540 = vset.pattern.permute.xlu0 0
      %541 = vperm.xlu0 %540, %v535
      %v542 = vpop.permute.xlu0 %541
      %v544 = vsub.f32 %v525, %v542
      %v545 = vmul.f32 %v544, 1.442695
      %v546 = vpow.pop %v545
      %s547 = scalar_lea.vmem [#allocation3], 8
      %v548 = vld [vmem:[%s547] sm:$0xff]
      %v549 = vmul.f32 %v538, %v548
      %v550 = vsel %vm346, %v546, 0.0
      %551 = vadd.xlane.f32.xlu0 %v550
      %v552 = vpop.xlane.xlu0 %551
      %v553 = vadd.f32 %v549, %v552
      %554 = vst.msk [vmem:[%s547] sm:$0xff] %vm415, %v553
      %v555 = vpack.c.bf16 %v546, %v546
      %556 = vrot.lane.b32.xlu0 %v343, 56
      %v557 = vpop.permute.xlu0 %556
      %v559 = vsel %vm346, %v555, 0
      %v562 = vsel %vm423, %v557, 0
      %564 = vmatprep.subr.bf16.mxu0 0
      %565 = vmatpush1.bf16.msra.mxu0 %v562
      %566 = vmatprep.subr.bf16.mxu0 0
      %567 = vmatpush1.bf16.msra.mxu0 0
      %568 = vmatprep.subr.bf16.mxu0 0
      %569 = vmatpush1.bf16.msra.mxu0 0
      %570 = vmatprep.subr.bf16.mxu0 0
      %571 = vmatpush1.bf16.msra.mxu0 0
      %572 = vmatprep.subr.bf16.mxu0 0
      %573 = vmatpush1.bf16.msra.mxu0 0
      %574 = vmatprep.subr.bf16.mxu0 0
      %575 = vmatpush1.bf16.msra.mxu0 0
      %576 = vmatprep.subr.bf16.mxu0 0
      %577 = vmatpush1.bf16.msra.mxu0 0
      %578 = vmatprep.subr.bf16.mxu0 0
      %579 = vmatpush1.bf16.msra.mxu0 0
      %580 = vmatprep.subr.bf16.mxu0 0
      %581 = vmatpush1.bf16.msra.mxu0 0
      %582 = vmatprep.subr.bf16.mxu0 0
      %583 = vmatpush1.bf16.msra.mxu0 0
      %584 = vmatprep.subr.bf16.mxu0 0
      %585 = vmatpush1.bf16.msra.mxu0 0
      %586 = vmatprep.subr.bf16.mxu0 0
      %587 = vmatpush1.bf16.msra.mxu0 0
      %588 = vmatprep.subr.bf16.mxu0 0
      %589 = vmatpush1.bf16.msra.mxu0 0
      %590 = vmatprep.subr.bf16.mxu0 0
      %591 = vmatpush1.bf16.msra.mxu0 0
      %592 = vmatprep.subr.bf16.mxu0 0
      %593 = vmatpush1.bf16.msra.mxu0 0
      %594 = vmatprep.subr.bf16.mxu0 0
      %595 = vmatpush1.bf16.msra.mxu0 0
      %596 = vmatprep.mubr.bf16.mxu0 0
      %597 = vmatmul.mubr.bf16.gmra.mrb[0].mxu0 %v559
      %v598 = vpop.f32.mrb[0].mxu0
      %v599 = vadd.f32 0.0, %v598
      %v600 = vpop.f32.mrb[0].mxu0
      %v601 = vpop.f32.mrb[0].mxu0
      %v602 = vpop.f32.mrb[0].mxu0
      %603 = vdwg.mxu0
      %s604 = scalar_lea.vmem [#allocation4], 8
      %v605 = vld [vmem:[%s604] sm:$0xff]
      %607 = vset.pattern.permute.xlu0 0
      %608 = vperm.xlu0 %607, %v538
      %v609 = vpop.permute.xlu0 %608
      %v611 = vmul.f32 %v609, %v605
      %v612 = vadd.f32 %v611, %v599
      %613 = vst.msk [vmem:[%s604] sm:$0xff] %vm346, %v612
      %614 = vst.msk [vmem:[%s530] sm:$0xff] %vm415, %v535
      %615 = vrot.lane.b32.xlu0 %v479, 112
      %v616 = vpop.permute.xlu0 %615
      %617 = vrot.lane.b32.xlu0 %v343, 80
      %v618 = vpop.permute.xlu0 %617
      %v620 = vsel %vm346, %v616, 0
      %v623 = vsel %vm346, %v618, 0
      %625 = vmatprep.subr.bf16.mxu0 0
      %626 = vmatpush1.bf16.xpose.msra.mxu0 %v623
      %627 = vmatprep.subr.bf16.mxu0 0
      %628 = vmatpush1.bf16.xpose.msra.mxu0 0
      %629 = vmatprep.subr.bf16.mxu0 0
      %630 = vmatpush1.bf16.xpose.msra.mxu0 0
      %631 = vmatprep.subr.bf16.mxu0 0
      %632 = vmatpush1.bf16.xpose.msra.mxu0 0
      %633 = vmatprep.subr.bf16.mxu0 0
      %634 = vmatpush1.bf16.xpose.msra.mxu0 0
      %635 = vmatprep.subr.bf16.mxu0 0
      %636 = vmatpush1.bf16.xpose.msra.mxu0 0
      %637 = vmatprep.subr.bf16.mxu0 0
      %638 = vmatpush1.bf16.xpose.msra.mxu0 0
      %639 = vmatprep.subr.bf16.mxu0 0
      %640 = vmatpush1.bf16.xpose.msra.mxu0 0
      %641 = vmatprep.subr.bf16.mxu0 0
      %642 = vmatpush1.bf16.xpose.msra.mxu0 0
      %643 = vmatprep.subr.bf16.mxu0 0
      %644 = vmatpush1.bf16.xpose.msra.mxu0 0
      %645 = vmatprep.subr.bf16.mxu0 0
      %646 = vmatpush1.bf16.xpose.msra.mxu0 0
      %647 = vmatprep.subr.bf16.mxu0 0
      %648 = vmatpush1.bf16.xpose.msra.mxu0 0
      %649 = vmatprep.subr.bf16.mxu0 0
      %650 = vmatpush1.bf16.xpose.msra.mxu0 0
      %651 = vmatprep.subr.bf16.mxu0 0
      %652 = vmatpush1.bf16.xpose.msra.mxu0 0
      %653 = vmatprep.subr.bf16.mxu0 0
      %654 = vmatpush1.bf16.xpose.msra.mxu0 0
      %655 = vmatprep.subr.bf16.mxu0 0
      %656 = vmatpush1.bf16.xpose.msra.mxu0 0
      %657 = vmatprep.mubr.bf16.mxu0 0
      %658 = vmatmul.mubr.bf16.gmra.mrb[0].mxu0 %v620
      %v659 = vpop.f32.mrb[0].mxu0
      %v660 = vadd.f32 %v340, %v659
      %v661 = vpop.f32.mrb[0].mxu0
      %v662 = vpop.f32.mrb[0].mxu0
      %v663 = vpop.f32.mrb[0].mxu0
      %664 = vdwg.mxu0
      %s665 = scalar_lea.vmem [#allocation2], 16
      %v666 = vld [vmem:[%s665] sm:$0xff]
      %v667 = vsel %vm346, %v660, -inf
      %668 = vmax.xlane.f32.xlu0 %v667
      %v669 = vpop.xlane.xlu0 %668
      %v670 = vmax.f32 %v666, %v669
      %v671 = vsub.f32 %v666, %v670
      %v672 = vmul.f32 %v671, 1.442695
      %v673 = vpow.pop %v672
      %675 = vset.pattern.permute.xlu0 0
      %676 = vperm.xlu0 %675, %v670
      %v677 = vpop.permute.xlu0 %676
      %v679 = vsub.f32 %v660, %v677
      %v680 = vmul.f32 %v679, 1.442695
      %v681 = vpow.pop %v680
      %s682 = scalar_lea.vmem [#allocation3], 16
      %v683 = vld [vmem:[%s682] sm:$0xff]
      %v684 = vmul.f32 %v673, %v683
      %v685 = vsel %vm346, %v681, 0.0
      %686 = vadd.xlane.f32.xlu0 %v685
      %v687 = vpop.xlane.xlu0 %686
      %v688 = vadd.f32 %v684, %v687
      %689 = vst.msk [vmem:[%s682] sm:$0xff] %vm415, %v688
      %v690 = vpack.c.bf16 %v681, %v681
      %691 = vrot.lane.b32.xlu0 %v343, 48
      %v692 = vpop.permute.xlu0 %691
      %v694 = vsel %vm346, %v690, 0
      %v697 = vsel %vm423, %v692, 0
      %699 = vmatprep.subr.bf16.mxu0 0
      %700 = vmatpush1.bf16.msra.mxu0 %v697
      %701 = vmatprep.subr.bf16.mxu0 0
      %702 = vmatpush1.bf16.msra.mxu0 0
      %703 = vmatprep.subr.bf16.mxu0 0
      %704 = vmatpush1.bf16.msra.mxu0 0
      %705 = vmatprep.subr.bf16.mxu0 0
      %706 = vmatpush1.bf16.msra.mxu0 0
      %707 = vmatprep.subr.bf16.mxu0 0
      %708 = vmatpush1.bf16.msra.mxu0 0
      %709 = vmatprep.subr.bf16.mxu0 0
      %710 = vmatpush1.bf16.msra.mxu0 0
      %711 = vmatprep.subr.bf16.mxu0 0
      %712 = vmatpush1.bf16.msra.mxu0 0
      %713 = vmatprep.subr.bf16.mxu0 0
      %714 = vmatpush1.bf16.msra.mxu0 0
      %715 = vmatprep.subr.bf16.mxu0 0
      %716 = vmatpush1.bf16.msra.mxu0 0
      %717 = vmatprep.subr.bf16.mxu0 0
      %718 = vmatpush1.bf16.msra.mxu0 0
      %719 = vmatprep.subr.bf16.mxu0 0
      %720 = vmatpush1.bf16.msra.mxu0 0
      %721 = vmatprep.subr.bf16.mxu0 0
      %722 = vmatpush1.bf16.msra.mxu0 0
      %723 = vmatprep.subr.bf16.mxu0 0
      %724 = vmatpush1.bf16.msra.mxu0 0
      %725 = vmatprep.subr.bf16.mxu0 0
      %726 = vmatpush1.bf16.msra.mxu0 0
      %727 = vmatprep.subr.bf16.mxu0 0
      %728 = vmatpush1.bf16.msra.mxu0 0
      %729 = vmatprep.subr.bf16.mxu0 0
      %730 = vmatpush1.bf16.msra.mxu0 0
      %731 = vmatprep.mubr.bf16.mxu0 0
      %732 = vmatmul.mubr.bf16.gmra.mrb[0].mxu0 %v694
      %v733 = vpop.f32.mrb[0].mxu0
      %v734 = vadd.f32 0.0, %v733
      %v735 = vpop.f32.mrb[0].mxu0
      %v736 = vpop.f32.mrb[0].mxu0
      %v737 = vpop.f32.mrb[0].mxu0
      %738 = vdwg.mxu0
      %s739 = scalar_lea.vmem [#allocation4], 16
      %v740 = vld [vmem:[%s739] sm:$0xff]
      %742 = vset.pattern.permute.xlu0 0
      %743 = vperm.xlu0 %742, %v673
      %v744 = vpop.permute.xlu0 %743
      %v746 = vmul.f32 %v744, %v740
      %v747 = vadd.f32 %v746, %v734
      %748 = vst.msk [vmem:[%s739] sm:$0xff] %vm346, %v747
      %749 = vst.msk [vmem:[%s665] sm:$0xff] %vm415, %v670
      %750 = vrot.lane.b32.xlu0 %v479, 104
      %v751 = vpop.permute.xlu0 %750
      %752 = vrot.lane.b32.xlu0 %v343, 72
      %v753 = vpop.permute.xlu0 %752
      %v755 = vsel %vm346, %v751, 0
      %v758 = vsel %vm346, %v753, 0
      %760 = vmatprep.subr.bf16.mxu0 0
      %761 = vmatpush1.bf16.xpose.msra.mxu0 %v758
      %762 = vmatprep.subr.bf16.mxu0 0
      %763 = vmatpush1.bf16.xpose.msra.mxu0 0
      %764 = vmatprep.subr.bf16.mxu0 0
      %765 = vmatpush1.bf16.xpose.msra.mxu0 0
      %766 = vmatprep.subr.bf16.mxu0 0
      %767 = vmatpush1.bf16.xpose.msra.mxu0 0
      %768 = vmatprep.subr.bf16.mxu0 0
      %769 = vmatpush1.bf16.xpose.msra.mxu0 0
      %770 = vmatprep.subr.bf16.mxu0 0
      %771 = vmatpush1.bf16.xpose.msra.mxu0 0
      %772 = vmatprep.subr.bf16.mxu0 0
      %773 = vmatpush1.bf16.xpose.msra.mxu0 0
      %774 = vmatprep.subr.bf16.mxu0 0
      %775 = vmatpush1.bf16.xpose.msra.mxu0 0
      %776 = vmatprep.subr.bf16.mxu0 0
      %777 = vmatpush1.bf16.xpose.msra.mxu0 0
      %778 = vmatprep.subr.bf16.mxu0 0
      %779 = vmatpush1.bf16.xpose.msra.mxu0 0
      %780 = vmatprep.subr.bf16.mxu0 0
      %781 = vmatpush1.bf16.xpose.msra.mxu0 0
      %782 = vmatprep.subr.bf16.mxu0 0
      %783 = vmatpush1.bf16.xpose.msra.mxu0 0
      %784 = vmatprep.subr.bf16.mxu0 0
      %785 = vmatpush1.bf16.xpose.msra.mxu0 0
      %786 = vmatprep.subr.bf16.mxu0 0
      %787 = vmatpush1.bf16.xpose.msra.mxu0 0
      %788 = vmatprep.subr.bf16.mxu0 0
      %789 = vmatpush1.bf16.xpose.msra.mxu0 0
      %790 = vmatprep.subr.bf16.mxu0 0
      %791 = vmatpush1.bf16.xpose.msra.mxu0 0
      %792 = vmatprep.mubr.bf16.mxu0 0
      %793 = vmatmul.mubr.bf16.gmra.mrb[0].mxu0 %v755
      %v794 = vpop.f32.mrb[0].mxu0
      %v795 = vadd.f32 %v340, %v794
      %v796 = vpop.f32.mrb[0].mxu0
      %v797 = vpop.f32.mrb[0].mxu0
      %v798 = vpop.f32.mrb[0].mxu0
      %799 = vdwg.mxu0
      %s800 = scalar_lea.vmem [#allocation2], 24
      %v801 = vld [vmem:[%s800] sm:$0xff]
      %v802 = vsel %vm346, %v795, -inf
      %803 = vmax.xlane.f32.xlu0 %v802
      %v804 = vpop.xlane.xlu0 %803
      %v805 = vmax.f32 %v801, %v804
      %v806 = vsub.f32 %v801, %v805
      %v807 = vmul.f32 %v806, 1.442695
      %v808 = vpow.pop %v807
      %810 = vset.pattern.permute.xlu0 0
      %811 = vperm.xlu0 %810, %v805
      %v812 = vpop.permute.xlu0 %811
      %v814 = vsub.f32 %v795, %v812
      %v815 = vmul.f32 %v814, 1.442695
      %v816 = vpow.pop %v815
      %s817 = scalar_lea.vmem [#allocation3], 24
      %v818 = vld [vmem:[%s817] sm:$0xff]
      %v819 = vmul.f32 %v808, %v818
      %v820 = vsel %vm346, %v816, 0.0
      %821 = vadd.xlane.f32.xlu0 %v820
      %v822 = vpop.xlane.xlu0 %821
      %v823 = vadd.f32 %v819, %v822
      %824 = vst.msk [vmem:[%s817] sm:$0xff] %vm415, %v823
      %v825 = vpack.c.bf16 %v816, %v816
      %826 = vrot.lane.b32.xlu0 %v343, 40
      %v827 = vpop.permute.xlu0 %826
      %v829 = vsel %vm346, %v825, 0
      %v832 = vsel %vm423, %v827, 0
      %834 = vmatprep.subr.bf16.mxu0 0
      %835 = vmatpush1.bf16.msra.mxu0 %v832
      %836 = vmatprep.subr.bf16.mxu0 0
      %837 = vmatpush1.bf16.msra.mxu0 0
      %838 = vmatprep.subr.bf16.mxu0 0
      %839 = vmatpush1.bf16.msra.mxu0 0
      %840 = vmatprep.subr.bf16.mxu0 0
      %841 = vmatpush1.bf16.msra.mxu0 0
      %842 = vmatprep.subr.bf16.mxu0 0
      %843 = vmatpush1.bf16.msra.mxu0 0
      %844 = vmatprep.subr.bf16.mxu0 0
      %845 = vmatpush1.bf16.msra.mxu0 0
      %846 = vmatprep.subr.bf16.mxu0 0
      %847 = vmatpush1.bf16.msra.mxu0 0
      %848 = vmatprep.subr.bf16.mxu0 0
      %849 = vmatpush1.bf16.msra.mxu0 0
      %850 = vmatprep.subr.bf16.mxu0 0
      %851 = vmatpush1.bf16.msra.mxu0 0
      %852 = vmatprep.subr.bf16.mxu0 0
      %853 = vmatpush1.bf16.msra.mxu0 0
      %854 = vmatprep.subr.bf16.mxu0 0
      %855 = vmatpush1.bf16.msra.mxu0 0
      %856 = vmatprep.subr.bf16.mxu0 0
      %857 = vmatpush1.bf16.msra.mxu0 0
      %858 = vmatprep.subr.bf16.mxu0 0
      %859 = vmatpush1.bf16.msra.mxu0 0
      %860 = vmatprep.subr.bf16.mxu0 0
      %861 = vmatpush1.bf16.msra.mxu0 0
      %862 = vmatprep.subr.bf16.mxu0 0
      %863 = vmatpush1.bf16.msra.mxu0 0
      %864 = vmatprep.subr.bf16.mxu0 0
      %865 = vmatpush1.bf16.msra.mxu0 0
      %866 = vmatprep.mubr.bf16.mxu0 0
      %867 = vmatmul.mubr.bf16.gmra.mrb[0].mxu0 %v829
      %v868 = vpop.f32.mrb[0].mxu0
      %v869 = vadd.f32 0.0, %v868
      %v870 = vpop.f32.mrb[0].mxu0
      %v871 = vpop.f32.mrb[0].mxu0
      %v872 = vpop.f32.mrb[0].mxu0
      %873 = vdwg.mxu0
      %s874 = scalar_lea.vmem [#allocation4], 24
      %v875 = vld [vmem:[%s874] sm:$0xff]
      %877 = vset.pattern.permute.xlu0 0
      %878 = vperm.xlu0 %877, %v808
      %v879 = vpop.permute.xlu0 %878
      %v881 = vmul.f32 %v879, %v875
      %v882 = vadd.f32 %v881, %v869
      %883 = vst.msk [vmem:[%s874] sm:$0xff] %vm346, %v882
      %884 = vst.msk [vmem:[%s800] sm:$0xff] %vm415, %v805
      // Predicated region
      $region41: #{bb_bart_encoder_layer.10} parent=35 // pred_check
        %p885 = pneg %p320
      $region42: #{bb_bart_encoder_layer.10} parent=35 // pred_check_branch
        %887 = sbr.rel (%p885) target = $region44
      $region43: #{bb_bart_encoder_layer.10} parent=35 // pred_region
        %v888 = vld [vmem:[#allocation4] sm:$0xff]
        %v889 = vld [vmem:[#allocation3] sm:$0xff]
        %v890 = vrcp.pop %v889
        %892 = vset.pattern.permute.xlu0 0
        %893 = vperm.xlu0 %892, %v890
        %v894 = vpop.permute.xlu0 %893
        %v896 = vmul.f32 %v888, %v894
        %v897 = vld [vmem:[%s604] sm:$0xff]
        %v898 = vld [vmem:[%s547] sm:$0xff]
        %v899 = vrcp.pop %v898
        %901 = vset.pattern.permute.xlu0 0
        %902 = vperm.xlu0 %901, %v899
        %v903 = vpop.permute.xlu0 %902
        %v905 = vmul.f32 %v897, %v903
        %v906 = vld [vmem:[%s739] sm:$0xff]
        %v907 = vld [vmem:[%s682] sm:$0xff]
        %v908 = vrcp.pop %v907
        %910 = vset.pattern.permute.xlu0 0
        %911 = vperm.xlu0 %910, %v908
        %v912 = vpop.permute.xlu0 %911
        %v914 = vmul.f32 %v906, %v912
        %v915 = vld [vmem:[%s874] sm:$0xff]
        %v916 = vld [vmem:[%s817] sm:$0xff]
        %v917 = vrcp.pop %v916
        %919 = vset.pattern.permute.xlu0 0
        %920 = vperm.xlu0 %919, %v917
        %v921 = vpop.permute.xlu0 %920
        %v923 = vmul.f32 %v915, %v921
        %925 = vrot.lane.b32.xlu0 %v905, 8
        %v926 = vpop.permute.xlu0 %925
        %929 = vrot.lane.b32.xlu0 %v914, 16
        %v930 = vpop.permute.xlu0 %929
        %933 = vrot.lane.b32.xlu0 %v923, 24
        %v934 = vpop.permute.xlu0 %933
        %v936 = vsel %vm346, %v896, %v926
        %vm937 = vcmask 130048
        %v938 = vsel %vm937, %v936, %v930
        %vm939 = vcmask 195584
        %v940 = vsel %vm939, %v938, %v934
        %v941 = vld [vmem:[%s311] sm:$0x1]
        %v943 = vlaneseq
        %v944 = vshrl.u32 %v943, 7
        %v945 = vsub.s32 0, %v944
        %v946 = vrot.slane %v941, %v945
        %v948 = vmul.f32 %v940, %v946
        %v949 = vpack.c.bf16 %v948, %v948
        %vm950 = vcmask 257024
        %951 = vst.msk [vmem:[%s318] sm:$0xf] %vm950, %v949
      $region44: #{bb_bart_encoder_layer.10} parent=35 // pred_fallthru
        _
      %p952 = scmp.lt.s32.totalorder %s21, 1
      %s953 = scalar_select %p952, %s21, 1
      %p954 = scmp.lt.s32.totalorder %s23, 0
      %s955 = scalar_select %p954, %s23, 0
      %s956 = sadd.s32 %s955, %s953
      %s957 = smul.addr %s956, 4
      %s958 = scalar_lea.vmem %s4, %s957
      // Predicated region
      $region45: #{bb_bart_encoder_layer.10} parent=35 // pred_check
        %p959 = pneg %p173
      $region46: #{bb_bart_encoder_layer.10} parent=35 // pred_check_branch
        %961 = sbr.rel (%p959) target = $region48
      $region47: #{bb_bart_encoder_layer.10} parent=35 // pred_region
        _
      $region48: #{bb_bart_encoder_layer.10} parent=35 // pred_fallthru
        _
    $region36: #{bb_bart_encoder_layer.10} parent=5 // pred_fallthru
      _
    %p962 = scmp.le.s32.totalorder 2, %s10
    // Predicated region
    $region49: #{bb_bart_encoder_layer.10} parent=5 // pred_check
      %p963 = pneg %p962
    $region50: #{bb_bart_encoder_layer.10} parent=5 // pred_check_branch
      %965 = sbr.rel (%p963) target = $region52
    $region51: #{bb_bart_encoder_layer.10} parent=5 // pred_region
      %s966 = ssub.s32 %s10, 2
      // Predicated region
      $region53: #{bb_bart_encoder_layer.10} parent=51 // pred_check
        %p967 = pneg %p179
      $region54: #{bb_bart_encoder_layer.10} parent=51 // pred_check_branch
        %969 = sbr.rel (%p967) target = $region56
      $region55: #{bb_bart_encoder_layer.10} parent=51 // pred_region
        %p970 = scmp.lt.s32.totalorder %s25, 1
        %s971 = scalar_select %p970, %s25, 1
        %p972 = scmp.lt.s32.totalorder %s27, 0
        %s973 = scalar_select %p972, %s27, 0
        %s974 = sadd.s32 %s973, %s971
        %s975 = smul.addr %s974, 4
        %s976 = scalar_lea.vmem %s4, %s975
      $region56: #{bb_bart_encoder_layer.10} parent=51 // pred_fallthru
        _
    $region52: #{bb_bart_encoder_layer.10} parent=5 // pred_fallthru
      _
  $region6: #{bb_bart_encoder_layer.10} parent=0 // loop_footer
    %s14 = sadd.s32 1, %s10
  $region7: #{bb_bart_encoder_layer.10} parent=0 // loop_footer_branch
    %9 = sbr.rel target = $region3
  $region8: #{bb_bart_encoder_layer.10} parent=0 // loop_exit
    _

// kernel: bb_bart_encoder_layer.12
$region0: #{bb_bart_encoder_layer.12}
  #allocation0 [shape = 'u32[]', space=smem, size = 0x4, offset = 0x4, fixed_abs, tag = 'smem constant byte address 0x4 - core index']
  #allocation1 [shape = 'u32[144,128]{1,0:T(1,128)}', space=vmem, size = 0x12000, scoped, tag = 'internal scratch']
  #allocation2 [shape = 'f32[16,32]{1,0:T(8,128)}', space=vmem, size = 0x2000, scoped, tag = 'scratch operand']
  %s0 = inlined_call_operand.vmem [shape: f32[16,32], index: 0, kind: input, shape index: {}]
  %s1 = inlined_call_operand.vmem [shape: f32[32,64], index: 1, kind: input, shape index: {}]
  %s2 = inlined_call_operand.vmem [shape: f32[1,64], index: 2, kind: input, shape index: {}]
  %s3 = inlined_call_operand.vmem [shape: f32[64,32], index: 3, kind: input, shape index: {}]
  %s4 = inlined_call_operand.vmem [shape: f32[1,32], index: 4, kind: input, shape index: {}]
  %s5 = inlined_call_operand.vmem [shape: f32[1,32], index: 5, kind: input, shape index: {}]
  %s6 = inlined_call_operand.vmem [shape: f32[1,32], index: 6, kind: input, shape index: {}]
  %s7 = inlined_call_operand.hbm [shape: f32[16,32], index: 7, kind: output, shape index: {}]
  %s8 = sld [smem:[#allocation0]]
  $region46: #{bb_bart_encoder_layer.12} parent=0
    _
  %s10 = ssub.s32 1, %s8
  %s11 = scalar_select 0, %s10, %s8
  $region1: #{bb_bart_encoder_layer.12} parent=0
    #allocation3 [shape = 'u8[8192]{0}', space=vmem, size = 0x2000, scoped, tag = 'output window, operand 0, single buffered']
    #allocation4 [shape = 's32[1]{0}', space=sflag, size = 0x4, scoped, tag = 'scoped memory for bb_bart_encoder_layer.12']
    %12 = vsyncpa [#allocation4], 0
    // Predicated region
    $region2: #{bb_bart_encoder_layer.12} parent=1 // pred_check
      _
    $region3: #{bb_bart_encoder_layer.12} parent=1 // pred_check_branch
      %14 = sbr.rel (0) target = $region5
    $region4: #{bb_bart_encoder_layer.12} parent=1 // pred_region
      _
    $region5: #{bb_bart_encoder_layer.12} parent=1 // pred_fallthru
      _
    // Predicated region
    $region6: #{bb_bart_encoder_layer.12} parent=1 // pred_check
      _
    $region7: #{bb_bart_encoder_layer.12} parent=1 // pred_check_branch
      %16 = sbr.rel (0) target = $region9
    $region8: #{bb_bart_encoder_layer.12} parent=1 // pred_region
      _
    $region9: #{bb_bart_encoder_layer.12} parent=1 // pred_fallthru
      _
    // Predicated region
    $region10: #{bb_bart_encoder_layer.12} parent=1 // pred_check
      _
    $region11: #{bb_bart_encoder_layer.12} parent=1 // pred_check_branch
      %18 = sbr.rel (0) target = $region13
    $region12: #{bb_bart_encoder_layer.12} parent=1 // pred_region
      _
    $region13: #{bb_bart_encoder_layer.12} parent=1 // pred_fallthru
      _
    // Predicated region
    $region14: #{bb_bart_encoder_layer.12} parent=1 // pred_check
      _
    $region15: #{bb_bart_encoder_layer.12} parent=1 // pred_check_branch
      %20 = sbr.rel (0) target = $region17
    $region16: #{bb_bart_encoder_layer.12} parent=1 // pred_region
      _
    $region17: #{bb_bart_encoder_layer.12} parent=1 // pred_fallthru
      _
    // Predicated region
    $region18: #{bb_bart_encoder_layer.12} parent=1 // pred_check
      _
    $region19: #{bb_bart_encoder_layer.12} parent=1 // pred_check_branch
      %22 = sbr.rel (0) target = $region21
    $region20: #{bb_bart_encoder_layer.12} parent=1 // pred_region
      _
    $region21: #{bb_bart_encoder_layer.12} parent=1 // pred_fallthru
      _
    // Predicated region
    $region22: #{bb_bart_encoder_layer.12} parent=1 // pred_check
      _
    $region23: #{bb_bart_encoder_layer.12} parent=1 // pred_check_branch
      %24 = sbr.rel (0) target = $region25
    $region24: #{bb_bart_encoder_layer.12} parent=1 // pred_region
      _
    $region25: #{bb_bart_encoder_layer.12} parent=1 // pred_fallthru
      _
    // Predicated region
    $region26: #{bb_bart_encoder_layer.12} parent=1 // pred_check
      _
    $region27: #{bb_bart_encoder_layer.12} parent=1 // pred_check_branch
      %26 = sbr.rel (0) target = $region29
    $region28: #{bb_bart_encoder_layer.12} parent=1 // pred_region
      _
    $region29: #{bb_bart_encoder_layer.12} parent=1 // pred_fallthru
      _
    %p28 = scmp.eq.s32.totalorder 0, 0
    // Predicated region
    $region30: #{bb_bart_encoder_layer.12} parent=1 // pred_check
      %p29 = pneg %p28
    $region31: #{bb_bart_encoder_layer.12} parent=1 // pred_check_branch
      %31 = sbr.rel (%p29) target = $region33
    $region32: #{bb_bart_encoder_layer.12} parent=1 // pred_region
      %vm32 = vcmask 261120
      %33 = vst.msk [vmem:[#allocation2] sm:$0xff] %vm32, 0.0
      %34 = vst.msk [vmem:[#allocation2 + $0x8] sm:$0xff] %vm32, 0.0
    $region33: #{bb_bart_encoder_layer.12} parent=1 // pred_fallthru
      _
    %v35 = vld [vmem:[%s0] sm:$0xff]
    %v36 = vld [vmem:[%s0 + $0x8] sm:$0xff]
    %v37 = vpack.c.bf16 %v36, %v35
    %v38 = vld [vmem:[%s1] sm:$0xff]
    %v39 = vld [vmem:[%s1 + $0x8] sm:$0xff]
    %v40 = vld [vmem:[%s1 + $0x10] sm:$0xff]
    %v41 = vld [vmem:[%s1 + $0x18] sm:$0xff]
    %v42 = vpack.c.bf16 %v39, %v38
    %v43 = vpack.c.bf16 %v41, %v40
    %v44 = vld [vmem:[%s2] sm:$0x1]
    %v46 = vlaneseq
    %v47 = vshrl.u32 %v46, 7
    %v48 = vsub.s32 0, %v47
    %v49 = vrot.slane %v44, %v48
    %vm51 = vcmask 261120
    %v53 = vsel %vm51, %v37, 0
    %55 = vmatprep.subr.bf16.mxu0 0
    %56 = vmatpush1.bf16.msra.mxu0 %v42
    %57 = vmatprep.subr.bf16.mxu0 0
    %58 = vmatpush1.bf16.msra.mxu0 %v43
    %59 = vmatprep.subr.bf16.mxu0 0
    %60 = vmatpush1.bf16.msra.mxu0 0
    %61 = vmatprep.subr.bf16.mxu0 0
    %62 = vmatpush1.bf16.msra.mxu0 0
    %63 = vmatprep.subr.bf16.mxu0 0
    %64 = vmatpush1.bf16.msra.mxu0 0
    %65 = vmatprep.subr.bf16.mxu0 0
    %66 = vmatpush1.bf16.msra.mxu0 0
    %67 = vmatprep.subr.bf16.mxu0 0
    %68 = vmatpush1.bf16.msra.mxu0 0
    %69 = vmatprep.subr.bf16.mxu0 0
    %70 = vmatpush1.bf16.msra.mxu0 0
    %71 = vmatprep.subr.bf16.mxu0 0
    %72 = vmatpush1.bf16.msra.mxu0 0
    %73 = vmatprep.subr.bf16.mxu0 0
    %74 = vmatpush1.bf16.msra.mxu0 0
    %75 = vmatprep.subr.bf16.mxu0 0
    %76 = vmatpush1.bf16.msra.mxu0 0
    %77 = vmatprep.subr.bf16.mxu0 0
    %78 = vmatpush1.bf16.msra.mxu0 0
    %79 = vmatprep.subr.bf16.mxu0 0
    %80 = vmatpush1.bf16.msra.mxu0 0
    %81 = vmatprep.subr.bf16.mxu0 0
    %82 = vmatpush1.bf16.msra.mxu0 0
    %83 = vmatprep.subr.bf16.mxu0 0
    %84 = vmatpush1.bf16.msra.mxu0 0
    %85 = vmatprep.subr.bf16.mxu0 0
    %86 = vmatpush1.bf16.msra.mxu0 0
    %87 = vmatprep.mubr.bf16.mxu0 0
    %88 = vmatmul.mubr.bf16.gmra.mrb[0].mxu0 %v53
    %v89 = vpop.f32.mrb[0].mxu0
    %v90 = vadd.f32 %v49, %v89
    %v91 = vpop.f32.mrb[0].mxu0
    %v92 = vpop.f32.mrb[0].mxu0
    %v93 = vadd.f32 %v49, %v92
    %v94 = vpop.f32.mrb[0].mxu0
    %95 = vdwg.mxu0
    %v96 = vmul.f32 %v90, 0.5
    %v97 = vmul.f32 %v93, 0.5
    %v98 = vmul.f32 %v90, 0.70710677
    %v99 = vmul.f32 %v93, 0.70710677
    %v100 = verf.f32.pop %v98
    %v101 = verf.f32.pop %v99
    %v102 = vadd.f32 %v100, 1.0
    %v103 = vadd.f32 %v101, 1.0
    %v104 = vmul.f32 %v96, %v102
    %v105 = vmul.f32 %v97, %v103
    %v106 = vld [vmem:[#allocation2] sm:$0xff]
    %v107 = vld [vmem:[#allocation2 + $0x8] sm:$0xff]
    %v108 = vpack.c.bf16 %v105, %v104
    %v109 = vld [vmem:[%s3] sm:$0xff]
    %v110 = vld [vmem:[%s3 + $0x8] sm:$0xff]
    %v111 = vld [vmem:[%s3 + $0x10] sm:$0xff]
    %v112 = vld [vmem:[%s3 + $0x18] sm:$0xff]
    %v113 = vld [vmem:[%s3 + $0x20] sm:$0xff]
    %v114 = vld [vmem:[%s3 + $0x28] sm:$0xff]
    %v115 = vld [vmem:[%s3 + $0x30] sm:$0xff]
    %v116 = vld [vmem:[%s3 + $0x38] sm:$0xff]
    %v117 = vpack.c.bf16 %v110, %v109
    %v118 = vpack.c.bf16 %v112, %v111
    %v119 = vpack.c.bf16 %v114, %v113
    %v120 = vpack.c.bf16 %v116, %v115
    %vm121 = vcmask 523264
    %v123 = vsel %vm121, %v108, 0
    %125 = vmatprep.subr.bf16.mxu0 0
    %126 = vmatpush1.bf16.msra.mxu0 %v117
    %127 = vmatprep.subr.bf16.mxu0 0
    %128 = vmatpush1.bf16.msra.mxu0 %v118
    %129 = vmatprep.subr.bf16.mxu0 0
    %130 = vmatpush1.bf16.msra.mxu0 %v119
    %131 = vmatprep.subr.bf16.mxu0 0
    %132 = vmatpush1.bf16.msra.mxu0 %v120
    %133 = vmatprep.subr.bf16.mxu0 0
    %134 = vmatpush1.bf16.msra.mxu0 0
    %135 = vmatprep.subr.bf16.mxu0 0
    %136 = vmatpush1.bf16.msra.mxu0 0
    %137 = vmatprep.subr.bf16.mxu0 0
    %138 = vmatpush1.bf16.msra.mxu0 0
    %139 = vmatprep.subr.bf16.mxu0 0
    %140 = vmatpush1.bf16.msra.mxu0 0
    %141 = vmatprep.subr.bf16.mxu0 0
    %142 = vmatpush1.bf16.msra.mxu0 0
    %143 = vmatprep.subr.bf16.mxu0 0
    %144 = vmatpush1.bf16.msra.mxu0 0
    %145 = vmatprep.subr.bf16.mxu0 0
    %146 = vmatpush1.bf16.msra.mxu0 0
    %147 = vmatprep.subr.bf16.mxu0 0
    %148 = vmatpush1.bf16.msra.mxu0 0
    %149 = vmatprep.subr.bf16.mxu0 0
    %150 = vmatpush1.bf16.msra.mxu0 0
    %151 = vmatprep.subr.bf16.mxu0 0
    %152 = vmatpush1.bf16.msra.mxu0 0
    %153 = vmatprep.subr.bf16.mxu0 0
    %154 = vmatpush1.bf16.msra.mxu0 0
    %155 = vmatprep.subr.bf16.mxu0 0
    %156 = vmatpush1.bf16.msra.mxu0 0
    %157 = vmatprep.mubr.bf16.mxu0 0
    %158 = vmatmul.mubr.bf16.gmra.mrb[0].mxu0 %v123
    %v159 = vpop.f32.mrb[0].mxu0
    %v160 = vadd.f32 0.0, %v159
    %v161 = vpop.f32.mrb[0].mxu0
    %v162 = vpop.f32.mrb[0].mxu0
    %v163 = vadd.f32 0.0, %v162
    %v164 = vpop.f32.mrb[0].mxu0
    %165 = vdwg.mxu0
    %v166 = vadd.f32 %v106, %v160
    %v167 = vadd.f32 %v107, %v163
    %168 = vst.msk [vmem:[#allocation2] sm:$0xff] %vm51, %v166
    %169 = vst.msk [vmem:[#allocation2 + $0x8] sm:$0xff] %vm51, %v167
    // Predicated region
    $region34: #{bb_bart_encoder_layer.12} parent=1 // pred_check
      %p170 = pneg %p28
    $region35: #{bb_bart_encoder_layer.12} parent=1 // pred_check_branch
      %172 = sbr.rel (%p170) target = $region37
    $region36: #{bb_bart_encoder_layer.12} parent=1 // pred_region
      %v173 = vld [vmem:[#allocation2] sm:$0xff]
      %v174 = vld [vmem:[#allocation2 + $0x8] sm:$0xff]
      %v175 = vld [vmem:[%s4] sm:$0x1]
      %v177 = vlaneseq
      %v178 = vshrl.u32 %v177, 7
      %v179 = vsub.s32 0, %v178
      %v180 = vrot.slane %v175, %v179
      %v182 = vadd.f32 %v173, %v180
      %v183 = vadd.f32 %v174, %v180
      %v184 = vld [vmem:[%s0] sm:$0xff]
      %v185 = vld [vmem:[%s0 + $0x8] sm:$0xff]
      %v186 = vadd.f32 %v182, %v184
      %v187 = vadd.f32 %v183, %v185
      %v188 = vsel %vm51, %v186, 0.0
      %189 = vadd.xlane.f32.xlu0 %v188
      %v190 = vpop.xlane.xlu0 %189
      %v191 = vsel %vm51, %v187, 0.0
      %192 = vadd.xlane.f32.xlu0 %v191
      %v193 = vpop.xlane.xlu0 %192
      %v194 = vrcp.pop 32.0
      %v195 = vmul.f32 %v190, %v194
      %v196 = vmul.f32 %v193, %v194
      %v197 = vsub.f32 %v186, %v195
      %v198 = vsub.f32 %v187, %v196
      %v199 = vmul.f32 %v197, %v197
      %v200 = vmul.f32 %v198, %v198
      %v201 = vsel %vm51, %v199, 0.0
      %202 = vadd.xlane.f32.xlu0 %v201
      %v203 = vpop.xlane.xlu0 %202
      %v204 = vsel %vm51, %v200, 0.0
      %205 = vadd.xlane.f32.xlu0 %v204
      %v206 = vpop.xlane.xlu0 %205
      %v207 = vmul.f32 %v203, %v194
      %v208 = vmul.f32 %v206, %v194
      %v209 = vadd.f32 %v207, 1e-05
      %v210 = vadd.f32 %v208, 1e-05
      %v211 = vrsqrt.pop %v209
      %v212 = vrsqrt.pop %v210
      %v213 = vmul.f32 %v197, %v211
      %v214 = vmul.f32 %v198, %v212
      %v215 = vld [vmem:[%s5] sm:$0x1]
      %v217 = vlaneseq
      %v218 = vshrl.u32 %v217, 7
      %v219 = vsub.s32 0, %v218
      %v220 = vrot.slane %v215, %v219
      %v222 = vmul.f32 %v213, %v220
      %v223 = vmul.f32 %v214, %v220
      %v224 = vld [vmem:[%s6] sm:$0x1]
      %v226 = vlaneseq
      %v227 = vshrl.u32 %v226, 7
      %v228 = vsub.s32 0, %v227
      %v229 = vrot.slane %v224, %v228
      %v231 = vadd.f32 %v222, %v229
      %v232 = vadd.f32 %v223, %v229
      %233 = vst.msk [vmem:[#allocation3] sm:$0xff] %vm51, %v231
      %234 = vst.msk [vmem:[#allocation3 + $0x8] sm:$0xff] %vm51, %v232
    $region37: #{bb_bart_encoder_layer.12} parent=1 // pred_fallthru
      _
    // Predicated region
    $region38: #{bb_bart_encoder_layer.12} parent=1 // pred_check
      _
    $region39: #{bb_bart_encoder_layer.12} parent=1 // pred_check_branch
      %236 = sbr.rel (0) target = $region41
    $region40: #{bb_bart_encoder_layer.12} parent=1 // pred_region
      %s238 = ssub.s32 256, 256
      %239 = vsyncadd [#allocation4], %s238
      %s240 = sshll.u32 [#allocation3], 4
      %s241 = int_to_ptr.vmem [resolvable:$true] %s240
      %246 = dma.vmem_to_hbm [thread:$0]  %s241, 256, %s7, [#allocation4], 128, 128, 8
    $region41: #{bb_bart_encoder_layer.12} parent=1 // pred_fallthru
      _
    // Predicated region
    $region42: #{bb_bart_encoder_layer.12} parent=1 // pred_check
      _
    $region43: #{bb_bart_encoder_layer.12} parent=1 // pred_check_branch
      %248 = sbr.rel (0) target = $region45
    $region44: #{bb_bart_encoder_layer.12} parent=1 // pred_region
      %249 = dma.done [#allocation4], 256
    $region45: #{bb_bart_encoder_layer.12} parent=1 // pred_fallthru
      _
    %250 = vsyncpa [#allocation4], 1

// kernel: bb_bart_encoder_layer.13
$region0: #{bb_bart_encoder_layer.13}
  #allocation0 [shape = 'u32[]', space=smem, size = 0x4, offset = 0x4, fixed_abs, tag = 'smem constant byte address 0x4 - core index']
  #allocation1 [shape = 'u32[144,128]{1,0:T(1,128)}', space=vmem, size = 0x12000, scoped, tag = 'internal scratch']
  %s0 = inlined_call_operand.vmem [shape: f32[16,32], index: 0, kind: input, shape index: {}]
  %s1 = inlined_call_operand.vmem [shape: f32[16,16], index: 1, kind: input, shape index: {}]
  %s2 = inlined_call_operand.vmem [shape: f32[32,16], index: 2, kind: input, shape index: {}]
  %s3 = inlined_call_operand.vmem [shape: f32[16,16], index: 3, kind: input, shape index: {}]
  %s4 = inlined_call_operand.vmem [shape: f32[1,16], index: 4, kind: input, shape index: {}]
  %s5 = inlined_call_operand.vmem [shape: f32[16,16], index: 5, kind: output, shape index: {}]
  %s6 = sld [smem:[#allocation0]]
  $region30: #{bb_bart_encoder_layer.13} parent=0
    _
  %s8 = ssub.s32 1, %s6
  %s9 = scalar_select 0, %s8, %s6
  // Predicated region
  $region2: #{bb_bart_encoder_layer.13} parent=0 // pred_check
    _
  $region3: #{bb_bart_encoder_layer.13} parent=0 // pred_check_branch
    %11 = sbr.rel (0) target = $region5
  $region4: #{bb_bart_encoder_layer.13} parent=0 // pred_region
    _
  $region5: #{bb_bart_encoder_layer.13} parent=0 // pred_fallthru
    _
  // Predicated region
  $region6: #{bb_bart_encoder_layer.13} parent=0 // pred_check
    _
  $region7: #{bb_bart_encoder_layer.13} parent=0 // pred_check_branch
    %13 = sbr.rel (0) target = $region9
  $region8: #{bb_bart_encoder_layer.13} parent=0 // pred_region
    _
  $region9: #{bb_bart_encoder_layer.13} parent=0 // pred_fallthru
    _
  // Predicated region
  $region10: #{bb_bart_encoder_layer.13} parent=0 // pred_check
    _
  $region11: #{bb_bart_encoder_layer.13} parent=0 // pred_check_branch
    %15 = sbr.rel (0) target = $region13
  $region12: #{bb_bart_encoder_layer.13} parent=0 // pred_region
    _
  $region13: #{bb_bart_encoder_layer.13} parent=0 // pred_fallthru
    _
  // Predicated region
  $region14: #{bb_bart_encoder_layer.13} parent=0 // pred_check
    _
  $region15: #{bb_bart_encoder_layer.13} parent=0 // pred_check_branch
    %17 = sbr.rel (0) target = $region17
  $region16: #{bb_bart_encoder_layer.13} parent=0 // pred_region
    _
  $region17: #{bb_bart_encoder_layer.13} parent=0 // pred_fallthru
    _
  // Predicated region
  $region18: #{bb_bart_encoder_layer.13} parent=0 // pred_check
    _
  $region19: #{bb_bart_encoder_layer.13} parent=0 // pred_check_branch
    %19 = sbr.rel (0) target = $region21
  $region20: #{bb_bart_encoder_layer.13} parent=0 // pred_region
    _
  $region21: #{bb_bart_encoder_layer.13} parent=0 // pred_fallthru
    _
  %v21 = vld [vmem:[%s0] sm:$0xff]
  %v22 = vld [vmem:[%s0 + $0x8] sm:$0xff]
  %v23 = vpack.c.bf16 %v22, %v21
  %v24 = vld [vmem:[%s2] sm:$0xff]
  %v25 = vld [vmem:[%s2 + $0x8] sm:$0xff]
  %v26 = vld [vmem:[%s2 + $0x10] sm:$0xff]
  %v27 = vld [vmem:[%s2 + $0x18] sm:$0xff]
  %v28 = vpack.c.bf16 %v25, %v24
  %v29 = vpack.c.bf16 %v27, %v26
  %v30 = vld [vmem:[%s1] sm:$0xff]
  %v31 = vld [vmem:[%s1 + $0x8] sm:$0xff]
  %v32 = vpack.c.bf16 %v31, %v30
  %v33 = vld [vmem:[%s3] sm:$0xff]
  %v34 = vld [vmem:[%s3 + $0x8] sm:$0xff]
  %v35 = vpack.c.bf16 %v34, %v33
  %vm36 = vcmask 130048
  %v38 = vsel %vm36, %v32, 0
  %40 = vmatprep.subr.bf16.mxu0 0
  %41 = vmatpush1.bf16.msra.mxu0 %v35
  %42 = vmatprep.subr.bf16.mxu0 0
  %43 = vmatpush1.bf16.msra.mxu0 0
  %44 = vmatprep.subr.bf16.mxu0 0
  %45 = vmatpush1.bf16.msra.mxu0 0
  %46 = vmatprep.subr.bf16.mxu0 0
  %47 = vmatpush1.bf16.msra.mxu0 0
  %48 = vmatprep.subr.bf16.mxu0 0
  %49 = vmatpush1.bf16.msra.mxu0 0
  %50 = vmatprep.subr.bf16.mxu0 0
  %51 = vmatpush1.bf16.msra.mxu0 0
  %52 = vmatprep.subr.bf16.mxu0 0
  %53 = vmatpush1.bf16.msra.mxu0 0
  %54 = vmatprep.subr.bf16.mxu0 0
  %55 = vmatpush1.bf16.msra.mxu0 0
  %56 = vmatprep.subr.bf16.mxu0 0
  %57 = vmatpush1.bf16.msra.mxu0 0
  %58 = vmatprep.subr.bf16.mxu0 0
  %59 = vmatpush1.bf16.msra.mxu0 0
  %60 = vmatprep.subr.bf16.mxu0 0
  %61 = vmatpush1.bf16.msra.mxu0 0
  %62 = vmatprep.subr.bf16.mxu0 0
  %63 = vmatpush1.bf16.msra.mxu0 0
  %64 = vmatprep.subr.bf16.mxu0 0
  %65 = vmatpush1.bf16.msra.mxu0 0
  %66 = vmatprep.subr.bf16.mxu0 0
  %67 = vmatpush1.bf16.msra.mxu0 0
  %68 = vmatprep.subr.bf16.mxu0 0
  %69 = vmatpush1.bf16.msra.mxu0 0
  %70 = vmatprep.subr.bf16.mxu0 0
  %71 = vmatpush1.bf16.msra.mxu0 0
  %72 = vmatprep.mubr.bf16.mxu0 0
  %73 = vmatmul.mubr.bf16.gmra.mrb[0].mxu0 %v38
  %v74 = vpop.f32.mrb[0].mxu0
  %v75 = vadd.f32 0.0, %v74
  %v76 = vpop.f32.mrb[0].mxu0
  %v77 = vpop.f32.mrb[0].mxu0
  %v78 = vadd.f32 0.0, %v77
  %v79 = vpop.f32.mrb[0].mxu0
  %80 = vdwg.mxu0
  %vm81 = vcmask 261120
  %v83 = vsel %vm81, %v23, 0
  %85 = vmatprep.subr.bf16.mxu0 0
  %86 = vmatpush1.bf16.msra.mxu0 %v28
  %87 = vmatprep.subr.bf16.mxu0 0
  %88 = vmatpush1.bf16.msra.mxu0 %v29
  %89 = vmatprep.subr.bf16.mxu0 0
  %90 = vmatpush1.bf16.msra.mxu0 0
  %91 = vmatprep.subr.bf16.mxu0 0
  %92 = vmatpush1.bf16.msra.mxu0 0
  %93 = vmatprep.subr.bf16.mxu0 0
  %94 = vmatpush1.bf16.msra.mxu0 0
  %95 = vmatprep.subr.bf16.mxu0 0
  %96 = vmatpush1.bf16.msra.mxu0 0
  %97 = vmatprep.subr.bf16.mxu0 0
  %98 = vmatpush1.bf16.msra.mxu0 0
  %99 = vmatprep.subr.bf16.mxu0 0
  %100 = vmatpush1.bf16.msra.mxu0 0
  %101 = vmatprep.subr.bf16.mxu0 0
  %102 = vmatpush1.bf16.msra.mxu0 0
  %103 = vmatprep.subr.bf16.mxu0 0
  %104 = vmatpush1.bf16.msra.mxu0 0
  %105 = vmatprep.subr.bf16.mxu0 0
  %106 = vmatpush1.bf16.msra.mxu0 0
  %107 = vmatprep.subr.bf16.mxu0 0
  %108 = vmatpush1.bf16.msra.mxu0 0
  %109 = vmatprep.subr.bf16.mxu0 0
  %110 = vmatpush1.bf16.msra.mxu0 0
  %111 = vmatprep.subr.bf16.mxu0 0
  %112 = vmatpush1.bf16.msra.mxu0 0
  %113 = vmatprep.subr.bf16.mxu0 0
  %114 = vmatpush1.bf16.msra.mxu0 0
  %115 = vmatprep.subr.bf16.mxu0 0
  %116 = vmatpush1.bf16.msra.mxu0 0
  %117 = vmatprep.mubr.bf16.mxu0 0
  %118 = vmatmul.mubr.bf16.gmra.mrb[0].mxu0 %v83
  %v119 = vpop.f32.mrb[0].mxu0
  %v120 = vadd.f32 %v75, %v119
  %v121 = vpop.f32.mrb[0].mxu0
  %v122 = vpop.f32.mrb[0].mxu0
  %v123 = vadd.f32 %v78, %v122
  %v124 = vpop.f32.mrb[0].mxu0
  %125 = vdwg.mxu0
  %v126 = vld [vmem:[%s4] sm:$0x1]
  %v128 = vlaneseq
  %v129 = vshrl.u32 %v128, 7
  %v130 = vsub.s32 0, %v129
  %v131 = vrot.slane %v126, %v130
  %v133 = vadd.f32 %v120, %v131
  %v134 = vadd.f32 %v123, %v131
  %v135 = vmul.f32 %v133, 0.5
  %v136 = vmul.f32 %v134, 0.5
  %v137 = vmul.f32 %v133, 0.70710677
  %v138 = vmul.f32 %v134, 0.70710677
  %v139 = verf.f32.pop %v137
  %v140 = verf.f32.pop %v138
  %v141 = vadd.f32 %v139, 1.0
  %v142 = vadd.f32 %v140, 1.0
  %v143 = vmul.f32 %v135, %v141
  %v144 = vmul.f32 %v136, %v142
  %145 = vst.msk [vmem:[%s5] sm:$0xff] %vm36, %v143
  %146 = vst.msk [vmem:[%s5 + $0x8] sm:$0xff] %vm36, %v144
  // Predicated region
  $region22: #{bb_bart_encoder_layer.13} parent=0 // pred_check
    _
  $region23: #{bb_bart_encoder_layer.13} parent=0 // pred_check_branch
    %148 = sbr.rel (0) target = $region25
  $region24: #{bb_bart_encoder_layer.13} parent=0 // pred_region
    _
  $region25: #{bb_bart_encoder_layer.13} parent=0 // pred_fallthru
    _
  // Predicated region
  $region26: #{bb_bart_encoder_layer.13} parent=0 // pred_check
    _
  $region27: #{bb_bart_encoder_layer.13} parent=0 // pred_check_branch
    %150 = sbr.rel (0) target = $region29
  $region28: #{bb_bart_encoder_layer.13} parent=0 // pred_region
    _
  $region29: #{bb_bart_encoder_layer.13} parent=0 // pred_fallthru
    _

// kernel: bb_bart_encoder_layer.14
$region0: #{bb_bart_encoder_layer.14}
  #allocation0 [shape = 'u32[]', space=smem, size = 0x4, offset = 0x4, fixed_abs, tag = 'smem constant byte address 0x4 - core index']
  #allocation1 [shape = 'u32[144,128]{1,0:T(1,128)}', space=vmem, size = 0x12000, scoped, tag = 'internal scratch']
  #allocation2 [shape = 'f32[16,48]{1,0:T(8,128)}', space=vmem, size = 0x2000, scoped, tag = 'scratch operand']
  %s0 = inlined_call_operand.vmem [shape: f32[16,16], index: 0, kind: input, shape index: {}]
  %s1 = inlined_call_operand.vmem [shape: f32[16,48], index: 1, kind: input, shape index: {}]
  %s2 = inlined_call_operand.vmem [shape: f32[1,48], index: 2, kind: input, shape index: {}]
  %s3 = inlined_call_operand.vmem [shape: bf16[16,48], index: 3, kind: output, shape index: {}]
  %s4 = sld [smem:[#allocation0]]
  $region30: #{bb_bart_encoder_layer.14} parent=0
    _
  %s6 = ssub.s32 1, %s4
  %s7 = scalar_select 0, %s6, %s4
  // Predicated region
  $region2: #{bb_bart_encoder_layer.14} parent=0 // pred_check
    _
  $region3: #{bb_bart_encoder_layer.14} parent=0 // pred_check_branch
    %9 = sbr.rel (0) target = $region5
  $region4: #{bb_bart_encoder_layer.14} parent=0 // pred_region
    _
  $region5: #{bb_bart_encoder_layer.14} parent=0 // pred_fallthru
    _
  // Predicated region
  $region6: #{bb_bart_encoder_layer.14} parent=0 // pred_check
    _
  $region7: #{bb_bart_encoder_layer.14} parent=0 // pred_check_branch
    %11 = sbr.rel (0) target = $region9
  $region8: #{bb_bart_encoder_layer.14} parent=0 // pred_region
    _
  $region9: #{bb_bart_encoder_layer.14} parent=0 // pred_fallthru
    _
  // Predicated region
  $region10: #{bb_bart_encoder_layer.14} parent=0 // pred_check
    _
  $region11: #{bb_bart_encoder_layer.14} parent=0 // pred_check_branch
    %13 = sbr.rel (0) target = $region13
  $region12: #{bb_bart_encoder_layer.14} parent=0 // pred_region
    _
  $region13: #{bb_bart_encoder_layer.14} parent=0 // pred_fallthru
    _
  %p15 = scmp.eq.s32.totalorder 0, 0
  // Predicated region
  $region14: #{bb_bart_encoder_layer.14} parent=0 // pred_check
    %p16 = pneg %p15
  $region15: #{bb_bart_encoder_layer.14} parent=0 // pred_check_branch
    %18 = sbr.rel (%p16) target = $region17
  $region16: #{bb_bart_encoder_layer.14} parent=0 // pred_region
    %vm19 = vcmask 392192
    %20 = vst.msk [vmem:[#allocation2] sm:$0xff] %vm19, 0.0
    %21 = vst.msk [vmem:[#allocation2 + $0x8] sm:$0xff] %vm19, 0.0
  $region17: #{bb_bart_encoder_layer.14} parent=0 // pred_fallthru
    _
  %v22 = vld [vmem:[#allocation2] sm:$0xff]
  %v23 = vld [vmem:[#allocation2 + $0x8] sm:$0xff]
  %v24 = vld [vmem:[%s0] sm:$0xff]
  %v25 = vld [vmem:[%s0 + $0x8] sm:$0xff]
  %v26 = vpack.c.bf16 %v25, %v24
  %v27 = vld [vmem:[%s1] sm:$0xff]
  %v28 = vld [vmem:[%s1 + $0x8] sm:$0xff]
  %v29 = vpack.c.bf16 %v28, %v27
  %vm30 = vcmask 130048
  %v32 = vsel %vm30, %v26, 0
  %34 = vmatprep.subr.bf16.mxu0 0
  %35 = vmatpush1.bf16.msra.mxu0 %v29
  %36 = vmatprep.subr.bf16.mxu0 0
  %37 = vmatpush1.bf16.msra.mxu0 0
  %38 = vmatprep.subr.bf16.mxu0 0
  %39 = vmatpush1.bf16.msra.mxu0 0
  %40 = vmatprep.subr.bf16.mxu0 0
  %41 = vmatpush1.bf16.msra.mxu0 0
  %42 = vmatprep.subr.bf16.mxu0 0
  %43 = vmatpush1.bf16.msra.mxu0 0
  %44 = vmatprep.subr.bf16.mxu0 0
  %45 = vmatpush1.bf16.msra.mxu0 0
  %46 = vmatprep.subr.bf16.mxu0 0
  %47 = vmatpush1.bf16.msra.mxu0 0
  %48 = vmatprep.subr.bf16.mxu0 0
  %49 = vmatpush1.bf16.msra.mxu0 0
  %50 = vmatprep.subr.bf16.mxu0 0
  %51 = vmatpush1.bf16.msra.mxu0 0
  %52 = vmatprep.subr.bf16.mxu0 0
  %53 = vmatpush1.bf16.msra.mxu0 0
  %54 = vmatprep.subr.bf16.mxu0 0
  %55 = vmatpush1.bf16.msra.mxu0 0
  %56 = vmatprep.subr.bf16.mxu0 0
  %57 = vmatpush1.bf16.msra.mxu0 0
  %58 = vmatprep.subr.bf16.mxu0 0
  %59 = vmatpush1.bf16.msra.mxu0 0
  %60 = vmatprep.subr.bf16.mxu0 0
  %61 = vmatpush1.bf16.msra.mxu0 0
  %62 = vmatprep.subr.bf16.mxu0 0
  %63 = vmatpush1.bf16.msra.mxu0 0
  %64 = vmatprep.subr.bf16.mxu0 0
  %65 = vmatpush1.bf16.msra.mxu0 0
  %66 = vmatprep.mubr.bf16.mxu0 0
  %67 = vmatmul.mubr.bf16.gmra.mrb[0].mxu0 %v32
  %v68 = vpop.f32.mrb[0].mxu0
  %v69 = vadd.f32 0.0, %v68
  %v70 = vpop.f32.mrb[0].mxu0
  %v71 = vpop.f32.mrb[0].mxu0
  %v72 = vadd.f32 0.0, %v71
  %v73 = vpop.f32.mrb[0].mxu0
  %74 = vdwg.mxu0
  %v75 = vadd.f32 %v22, %v69
  %v76 = vadd.f32 %v23, %v72
  %vm77 = vcmask 392192
  %78 = vst.msk [vmem:[#allocation2] sm:$0xff] %vm77, %v75
  %79 = vst.msk [vmem:[#allocation2 + $0x8] sm:$0xff] %vm77, %v76
  // Predicated region
  $region18: #{bb_bart_encoder_layer.14} parent=0 // pred_check
    %p80 = pneg %p15
  $region19: #{bb_bart_encoder_layer.14} parent=0 // pred_check_branch
    %82 = sbr.rel (%p80) target = $region21
  $region20: #{bb_bart_encoder_layer.14} parent=0 // pred_region
    %v83 = vld [vmem:[#allocation2] sm:$0xff]
    %v84 = vld [vmem:[#allocation2 + $0x8] sm:$0xff]
    %v85 = vld [vmem:[%s2] sm:$0x1]
    %v87 = vlaneseq
    %v88 = vshrl.u32 %v87, 7
    %v89 = vsub.s32 0, %v88
    %v90 = vrot.slane %v85, %v89
    %v92 = vadd.f32 %v83, %v90
    %v93 = vadd.f32 %v84, %v90
    %v94 = vpack.c.bf16 %v93, %v92
    %v96 = vunpack.c.l.b16 %v94
    %v97 = vunpack.c.h.b16 %v94
    %v98 = vpack.c.b16 %v96, %v96
    %v99 = vpack.c.b16 %v97, %v97
    %vm102 = vcmask 388096
    %103 = vst.msk [vmem:[%s3] sm:$0xf] %vm102, %v98
    %104 = vst.msk [vmem:[%s3 + $0x4] sm:$0xf] %vm102, %v99
  $region21: #{bb_bart_encoder_layer.14} parent=0 // pred_fallthru
    _
  // Predicated region
  $region22: #{bb_bart_encoder_layer.14} parent=0 // pred_check
    _
  $region23: #{bb_bart_encoder_layer.14} parent=0 // pred_check_branch
    %106 = sbr.rel (0) target = $region25
  $region24: #{bb_bart_encoder_layer.14} parent=0 // pred_region
    _
  $region25: #{bb_bart_encoder_layer.14} parent=0 // pred_fallthru
    _
  // Predicated region
  $region26: #{bb_bart_encoder_layer.14} parent=0 // pred_check
    _
  $region27: #{bb_bart_encoder_layer.14} parent=0 // pred_check_branch
    %108 = sbr.rel (0) target = $region29
  $region28: #{bb_bart_encoder_layer.14} parent=0 // pred_region
    _
  $region29: #{bb_bart_encoder_layer.14} parent=0 // pred_fallthru
    _

// kernel: bb_bart_encoder_layer.16
$region0: #{bb_bart_encoder_layer.16}
  #allocation0 [shape = 'u32[]', space=smem, size = 0x4, offset = 0x4, fixed_abs, tag = 'smem constant byte address 0x4 - core index']
  #allocation1 [shape = 'u32[144,128]{1,0:T(1,128)}', space=vmem, size = 0x12000, scoped, tag = 'internal scratch']
  #allocation2 [shape = 'f32[16,16]{1,0:T(8,128)}', space=vmem, size = 0x2000, scoped, tag = 'scratch operand']
  %s0 = inlined_call_operand.vmem [shape: bf16[16,16], index: 0, kind: input, shape index: {}]
  %s1 = inlined_call_operand.vmem [shape: f32[16,16], index: 1, kind: input, shape index: {}]
  %s2 = inlined_call_operand.vmem [shape: f32[1,16], index: 2, kind: input, shape index: {}]
  %s3 = inlined_call_operand.vmem [shape: f32[16,16], index: 3, kind: input, shape index: {}]
  %s4 = inlined_call_operand.vmem [shape: f32[16,16], index: 4, kind: output, shape index: {}]
  %s5 = sld [smem:[#allocation0]]
  $region34: #{bb_bart_encoder_layer.16} parent=0
    _
  %s7 = ssub.s32 1, %s5
  %s8 = scalar_select 0, %s7, %s5
  // Predicated region
  $region2: #{bb_bart_encoder_layer.16} parent=0 // pred_check
    _
  $region3: #{bb_bart_encoder_layer.16} parent=0 // pred_check_branch
    %10 = sbr.rel (0) target = $region5
  $region4: #{bb_bart_encoder_layer.16} parent=0 // pred_region
    _
  $region5: #{bb_bart_encoder_layer.16} parent=0 // pred_fallthru
    _
  // Predicated region
  $region6: #{bb_bart_encoder_layer.16} parent=0 // pred_check
    _
  $region7: #{bb_bart_encoder_layer.16} parent=0 // pred_check_branch
    %12 = sbr.rel (0) target = $region9
  $region8: #{bb_bart_encoder_layer.16} parent=0 // pred_region
    _
  $region9: #{bb_bart_encoder_layer.16} parent=0 // pred_fallthru
    _
  // Predicated region
  $region10: #{bb_bart_encoder_layer.16} parent=0 // pred_check
    _
  $region11: #{bb_bart_encoder_layer.16} parent=0 // pred_check_branch
    %14 = sbr.rel (0) target = $region13
  $region12: #{bb_bart_encoder_layer.16} parent=0 // pred_region
    _
  $region13: #{bb_bart_encoder_layer.16} parent=0 // pred_fallthru
    _
  // Predicated region
  $region14: #{bb_bart_encoder_layer.16} parent=0 // pred_check
    _
  $region15: #{bb_bart_encoder_layer.16} parent=0 // pred_check_branch
    %16 = sbr.rel (0) target = $region17
  $region16: #{bb_bart_encoder_layer.16} parent=0 // pred_region
    _
  $region17: #{bb_bart_encoder_layer.16} parent=0 // pred_fallthru
    _
  %p18 = scmp.eq.s32.totalorder 0, 0
  // Predicated region
  $region18: #{bb_bart_encoder_layer.16} parent=0 // pred_check
    %p19 = pneg %p18
  $region19: #{bb_bart_encoder_layer.16} parent=0 // pred_check_branch
    %21 = sbr.rel (%p19) target = $region21
  $region20: #{bb_bart_encoder_layer.16} parent=0 // pred_region
    %vm22 = vcmask 130048
    %23 = vst.msk [vmem:[#allocation2] sm:$0xff] %vm22, 0.0
    %24 = vst.msk [vmem:[#allocation2 + $0x8] sm:$0xff] %vm22, 0.0
  $region21: #{bb_bart_encoder_layer.16} parent=0 // pred_fallthru
    _
  %v25 = vld [vmem:[#allocation2] sm:$0xff]
  %v26 = vld [vmem:[#allocation2 + $0x8] sm:$0xff]
  %v27 = vld [vmem:[%s0] sm:$0xf]
  %v28 = vld [vmem:[%s0 + $0x4] sm:$0xf]
  %v29 = vld [vmem:[%s1] sm:$0xff]
  %v30 = vld [vmem:[%s1 + $0x8] sm:$0xff]
  %v31 = vpack.c.bf16 %v30, %v29
  %v34 = vunpack.c.l.b16 %v27
  %v35 = vunpack.c.l.b16 %v28
  %v36 = vpack.c.b16 %v35, %v34
  %vm37 = vcmask 130048
  %v39 = vsel %vm37, %v36, 0
  %41 = vmatprep.subr.bf16.mxu0 0
  %42 = vmatpush1.bf16.msra.mxu0 %v31
  %43 = vmatprep.subr.bf16.mxu0 0
  %44 = vmatpush1.bf16.msra.mxu0 0
  %45 = vmatprep.subr.bf16.mxu0 0
  %46 = vmatpush1.bf16.msra.mxu0 0
  %47 = vmatprep.subr.bf16.mxu0 0
  %48 = vmatpush1.bf16.msra.mxu0 0
  %49 = vmatprep.subr.bf16.mxu0 0
  %50 = vmatpush1.bf16.msra.mxu0 0
  %51 = vmatprep.subr.bf16.mxu0 0
  %52 = vmatpush1.bf16.msra.mxu0 0
  %53 = vmatprep.subr.bf16.mxu0 0
  %54 = vmatpush1.bf16.msra.mxu0 0
  %55 = vmatprep.subr.bf16.mxu0 0
  %56 = vmatpush1.bf16.msra.mxu0 0
  %57 = vmatprep.subr.bf16.mxu0 0
  %58 = vmatpush1.bf16.msra.mxu0 0
  %59 = vmatprep.subr.bf16.mxu0 0
  %60 = vmatpush1.bf16.msra.mxu0 0
  %61 = vmatprep.subr.bf16.mxu0 0
  %62 = vmatpush1.bf16.msra.mxu0 0
  %63 = vmatprep.subr.bf16.mxu0 0
  %64 = vmatpush1.bf16.msra.mxu0 0
  %65 = vmatprep.subr.bf16.mxu0 0
  %66 = vmatpush1.bf16.msra.mxu0 0
  %67 = vmatprep.subr.bf16.mxu0 0
  %68 = vmatpush1.bf16.msra.mxu0 0
  %69 = vmatprep.subr.bf16.mxu0 0
  %70 = vmatpush1.bf16.msra.mxu0 0
  %71 = vmatprep.subr.bf16.mxu0 0
  %72 = vmatpush1.bf16.msra.mxu0 0
  %73 = vmatprep.mubr.bf16.mxu0 0
  %74 = vmatmul.mubr.bf16.gmra.mrb[0].mxu0 %v39
  %v75 = vpop.f32.mrb[0].mxu0
  %v76 = vadd.f32 0.0, %v75
  %v77 = vpop.f32.mrb[0].mxu0
  %v78 = vpop.f32.mrb[0].mxu0
  %v79 = vadd.f32 0.0, %v78
  %v80 = vpop.f32.mrb[0].mxu0
  %81 = vdwg.mxu0
  %v82 = vadd.f32 %v25, %v76
  %v83 = vadd.f32 %v26, %v79
  %84 = vst.msk [vmem:[#allocation2] sm:$0xff] %vm37, %v82
  %85 = vst.msk [vmem:[#allocation2 + $0x8] sm:$0xff] %vm37, %v83
  // Predicated region
  $region22: #{bb_bart_encoder_layer.16} parent=0 // pred_check
    %p86 = pneg %p18
  $region23: #{bb_bart_encoder_layer.16} parent=0 // pred_check_branch
    %88 = sbr.rel (%p86) target = $region25
  $region24: #{bb_bart_encoder_layer.16} parent=0 // pred_region
    %v89 = vld [vmem:[#allocation2] sm:$0xff]
    %v90 = vld [vmem:[#allocation2 + $0x8] sm:$0xff]
    %v91 = vld [vmem:[%s2] sm:$0x1]
    %v93 = vlaneseq
    %v94 = vshrl.u32 %v93, 7
    %v95 = vsub.s32 0, %v94
    %v96 = vrot.slane %v91, %v95
    %v98 = vadd.f32 %v89, %v96
    %v99 = vadd.f32 %v90, %v96
    %v100 = vld [vmem:[%s3] sm:$0xff]
    %v101 = vld [vmem:[%s3 + $0x8] sm:$0xff]
    %v102 = vadd.f32 %v98, %v100
    %v103 = vadd.f32 %v99, %v101
    %104 = vst.msk [vmem:[%s4] sm:$0xff] %vm37, %v102
    %105 = vst.msk [vmem:[%s4 + $0x8] sm:$0xff] %vm37, %v103
  $region25: #{bb_bart_encoder_layer.16} parent=0 // pred_fallthru
    _
  // Predicated region
  $region26: #{bb_bart_encoder_layer.16} parent=0 // pred_check
    _
  $region27: #{bb_bart_encoder_layer.16} parent=0 // pred_check_branch
    %107 = sbr.rel (0) target = $region29
  $region28: #{bb_bart_encoder_layer.16} parent=0 // pred_region
    _
  $region29: #{bb_bart_encoder_layer.16} parent=0 // pred_fallthru
    _
  // Predicated region
  $region30: #{bb_bart_encoder_layer.16} parent=0 // pred_check
    _
  $region31: #{bb_bart_encoder_layer.16} parent=0 // pred_check_branch
    %109 = sbr.rel (0) target = $region33
  $region32: #{bb_bart_encoder_layer.16} parent=0 // pred_region
    _
  $region33: #{bb_bart_encoder_layer.16} parent=0 // pred_fallthru
    _

// kernel: bb_bart_encoder_layer.17
$region0: #{bb_bart_encoder_layer.17}
  #allocation0 [shape = 'u32[]', space=smem, size = 0x4, offset = 0x4, fixed_abs, tag = 'smem constant byte address 0x4 - core index']
  #allocation1 [shape = 'u32[144,128]{1,0:T(1,128)}', space=vmem, size = 0x12000, scoped, tag = 'internal scratch']
  #allocation2 [shape = 'f32[16,16]{1,0:T(8,128)}', space=vmem, size = 0x2000, scoped, tag = 'scratch operand']
  %s0 = inlined_call_operand.vmem [shape: f32[16,16], index: 0, kind: input, shape index: {}, may-alias: {0,3}]
  %s1 = inlined_call_operand.vmem [shape: f32[16,16], index: 1, kind: input, shape index: {}]
  %s2 = inlined_call_operand.vmem [shape: f32[1,16], index: 2, kind: input, shape index: {}]
  %s3 = inlined_call_operand.vmem [shape: f32[16,16], index: 3, kind: input, shape index: {}, may-alias: {0,3}]
  %s4 = inlined_call_operand.vmem [shape: f32[1,16], index: 4, kind: input, shape index: {}]
  %s5 = inlined_call_operand.vmem [shape: f32[1,16], index: 5, kind: input, shape index: {}]
  %s6 = inlined_call_operand.hbm [shape: f32[16,16], index: 6, kind: output, shape index: {}]
  %s7 = sld [smem:[#allocation0]]
  $region42: #{bb_bart_encoder_layer.17} parent=0
    _
  %s9 = ssub.s32 1, %s7
  %s10 = scalar_select 0, %s9, %s7
  $region1: #{bb_bart_encoder_layer.17} parent=0
    #allocation3 [shape = 'u8[8192]{0}', space=vmem, size = 0x2000, scoped, tag = 'output window, operand 0, single buffered']
    #allocation4 [shape = 's32[1]{0}', space=sflag, size = 0x4, scoped, tag = 'scoped memory for bb_bart_encoder_layer.17']
    %11 = vsyncpa [#allocation4], 0
    // Predicated region
    $region2: #{bb_bart_encoder_layer.17} parent=1 // pred_check
      _
    $region3: #{bb_bart_encoder_layer.17} parent=1 // pred_check_branch
      %13 = sbr.rel (0) target = $region5
    $region4: #{bb_bart_encoder_layer.17} parent=1 // pred_region
      _
    $region5: #{bb_bart_encoder_layer.17} parent=1 // pred_fallthru
      _
    // Predicated region
    $region6: #{bb_bart_encoder_layer.17} parent=1 // pred_check
      _
    $region7: #{bb_bart_encoder_layer.17} parent=1 // pred_check_branch
      %15 = sbr.rel (0) target = $region9
    $region8: #{bb_bart_encoder_layer.17} parent=1 // pred_region
      _
    $region9: #{bb_bart_encoder_layer.17} parent=1 // pred_fallthru
      _
    // Predicated region
    $region10: #{bb_bart_encoder_layer.17} parent=1 // pred_check
      _
    $region11: #{bb_bart_encoder_layer.17} parent=1 // pred_check_branch
      %17 = sbr.rel (0) target = $region13
    $region12: #{bb_bart_encoder_layer.17} parent=1 // pred_region
      _
    $region13: #{bb_bart_encoder_layer.17} parent=1 // pred_fallthru
      _
    // Predicated region
    $region14: #{bb_bart_encoder_layer.17} parent=1 // pred_check
      _
    $region15: #{bb_bart_encoder_layer.17} parent=1 // pred_check_branch
      %19 = sbr.rel (0) target = $region17
    $region16: #{bb_bart_encoder_layer.17} parent=1 // pred_region
      _
    $region17: #{bb_bart_encoder_layer.17} parent=1 // pred_fallthru
      _
    // Predicated region
    $region18: #{bb_bart_encoder_layer.17} parent=1 // pred_check
      _
    $region19: #{bb_bart_encoder_layer.17} parent=1 // pred_check_branch
      %21 = sbr.rel (0) target = $region21
    $region20: #{bb_bart_encoder_layer.17} parent=1 // pred_region
      _
    $region21: #{bb_bart_encoder_layer.17} parent=1 // pred_fallthru
      _
    // Predicated region
    $region22: #{bb_bart_encoder_layer.17} parent=1 // pred_check
      _
    $region23: #{bb_bart_encoder_layer.17} parent=1 // pred_check_branch
      %23 = sbr.rel (0) target = $region25
    $region24: #{bb_bart_encoder_layer.17} parent=1 // pred_region
      _
    $region25: #{bb_bart_encoder_layer.17} parent=1 // pred_fallthru
      _
    %p25 = scmp.eq.s32.totalorder 0, 0
    // Predicated region
    $region26: #{bb_bart_encoder_layer.17} parent=1 // pred_check
      %p26 = pneg %p25
    $region27: #{bb_bart_encoder_layer.17} parent=1 // pred_check_branch
      %28 = sbr.rel (%p26) target = $region29
    $region28: #{bb_bart_encoder_layer.17} parent=1 // pred_region
      %vm29 = vcmask 130048
      %30 = vst.msk [vmem:[#allocation2] sm:$0xff] %vm29, 0.0
      %31 = vst.msk [vmem:[#allocation2 + $0x8] sm:$0xff] %vm29, 0.0
    $region29: #{bb_bart_encoder_layer.17} parent=1 // pred_fallthru
      _
    %v32 = vld [vmem:[#allocation2] sm:$0xff]
    %v33 = vld [vmem:[#allocation2 + $0x8] sm:$0xff]
    %v34 = vld [vmem:[%s0] sm:$0xff]
    %v35 = vld [vmem:[%s0 + $0x8] sm:$0xff]
    %v36 = vpack.c.bf16 %v35, %v34
    %v37 = vld [vmem:[%s1] sm:$0xff]
    %v38 = vld [vmem:[%s1 + $0x8] sm:$0xff]
    %v39 = vpack.c.bf16 %v38, %v37
    %vm40 = vcmask 130048
    %v42 = vsel %vm40, %v36, 0
    %44 = vmatprep.subr.bf16.mxu0 0
    %45 = vmatpush1.bf16.msra.mxu0 %v39
    %46 = vmatprep.subr.bf16.mxu0 0
    %47 = vmatpush1.bf16.msra.mxu0 0
    %48 = vmatprep.subr.bf16.mxu0 0
    %49 = vmatpush1.bf16.msra.mxu0 0
    %50 = vmatprep.subr.bf16.mxu0 0
    %51 = vmatpush1.bf16.msra.mxu0 0
    %52 = vmatprep.subr.bf16.mxu0 0
    %53 = vmatpush1.bf16.msra.mxu0 0
    %54 = vmatprep.subr.bf16.mxu0 0
    %55 = vmatpush1.bf16.msra.mxu0 0
    %56 = vmatprep.subr.bf16.mxu0 0
    %57 = vmatpush1.bf16.msra.mxu0 0
    %58 = vmatprep.subr.bf16.mxu0 0
    %59 = vmatpush1.bf16.msra.mxu0 0
    %60 = vmatprep.subr.bf16.mxu0 0
    %61 = vmatpush1.bf16.msra.mxu0 0
    %62 = vmatprep.subr.bf16.mxu0 0
    %63 = vmatpush1.bf16.msra.mxu0 0
    %64 = vmatprep.subr.bf16.mxu0 0
    %65 = vmatpush1.bf16.msra.mxu0 0
    %66 = vmatprep.subr.bf16.mxu0 0
    %67 = vmatpush1.bf16.msra.mxu0 0
    %68 = vmatprep.subr.bf16.mxu0 0
    %69 = vmatpush1.bf16.msra.mxu0 0
    %70 = vmatprep.subr.bf16.mxu0 0
    %71 = vmatpush1.bf16.msra.mxu0 0
    %72 = vmatprep.subr.bf16.mxu0 0
    %73 = vmatpush1.bf16.msra.mxu0 0
    %74 = vmatprep.subr.bf16.mxu0 0
    %75 = vmatpush1.bf16.msra.mxu0 0
    %76 = vmatprep.mubr.bf16.mxu0 0
    %77 = vmatmul.mubr.bf16.gmra.mrb[0].mxu0 %v42
    %v78 = vpop.f32.mrb[0].mxu0
    %v79 = vadd.f32 0.0, %v78
    %v80 = vpop.f32.mrb[0].mxu0
    %v81 = vpop.f32.mrb[0].mxu0
    %v82 = vadd.f32 0.0, %v81
    %v83 = vpop.f32.mrb[0].mxu0
    %84 = vdwg.mxu0
    %v85 = vadd.f32 %v32, %v79
    %v86 = vadd.f32 %v33, %v82
    %87 = vst.msk [vmem:[#allocation2] sm:$0xff] %vm40, %v85
    %88 = vst.msk [vmem:[#allocation2 + $0x8] sm:$0xff] %vm40, %v86
    // Predicated region
    $region30: #{bb_bart_encoder_layer.17} parent=1 // pred_check
      %p89 = pneg %p25
    $region31: #{bb_bart_encoder_layer.17} parent=1 // pred_check_branch
      %91 = sbr.rel (%p89) target = $region33
    $region32: #{bb_bart_encoder_layer.17} parent=1 // pred_region
      %v92 = vld [vmem:[#allocation2] sm:$0xff]
      %v93 = vld [vmem:[#allocation2 + $0x8] sm:$0xff]
      %v94 = vld [vmem:[%s2] sm:$0x1]
      %v96 = vlaneseq
      %v97 = vshrl.u32 %v96, 7
      %v98 = vsub.s32 0, %v97
      %v99 = vrot.slane %v94, %v98
      %v101 = vadd.f32 %v92, %v99
      %v102 = vadd.f32 %v93, %v99
      %v103 = vmul.f32 %v101, 0.5
      %v104 = vmul.f32 %v102, 0.5
      %v105 = vmul.f32 %v101, 0.70710677
      %v106 = vmul.f32 %v102, 0.70710677
      %v107 = verf.f32.pop %v105
      %v108 = verf.f32.pop %v106
      %v109 = vadd.f32 %v107, 1.0
      %v110 = vadd.f32 %v108, 1.0
      %v111 = vmul.f32 %v103, %v109
      %v112 = vmul.f32 %v104, %v110
      %v113 = vld [vmem:[%s3] sm:$0xff]
      %v114 = vld [vmem:[%s3 + $0x8] sm:$0xff]
      %v115 = vadd.f32 %v111, %v113
      %v116 = vadd.f32 %v112, %v114
      %v117 = vsel %vm40, %v115, 0.0
      %118 = vadd.xlane.f32.xlu0 %v117
      %v119 = vpop.xlane.xlu0 %118
      %v120 = vsel %vm40, %v116, 0.0
      %121 = vadd.xlane.f32.xlu0 %v120
      %v122 = vpop.xlane.xlu0 %121
      %v123 = vrcp.pop 16.0
      %v124 = vmul.f32 %v119, %v123
      %v125 = vmul.f32 %v122, %v123
      %v126 = vsub.f32 %v115, %v124
      %v127 = vsub.f32 %v116, %v125
      %v128 = vmul.f32 %v126, %v126
      %v129 = vmul.f32 %v127, %v127
      %v130 = vsel %vm40, %v128, 0.0
      %131 = vadd.xlane.f32.xlu0 %v130
      %v132 = vpop.xlane.xlu0 %131
      %v133 = vsel %vm40, %v129, 0.0
      %134 = vadd.xlane.f32.xlu0 %v133
      %v135 = vpop.xlane.xlu0 %134
      %v136 = vmul.f32 %v132, %v123
      %v137 = vmul.f32 %v135, %v123
      %v138 = vadd.f32 %v136, 1e-05
      %v139 = vadd.f32 %v137, 1e-05
      %v140 = vrsqrt.pop %v138
      %v141 = vrsqrt.pop %v139
      %v142 = vmul.f32 %v126, %v140
      %v143 = vmul.f32 %v127, %v141
      %v144 = vld [vmem:[%s4] sm:$0x1]
      %v146 = vlaneseq
      %v147 = vshrl.u32 %v146, 7
      %v148 = vsub.s32 0, %v147
      %v149 = vrot.slane %v144, %v148
      %v151 = vmul.f32 %v142, %v149
      %v152 = vmul.f32 %v143, %v149
      %v153 = vld [vmem:[%s5] sm:$0x1]
      %v155 = vlaneseq
      %v156 = vshrl.u32 %v155, 7
      %v157 = vsub.s32 0, %v156
      %v158 = vrot.slane %v153, %v157
      %v160 = vadd.f32 %v151, %v158
      %v161 = vadd.f32 %v152, %v158
      %162 = vst.msk [vmem:[#allocation3] sm:$0xff] %vm40, %v160
      %163 = vst.msk [vmem:[#allocation3 + $0x8] sm:$0xff] %vm40, %v161
    $region33: #{bb_bart_encoder_layer.17} parent=1 // pred_fallthru
      _
    // Predicated region
    $region34: #{bb_bart_encoder_layer.17} parent=1 // pred_check
      _
    $region35: #{bb_bart_encoder_layer.17} parent=1 // pred_check_branch
      %165 = sbr.rel (0) target = $region37
    $region36: #{bb_bart_encoder_layer.17} parent=1 // pred_region
      %s167 = ssub.s32 256, 256
      %168 = vsyncadd [#allocation4], %s167
      %s169 = sshll.u32 [#allocation3], 4
      %s170 = int_to_ptr.vmem [resolvable:$true] %s169
      %175 = dma.vmem_to_hbm [thread:$0]  %s170, 256, %s6, [#allocation4], 128, 128, 8
    $region37: #{bb_bart_encoder_layer.17} parent=1 // pred_fallthru
      _
    // Predicated region
    $region38: #{bb_bart_encoder_layer.17} parent=1 // pred_check
      _
    $region39: #{bb_bart_encoder_layer.17} parent=1 // pred_check_branch
      %177 = sbr.rel (0) target = $region41
    $region40: #{bb_bart_encoder_layer.17} parent=1 // pred_region
      %178 = dma.done [#allocation4], 256
    $region41: #{bb_bart_encoder_layer.17} parent=1 // pred_fallthru
      _
    %179 = vsyncpa [#allocation4], 1

// kernel: bb_bart_encoder_layer.15
$region0: #{bb_bart_encoder_layer.15}
  #allocation0 [shape = 'u32[]', space=smem, size = 0x4, offset = 0x4, fixed_abs, tag = 'smem constant byte address 0x4 - core index']
  #allocation1 [shape = 'u32[144,128]{1,0:T(1,128)}', space=vmem, size = 0x12000, scoped, tag = 'internal scratch']
  #allocation2 [shape = 'f32[2,8,1]{2,1,0:T(8,128)}', space=vmem, size = 0x2000, scoped, tag = 'scratch operand']
  #allocation3 [shape = 'f32[2,8,1]{2,1,0:T(8,128)}', space=vmem, size = 0x2000, scoped, tag = 'scratch operand']
  #allocation4 [shape = 'f32[2,8,8]{2,1,0:T(8,128)}', space=vmem, size = 0x2000, scoped, tag = 'scratch operand']
  %s0 = inlined_call_operand.vmem [shape: bf16[2,8,48], index: 0, kind: input, shape index: {}, may-alias: {0,1}]
  %s1 = inlined_call_operand.vmem [shape: bf16[2,8,48], index: 1, kind: input, shape index: {}, may-alias: {0,1}]
  %s2 = inlined_call_operand.vmem [shape: f32[2,8,8], index: 2, kind: input, shape index: {}]
  %s3 = inlined_call_operand.vmem [shape: bf16[2,8,16], index: 3, kind: output, shape index: {}]
  %s4 = sld [smem:[#allocation0]]
  $region53: #{bb_bart_encoder_layer.15} parent=0
    _
  %s6 = ssub.s32 1, %s4
  %s7 = scalar_select 0, %s6, %s4
  loop: start=0, step=1, limit=4
  $region2: #{bb_bart_encoder_layer.15} parent=0 // loop_pre_header
    _
  $region3: #{bb_bart_encoder_layer.15} parent=0 // loop_header
    %s9 = sphi 0, %s13
    %p10 = scmp.ge.s32.totalorder %s9, 4
    %s16 = sphi 0, %s42
    %s17 = sphi 0, %s38
    %s18 = sphi 0, %s34
    %s19 = sphi 0, %s30
    %s20 = sphi 0, %s16
    %s21 = sphi 0, %s17
    %s22 = sphi 0, %s18
    %s23 = sphi 0, %s19
    %s24 = sphi 0, %s20
    %s25 = sphi 0, %s21
    %s26 = sphi 0, %s22
    %s27 = sphi 0, %s23
    %s47 = sphi 0, %s49
    %s50 = sphi 0, %s47
    %s51 = sphi 0, %s50
    %s67 = sphi 0, %s51
    %s75 = sphi 0, %s77
    %s78 = sphi 0, %s75
    %s79 = sphi 0, %s78
    %s95 = sphi 0, %s79
    %s105 = sphi 0, %s107
    %s108 = sphi 0, %s105
    %s109 = sphi 0, %s108
    %s125 = sphi 0, %s109
    %s133 = sphi 0, %s135
    %s136 = sphi 0, %s133
    %s137 = sphi 0, %s136
    %s153 = sphi 0, %s137
  $region4: #{bb_bart_encoder_layer.15} parent=0 // loop_header_branch
    %12 = sbr.rel (%p10) target = $region8
  $region5: #{bb_bart_encoder_layer.15} parent=0 // loop_body
    %s14 = ssub.s32 %s9, 1
    %s15 = ssub.s32 %s9, 2
    %s28 = sadd.s32 1, %s19
    %p29 = scmp.ge.s32.totalorder %s28, 1
    %s30 = scalar_select %p29, 0, %s28
    %s31 = sadd.s32 1, %s18
    %s32 = scalar_select %p29, %s31, %s18
    %p33 = scmp.ge.s32.totalorder %s32, 1
    %s34 = scalar_select %p33, 0, %s32
    %s35 = sadd.s32 1, %s17
    %s36 = scalar_select %p33, %s35, %s17
    %p37 = scmp.ge.s32.totalorder %s36, 1
    %s38 = scalar_select %p37, 0, %s36
    %s39 = sadd.s32 1, %s16
    %s40 = scalar_select %p37, %s39, %s16
    %p41 = scmp.ge.s32.totalorder %s40, 2
    %s42 = scalar_select %p41, 0, %s40
    %s43 = ssub.s32 %s16, %s42
    %s44 = ssub.s32 %s18, %s34
    %s45 = sor.u32 %s43, %s44
    %p46 = scmp.eq.s32.totalorder %s45, 0
    %s48 = sadd.s32 %s47, 1
    %s49 = scalar_select %p46, %s47, %s48
    %p52 = pneg %p46
    %p53 = scmp.eq.s32.totalorder %s9, 1
    %p54 = por %p52, %p53
    %p55 = scmp.ne.s32.totalorder %s47, %s50
    %p56 = scmp.eq.s32.totalorder %s9, 0
    %p57 = por %p55, %p56
    %p58 = scmp.ne.s32.totalorder %s47, %s50
    %p59 = scmp.eq.s32.totalorder %s14, 1
    %p60 = por %p58, %p59
    %p61 = scmp.ne.s32.totalorder %s50, %s51
    %p62 = scmp.eq.s32.totalorder %s14, 0
    %p63 = por %p61, %p62
    %p64 = scmp.ne.s32.totalorder %s50, %s51
    %p65 = scmp.eq.s32.totalorder %s15, 1
    %p66 = por %p64, %p65
    %p68 = scmp.ne.s32.totalorder %s51, %s67
    %p69 = scmp.eq.s32.totalorder %s15, 0
    %p70 = por %p68, %p69
    %s71 = ssub.s32 %s16, %s42
    %s72 = ssub.s32 %s19, %s30
    %s73 = sor.u32 %s71, %s72
    %p74 = scmp.eq.s32.totalorder %s73, 0
    %s76 = sadd.s32 %s75, 1
    %s77 = scalar_select %p74, %s75, %s76
    %p80 = pneg %p74
    %p81 = scmp.eq.s32.totalorder %s9, 1
    %p82 = por %p80, %p81
    %p83 = scmp.ne.s32.totalorder %s75, %s78
    %p84 = scmp.eq.s32.totalorder %s9, 0
    %p85 = por %p83, %p84
    %p86 = scmp.ne.s32.totalorder %s75, %s78
    %p87 = scmp.eq.s32.totalorder %s14, 1
    %p88 = por %p86, %p87
    %p89 = scmp.ne.s32.totalorder %s78, %s79
    %p90 = scmp.eq.s32.totalorder %s14, 0
    %p91 = por %p89, %p90
    %p92 = scmp.ne.s32.totalorder %s78, %s79
    %p93 = scmp.eq.s32.totalorder %s15, 1
    %p94 = por %p92, %p93
    %p96 = scmp.ne.s32.totalorder %s79, %s95
    %p97 = scmp.eq.s32.totalorder %s15, 0
    %p98 = por %p96, %p97
    %s99 = ssub.s32 %s16, %s42
    %s100 = ssub.s32 %s18, %s34
    %s101 = sor.u32 %s99, %s100
    %s102 = ssub.s32 %s19, %s30
    %s103 = sor.u32 %s101, %s102
    %p104 = scmp.eq.s32.totalorder %s103, 0
    %s106 = sadd.s32 %s105, 1
    %s107 = scalar_select %p104, %s105, %s106
    %p110 = pneg %p104
    %p111 = scmp.eq.s32.totalorder %s9, 1
    %p112 = por %p110, %p111
    %p113 = scmp.ne.s32.totalorder %s105, %s108
    %p114 = scmp.eq.s32.totalorder %s9, 0
    %p115 = por %p113, %p114
    %p116 = scmp.ne.s32.totalorder %s105, %s108
    %p117 = scmp.eq.s32.totalorder %s14, 1
    %p118 = por %p116, %p117
    %p119 = scmp.ne.s32.totalorder %s108, %s109
    %p120 = scmp.eq.s32.totalorder %s14, 0
    %p121 = por %p119, %p120
    %p122 = scmp.ne.s32.totalorder %s108, %s109
    %p123 = scmp.eq.s32.totalorder %s15, 1
    %p124 = por %p122, %p123
    %p126 = scmp.ne.s32.totalorder %s109, %s125
    %p127 = scmp.eq.s32.totalorder %s15, 0
    %p128 = por %p126, %p127
    %s129 = ssub.s32 %s16, %s42
    %s130 = ssub.s32 %s18, %s34
    %s131 = sor.u32 %s129, %s130
    %p132 = scmp.eq.s32.totalorder %s131, 0
    %s134 = sadd.s32 %s133, 1
    %s135 = scalar_select %p132, %s133, %s134
    %p138 = pneg %p132
    %p139 = scmp.eq.s32.totalorder %s9, 1
    %p140 = por %p138, %p139
    %p141 = scmp.ne.s32.totalorder %s133, %s136
    %p142 = scmp.eq.s32.totalorder %s9, 0
    %p143 = por %p141, %p142
    %p144 = scmp.ne.s32.totalorder %s133, %s136
    %p145 = scmp.eq.s32.totalorder %s14, 1
    %p146 = por %p144, %p145
    %p147 = scmp.ne.s32.totalorder %s136, %s137
    %p148 = scmp.eq.s32.totalorder %s14, 0
    %p149 = por %p147, %p148
    %p150 = scmp.ne.s32.totalorder %s136, %s137
    %p151 = scmp.eq.s32.totalorder %s15, 1
    %p152 = por %p150, %p151
    %p154 = scmp.ne.s32.totalorder %s137, %s153
    %p155 = scmp.eq.s32.totalorder %s15, 0
    %p156 = por %p154, %p155
    %p157 = scmp.le.s32.totalorder 1, %s9
    %p158 = scmp.lt.s32.totalorder %s9, 3
    %p159 = pnand %p157, %p158
    %p160 = pneg %p159
    // Predicated region
    $region9: #{bb_bart_encoder_layer.15} parent=5 // pred_check
      _
    $region10: #{bb_bart_encoder_layer.15} parent=5 // pred_check_branch
      %162 = sbr.rel (%p159) target = $region12
    $region11: #{bb_bart_encoder_layer.15} parent=5 // pred_region
      %s163 = ssub.s32 %s9, 1
    $region12: #{bb_bart_encoder_layer.15} parent=5 // pred_fallthru
      _
    %p164 = scmp.lt.s32.totalorder %s9, 2
    // Predicated region
    $region13: #{bb_bart_encoder_layer.15} parent=5 // pred_check
      %p165 = pneg %p164
    $region14: #{bb_bart_encoder_layer.15} parent=5 // pred_check_branch
      %167 = sbr.rel (%p165) target = $region16
    $region15: #{bb_bart_encoder_layer.15} parent=5 // pred_region
      // Predicated region
      $region17: #{bb_bart_encoder_layer.15} parent=15 // pred_check
        %p168 = pneg %p57
      $region18: #{bb_bart_encoder_layer.15} parent=15 // pred_check_branch
        %170 = sbr.rel (%p168) target = $region20
      $region19: #{bb_bart_encoder_layer.15} parent=15 // pred_region
        %p171 = scmp.lt.s32.totalorder %s16, 1
        %s172 = scalar_select %p171, %s16, 1
        %p173 = scmp.lt.s32.totalorder %s18, 0
        %s174 = scalar_select %p173, %s18, 0
        %s175 = sadd.s32 %s174, %s172
        %s176 = smul.addr %s175, 4
        %s177 = scalar_lea.vmem %s0, %s176
      $region20: #{bb_bart_encoder_layer.15} parent=15 // pred_fallthru
        _
      // Predicated region
      $region21: #{bb_bart_encoder_layer.15} parent=15 // pred_check
        %p178 = pneg %p85
      $region22: #{bb_bart_encoder_layer.15} parent=15 // pred_check_branch
        %180 = sbr.rel (%p178) target = $region24
      $region23: #{bb_bart_encoder_layer.15} parent=15 // pred_region
        %p181 = scmp.lt.s32.totalorder %s16, 1
        %s182 = scalar_select %p181, %s16, 1
        %p183 = scmp.lt.s32.totalorder %s19, 0
        %s184 = scalar_select %p183, %s19, 0
        %s185 = sadd.s32 %s184, %s182
        %s186 = smul.addr %s185, 4
        %s187 = scalar_lea.vmem %s1, %s186
      $region24: #{bb_bart_encoder_layer.15} parent=15 // pred_fallthru
        _
      // Predicated region
      $region25: #{bb_bart_encoder_layer.15} parent=15 // pred_check
        %p188 = pneg %p115
      $region26: #{bb_bart_encoder_layer.15} parent=15 // pred_check_branch
        %190 = sbr.rel (%p188) target = $region28
      $region27: #{bb_bart_encoder_layer.15} parent=15 // pred_region
        %p191 = scmp.lt.s32.totalorder %s16, 1
        %s192 = scalar_select %p191, %s16, 1
        %p193 = scmp.lt.s32.totalorder %s18, 0
        %s194 = scalar_select %p193, %s18, 0
        %p195 = scmp.lt.s32.totalorder %s19, 0
        %s196 = scalar_select %p195, %s19, 0
        %s197 = sadd.s32 %s196, %s194
        %s198 = sadd.s32 %s197, %s192
        %s199 = smul.addr %s198, 8
        %s200 = scalar_lea.vmem %s2, %s199
      $region28: #{bb_bart_encoder_layer.15} parent=15 // pred_fallthru
        _
    $region16: #{bb_bart_encoder_layer.15} parent=5 // pred_fallthru
      _
    %p201 = scmp.le.s32.totalorder 1, %s9
    %p202 = scmp.lt.s32.totalorder %s9, 3
    %p203 = pnand %p201, %p202
    %p204 = pneg %p203
    // Predicated region
    $region29: #{bb_bart_encoder_layer.15} parent=5 // pred_check
      _
    $region30: #{bb_bart_encoder_layer.15} parent=5 // pred_check_branch
      %206 = sbr.rel (%p203) target = $region32
    $region31: #{bb_bart_encoder_layer.15} parent=5 // pred_region
      %s207 = ssub.s32 %s9, 1
      %p208 = scmp.lt.s32.totalorder %s20, 1
      %s209 = scalar_select %p208, %s20, 1
      %p210 = scmp.lt.s32.totalorder %s22, 0
      %s211 = scalar_select %p210, %s22, 0
      %s212 = sadd.s32 %s211, %s209
      %s213 = smul.addr %s212, 4
      %s214 = scalar_lea.vmem %s0, %s213
      %p215 = pneg %p63
      %p216 = pneg %p60
      %p217 = scmp.lt.s32.totalorder %s20, 1
      %s218 = scalar_select %p217, %s20, 1
      %p219 = scmp.lt.s32.totalorder %s23, 0
      %s220 = scalar_select %p219, %s23, 0
      %s221 = sadd.s32 %s220, %s218
      %s222 = smul.addr %s221, 4
      %s223 = scalar_lea.vmem %s1, %s222
      %p224 = pneg %p91
      %p225 = pneg %p88
      %p226 = scmp.lt.s32.totalorder %s20, 1
      %s227 = scalar_select %p226, %s20, 1
      %p228 = scmp.lt.s32.totalorder %s22, 0
      %s229 = scalar_select %p228, %s22, 0
      %p230 = scmp.lt.s32.totalorder %s23, 0
      %s231 = scalar_select %p230, %s23, 0
      %s232 = sadd.s32 %s231, %s229
      %s233 = sadd.s32 %s232, %s227
      %s234 = smul.addr %s233, 8
      %s235 = scalar_lea.vmem %s2, %s234
      %p236 = pneg %p121
      %p237 = pneg %p118
      %p238 = pneg %p149
      %p239 = pneg %p146
      %p240 = scmp.lt.s32.totalorder %s20, 1
      %s241 = scalar_select %p240, %s20, 1
      %p242 = scmp.lt.s32.totalorder %s22, 0
      %s243 = scalar_select %p242, %s22, 0
      %s244 = sadd.s32 %s243, %s241
      %s245 = smul.addr %s244, 4
      %s246 = scalar_lea.vmem %s3, %s245
      %p247 = scmp.lt.s32.totalorder %s20, 1
      %s248 = scalar_select %p247, %s20, 1
      %p249 = scmp.lt.s32.totalorder %s22, 0
      %s250 = scalar_select %p249, %s22, 0
      %s251 = sadd.s32 %s250, %s248
      %s252 = smul.addr %s251, 4
      %s253 = scalar_lea.vmem %s0, %s252
      %p254 = scmp.lt.s32.totalorder %s20, 1
      %s255 = scalar_select %p254, %s20, 1
      %p256 = scmp.lt.s32.totalorder %s23, 0
      %s257 = scalar_select %p256, %s23, 0
      %s258 = sadd.s32 %s257, %s255
      %s259 = smul.addr %s258, 4
      %s260 = scalar_lea.vmem %s1, %s259
      %p261 = scmp.lt.s32.totalorder %s20, 1
      %s262 = scalar_select %p261, %s20, 1
      %p263 = scmp.lt.s32.totalorder %s22, 0
      %s264 = scalar_select %p263, %s22, 0
      %p265 = scmp.lt.s32.totalorder %s23, 0
      %s266 = scalar_select %p265, %s23, 0
      %s267 = sadd.s32 %s266, %s264
      %s268 = sadd.s32 %s267, %s262
      %s269 = smul.addr %s268, 8
      %s270 = scalar_lea.vmem %s2, %s269
      %p271 = scmp.lt.s32.totalorder %s20, 1
      %s272 = scalar_select %p271, %s20, 1
      %p273 = scmp.lt.s32.totalorder %s22, 0
      %s274 = scalar_select %p273, %s22, 0
      %s275 = sadd.s32 %s274, %s272
      %s276 = smul.addr %s275, 4
      %s277 = scalar_lea.vmem %s3, %s276
      %p279 = scmp.eq.s32.totalorder %s23, 0
      // Predicated region
      $region33: #{bb_bart_encoder_layer.15} parent=31 // pred_check
        %p280 = pneg %p279
      $region34: #{bb_bart_encoder_layer.15} parent=31 // pred_check_branch
        %282 = sbr.rel (%p280) target = $region36
      $region35: #{bb_bart_encoder_layer.15} parent=31 // pred_region
        %vm283 = vcmask 7168
        %284 = vst.msk [vmem:[#allocation2] sm:$0xff] %vm283, -inf
        %285 = vst.msk [vmem:[#allocation2 + $0x8] sm:$0xff] %vm283, -inf
        %286 = vst.msk [vmem:[#allocation3] sm:$0xff] %vm283, 0.0
        %287 = vst.msk [vmem:[#allocation3 + $0x8] sm:$0xff] %vm283, 0.0
        %vm288 = vcmask 64512
        %289 = vst.msk [vmem:[#allocation4] sm:$0xff] %vm288, 0.0
        %290 = vst.msk [vmem:[#allocation4 + $0x8] sm:$0xff] %vm288, 0.0
      $region36: #{bb_bart_encoder_layer.15} parent=31 // pred_fallthru
        _
      %v291 = vld [vmem:[%s253] sm:$0xf]
      %v292 = vld [vmem:[%s260] sm:$0xf]
      %v293 = vld [vmem:[%s270] sm:$0xff]
      %v295 = vunpack.c.l.b16 %v292
      %v296 = vpack.c.b16 %v295, %v295
      %297 = vrot.lane.b32.xlu0 %v296, 112
      %v298 = vpop.permute.xlu0 %297
      %vm299 = vcmask 64512
      %v301 = vsel %vm299, %v291, 0
      %v304 = vsel %vm299, %v298, 0
      %306 = vmatprep.subr.bf16.mxu0 0
      %307 = vmatpush1.bf16.xpose.msra.mxu0 %v304
      %308 = vmatprep.subr.bf16.mxu0 0
      %309 = vmatpush1.bf16.xpose.msra.mxu0 0
      %310 = vmatprep.subr.bf16.mxu0 0
      %311 = vmatpush1.bf16.xpose.msra.mxu0 0
      %312 = vmatprep.subr.bf16.mxu0 0
      %313 = vmatpush1.bf16.xpose.msra.mxu0 0
      %314 = vmatprep.subr.bf16.mxu0 0
      %315 = vmatpush1.bf16.xpose.msra.mxu0 0
      %316 = vmatprep.subr.bf16.mxu0 0
      %317 = vmatpush1.bf16.xpose.msra.mxu0 0
      %318 = vmatprep.subr.bf16.mxu0 0
      %319 = vmatpush1.bf16.xpose.msra.mxu0 0
      %320 = vmatprep.subr.bf16.mxu0 0
      %321 = vmatpush1.bf16.xpose.msra.mxu0 0
      %322 = vmatprep.subr.bf16.mxu0 0
      %323 = vmatpush1.bf16.xpose.msra.mxu0 0
      %324 = vmatprep.subr.bf16.mxu0 0
      %325 = vmatpush1.bf16.xpose.msra.mxu0 0
      %326 = vmatprep.subr.bf16.mxu0 0
      %327 = vmatpush1.bf16.xpose.msra.mxu0 0
      %328 = vmatprep.subr.bf16.mxu0 0
      %329 = vmatpush1.bf16.xpose.msra.mxu0 0
      %330 = vmatprep.subr.bf16.mxu0 0
      %331 = vmatpush1.bf16.xpose.msra.mxu0 0
      %332 = vmatprep.subr.bf16.mxu0 0
      %333 = vmatpush1.bf16.xpose.msra.mxu0 0
      %334 = vmatprep.subr.bf16.mxu0 0
      %335 = vmatpush1.bf16.xpose.msra.mxu0 0
      %336 = vmatprep.subr.bf16.mxu0 0
      %337 = vmatpush1.bf16.xpose.msra.mxu0 0
      %338 = vmatprep.mubr.bf16.mxu0 0
      %339 = vmatmul.mubr.bf16.gmra.mrb[0].mxu0 %v301
      %v340 = vpop.f32.mrb[0].mxu0
      %v341 = vadd.f32 %v293, %v340
      %v342 = vpop.f32.mrb[0].mxu0
      %v343 = vpop.f32.mrb[0].mxu0
      %v344 = vpop.f32.mrb[0].mxu0
      %345 = vdwg.mxu0
      %v346 = vld [vmem:[#allocation2] sm:$0xff]
      %v347 = vsel %vm299, %v341, -inf
      %348 = vmax.xlane.f32.xlu0 %v347
      %v349 = vpop.xlane.xlu0 %348
      %v350 = vmax.f32 %v346, %v349
      %v351 = vsub.f32 %v346, %v350
      %v352 = vmul.f32 %v351, 1.442695
      %v353 = vpow.pop %v352
      %355 = vset.pattern.permute.xlu0 0
      %356 = vperm.xlu0 %355, %v350
      %v357 = vpop.permute.xlu0 %356
      %v359 = vsub.f32 %v341, %v357
      %v360 = vmul.f32 %v359, 1.442695
      %v361 = vpow.pop %v360
      %v362 = vld [vmem:[#allocation3] sm:$0xff]
      %v363 = vmul.f32 %v353, %v362
      %v364 = vsel %vm299, %v361, 0.0
      %365 = vadd.xlane.f32.xlu0 %v364
      %v366 = vpop.xlane.xlu0 %365
      %v367 = vadd.f32 %v363, %v366
      %vm368 = vcmask 7168
      %369 = vst.msk [vmem:[#allocation3] sm:$0xff] %vm368, %v367
      %v370 = vpack.c.bf16 %v361, %v361
      %371 = vrot.lane.b32.xlu0 %v296, 96
      %v372 = vpop.permute.xlu0 %371
      %v374 = vsel %vm299, %v370, 0
      %vm376 = vcmask 1043456
      %v378 = vsel %vm376, %v372, 0
      %380 = vmatprep.subr.bf16.mxu0 0
      %381 = vmatpush1.bf16.msra.mxu0 %v378
      %382 = vmatprep.subr.bf16.mxu0 0
      %383 = vmatpush1.bf16.msra.mxu0 0
      %384 = vmatprep.subr.bf16.mxu0 0
      %385 = vmatpush1.bf16.msra.mxu0 0
      %386 = vmatprep.subr.bf16.mxu0 0
      %387 = vmatpush1.bf16.msra.mxu0 0
      %388 = vmatprep.subr.bf16.mxu0 0
      %389 = vmatpush1.bf16.msra.mxu0 0
      %390 = vmatprep.subr.bf16.mxu0 0
      %391 = vmatpush1.bf16.msra.mxu0 0
      %392 = vmatprep.subr.bf16.mxu0 0
      %393 = vmatpush1.bf16.msra.mxu0 0
      %394 = vmatprep.subr.bf16.mxu0 0
      %395 = vmatpush1.bf16.msra.mxu0 0
      %396 = vmatprep.subr.bf16.mxu0 0
      %397 = vmatpush1.bf16.msra.mxu0 0
      %398 = vmatprep.subr.bf16.mxu0 0
      %399 = vmatpush1.bf16.msra.mxu0 0
      %400 = vmatprep.subr.bf16.mxu0 0
      %401 = vmatpush1.bf16.msra.mxu0 0
      %402 = vmatprep.subr.bf16.mxu0 0
      %403 = vmatpush1.bf16.msra.mxu0 0
      %404 = vmatprep.subr.bf16.mxu0 0
      %405 = vmatpush1.bf16.msra.mxu0 0
      %406 = vmatprep.subr.bf16.mxu0 0
      %407 = vmatpush1.bf16.msra.mxu0 0
      %408 = vmatprep.subr.bf16.mxu0 0
      %409 = vmatpush1.bf16.msra.mxu0 0
      %410 = vmatprep.subr.bf16.mxu0 0
      %411 = vmatpush1.bf16.msra.mxu0 0
      %412 = vmatprep.mubr.bf16.mxu0 0
      %413 = vmatmul.mubr.bf16.gmra.mrb[0].mxu0 %v374
      %v414 = vpop.f32.mrb[0].mxu0
      %v415 = vadd.f32 0.0, %v414
      %v416 = vpop.f32.mrb[0].mxu0
      %v417 = vpop.f32.mrb[0].mxu0
      %v418 = vpop.f32.mrb[0].mxu0
      %419 = vdwg.mxu0
      %v420 = vld [vmem:[#allocation4] sm:$0xff]
      %422 = vset.pattern.permute.xlu0 0
      %423 = vperm.xlu0 %422, %v353
      %v424 = vpop.permute.xlu0 %423
      %v426 = vmul.f32 %v424, %v420
      %v427 = vadd.f32 %v426, %v415
      %428 = vst.msk [vmem:[#allocation4] sm:$0xff] %vm299, %v427
      %429 = vst.msk [vmem:[#allocation2] sm:$0xff] %vm368, %v350
      %v431 = vunpack.c.l.b16 %v291
      %v432 = vpack.c.b16 %v431, %v431
      %433 = vrot.lane.b32.xlu0 %v432, 120
      %v434 = vpop.permute.xlu0 %433
      %435 = vrot.lane.b32.xlu0 %v296, 104
      %v436 = vpop.permute.xlu0 %435
      %v438 = vsel %vm299, %v434, 0
      %v441 = vsel %vm299, %v436, 0
      %443 = vmatprep.subr.bf16.mxu0 0
      %444 = vmatpush1.bf16.xpose.msra.mxu0 %v441
      %445 = vmatprep.subr.bf16.mxu0 0
      %446 = vmatpush1.bf16.xpose.msra.mxu0 0
      %447 = vmatprep.subr.bf16.mxu0 0
      %448 = vmatpush1.bf16.xpose.msra.mxu0 0
      %449 = vmatprep.subr.bf16.mxu0 0
      %450 = vmatpush1.bf16.xpose.msra.mxu0 0
      %451 = vmatprep.subr.bf16.mxu0 0
      %452 = vmatpush1.bf16.xpose.msra.mxu0 0
      %453 = vmatprep.subr.bf16.mxu0 0
      %454 = vmatpush1.bf16.xpose.msra.mxu0 0
      %455 = vmatprep.subr.bf16.mxu0 0
      %456 = vmatpush1.bf16.xpose.msra.mxu0 0
      %457 = vmatprep.subr.bf16.mxu0 0
      %458 = vmatpush1.bf16.xpose.msra.mxu0 0
      %459 = vmatprep.subr.bf16.mxu0 0
      %460 = vmatpush1.bf16.xpose.msra.mxu0 0
      %461 = vmatprep.subr.bf16.mxu0 0
      %462 = vmatpush1.bf16.xpose.msra.mxu0 0
      %463 = vmatprep.subr.bf16.mxu0 0
      %464 = vmatpush1.bf16.xpose.msra.mxu0 0
      %465 = vmatprep.subr.bf16.mxu0 0
      %466 = vmatpush1.bf16.xpose.msra.mxu0 0
      %467 = vmatprep.subr.bf16.mxu0 0
      %468 = vmatpush1.bf16.xpose.msra.mxu0 0
      %469 = vmatprep.subr.bf16.mxu0 0
      %470 = vmatpush1.bf16.xpose.msra.mxu0 0
      %471 = vmatprep.subr.bf16.mxu0 0
      %472 = vmatpush1.bf16.xpose.msra.mxu0 0
      %473 = vmatprep.subr.bf16.mxu0 0
      %474 = vmatpush1.bf16.xpose.msra.mxu0 0
      %475 = vmatprep.mubr.bf16.mxu0 0
      %476 = vmatmul.mubr.bf16.gmra.mrb[0].mxu0 %v438
      %v477 = vpop.f32.mrb[0].mxu0
      %v478 = vadd.f32 %v293, %v477
      %v479 = vpop.f32.mrb[0].mxu0
      %v480 = vpop.f32.mrb[0].mxu0
      %v481 = vpop.f32.mrb[0].mxu0
      %482 = vdwg.mxu0
      %s483 = scalar_lea.vmem [#allocation2], 8
      %v484 = vld [vmem:[%s483] sm:$0xff]
      %v485 = vsel %vm299, %v478, -inf
      %486 = vmax.xlane.f32.xlu0 %v485
      %v487 = vpop.xlane.xlu0 %486
      %v488 = vmax.f32 %v484, %v487
      %v489 = vsub.f32 %v484, %v488
      %v490 = vmul.f32 %v489, 1.442695
      %v491 = vpow.pop %v490
      %493 = vset.pattern.permute.xlu0 0
      %494 = vperm.xlu0 %493, %v488
      %v495 = vpop.permute.xlu0 %494
      %v497 = vsub.f32 %v478, %v495
      %v498 = vmul.f32 %v497, 1.442695
      %v499 = vpow.pop %v498
      %s500 = scalar_lea.vmem [#allocation3], 8
      %v501 = vld [vmem:[%s500] sm:$0xff]
      %v502 = vmul.f32 %v491, %v501
      %v503 = vsel %vm299, %v499, 0.0
      %504 = vadd.xlane.f32.xlu0 %v503
      %v505 = vpop.xlane.xlu0 %504
      %v506 = vadd.f32 %v502, %v505
      %507 = vst.msk [vmem:[%s500] sm:$0xff] %vm368, %v506
      %v508 = vpack.c.bf16 %v499, %v499
      %509 = vrot.lane.b32.xlu0 %v296, 88
      %v510 = vpop.permute.xlu0 %509
      %v512 = vsel %vm299, %v508, 0
      %v515 = vsel %vm376, %v510, 0
      %517 = vmatprep.subr.bf16.mxu0 0
      %518 = vmatpush1.bf16.msra.mxu0 %v515
      %519 = vmatprep.subr.bf16.mxu0 0
      %520 = vmatpush1.bf16.msra.mxu0 0
      %521 = vmatprep.subr.bf16.mxu0 0
      %522 = vmatpush1.bf16.msra.mxu0 0
      %523 = vmatprep.subr.bf16.mxu0 0
      %524 = vmatpush1.bf16.msra.mxu0 0
      %525 = vmatprep.subr.bf16.mxu0 0
      %526 = vmatpush1.bf16.msra.mxu0 0
      %527 = vmatprep.subr.bf16.mxu0 0
      %528 = vmatpush1.bf16.msra.mxu0 0
      %529 = vmatprep.subr.bf16.mxu0 0
      %530 = vmatpush1.bf16.msra.mxu0 0
      %531 = vmatprep.subr.bf16.mxu0 0
      %532 = vmatpush1.bf16.msra.mxu0 0
      %533 = vmatprep.subr.bf16.mxu0 0
      %534 = vmatpush1.bf16.msra.mxu0 0
      %535 = vmatprep.subr.bf16.mxu0 0
      %536 = vmatpush1.bf16.msra.mxu0 0
      %537 = vmatprep.subr.bf16.mxu0 0
      %538 = vmatpush1.bf16.msra.mxu0 0
      %539 = vmatprep.subr.bf16.mxu0 0
      %540 = vmatpush1.bf16.msra.mxu0 0
      %541 = vmatprep.subr.bf16.mxu0 0
      %542 = vmatpush1.bf16.msra.mxu0 0
      %543 = vmatprep.subr.bf16.mxu0 0
      %544 = vmatpush1.bf16.msra.mxu0 0
      %545 = vmatprep.subr.bf16.mxu0 0
      %546 = vmatpush1.bf16.msra.mxu0 0
      %547 = vmatprep.subr.bf16.mxu0 0
      %548 = vmatpush1.bf16.msra.mxu0 0
      %549 = vmatprep.mubr.bf16.mxu0 0
      %550 = vmatmul.mubr.bf16.gmra.mrb[0].mxu0 %v512
      %v551 = vpop.f32.mrb[0].mxu0
      %v552 = vadd.f32 0.0, %v551
      %v553 = vpop.f32.mrb[0].mxu0
      %v554 = vpop.f32.mrb[0].mxu0
      %v555 = vpop.f32.mrb[0].mxu0
      %556 = vdwg.mxu0
      %s557 = scalar_lea.vmem [#allocation4], 8
      %v558 = vld [vmem:[%s557] sm:$0xff]
      %560 = vset.pattern.permute.xlu0 0
      %561 = vperm.xlu0 %560, %v491
      %v562 = vpop.permute.xlu0 %561
      %v564 = vmul.f32 %v562, %v558
      %v565 = vadd.f32 %v564, %v552
      %566 = vst.msk [vmem:[%s557] sm:$0xff] %vm299, %v565
      %567 = vst.msk [vmem:[%s483] sm:$0xff] %vm368, %v488
      // Predicated region
      $region37: #{bb_bart_encoder_layer.15} parent=31 // pred_check
        %p568 = pneg %p279
      $region38: #{bb_bart_encoder_layer.15} parent=31 // pred_check_branch
        %570 = sbr.rel (%p568) target = $region40
      $region39: #{bb_bart_encoder_layer.15} parent=31 // pred_region
        %v571 = vld [vmem:[#allocation4] sm:$0xff]
        %v572 = vld [vmem:[#allocation3] sm:$0xff]
        %v573 = vrcp.pop %v572
        %575 = vset.pattern.permute.xlu0 0
        %576 = vperm.xlu0 %575, %v573
        %v577 = vpop.permute.xlu0 %576
        %v579 = vmul.f32 %v571, %v577
        %v580 = vld [vmem:[%s557] sm:$0xff]
        %v581 = vld [vmem:[%s500] sm:$0xff]
        %v582 = vrcp.pop %v581
        %584 = vset.pattern.permute.xlu0 0
        %585 = vperm.xlu0 %584, %v582
        %v586 = vpop.permute.xlu0 %585
        %v588 = vmul.f32 %v580, %v586
        %590 = vrot.lane.b32.xlu0 %v588, 8
        %v591 = vpop.permute.xlu0 %590
        %v593 = vsel %vm299, %v579, %v591
        %v594 = vpack.c.bf16 %v593, %v593
        %vm595 = vcmask 125952
        %596 = vst.msk [vmem:[%s277] sm:$0xf] %vm595, %v594
      $region40: #{bb_bart_encoder_layer.15} parent=31 // pred_fallthru
        _
      %p597 = scmp.lt.s32.totalorder %s20, 1
      %s598 = scalar_select %p597, %s20, 1
      %p599 = scmp.lt.s32.totalorder %s22, 0
      %s600 = scalar_select %p599, %s22, 0
      %s601 = sadd.s32 %s600, %s598
      %s602 = smul.addr %s601, 4
      %s603 = scalar_lea.vmem %s3, %s602
      // Predicated region
      $region41: #{bb_bart_encoder_layer.15} parent=31 // pred_check
        %p604 = pneg %p146
      $region42: #{bb_bart_encoder_layer.15} parent=31 // pred_check_branch
        %606 = sbr.rel (%p604) target = $region44
      $region43: #{bb_bart_encoder_layer.15} parent=31 // pred_region
        _
      $region44: #{bb_bart_encoder_layer.15} parent=31 // pred_fallthru
        _
    $region32: #{bb_bart_encoder_layer.15} parent=5 // pred_fallthru
      _
    %p607 = scmp.le.s32.totalorder 2, %s9
    // Predicated region
    $region45: #{bb_bart_encoder_layer.15} parent=5 // pred_check
      %p608 = pneg %p607
    $region46: #{bb_bart_encoder_layer.15} parent=5 // pred_check_branch
      %610 = sbr.rel (%p608) target = $region48
    $region47: #{bb_bart_encoder_layer.15} parent=5 // pred_region
      %s611 = ssub.s32 %s9, 2
      // Predicated region
      $region49: #{bb_bart_encoder_layer.15} parent=47 // pred_check
        %p612 = pneg %p152
      $region50: #{bb_bart_encoder_layer.15} parent=47 // pred_check_branch
        %614 = sbr.rel (%p612) target = $region52
      $region51: #{bb_bart_encoder_layer.15} parent=47 // pred_region
        %p615 = scmp.lt.s32.totalorder %s24, 1
        %s616 = scalar_select %p615, %s24, 1
        %p617 = scmp.lt.s32.totalorder %s26, 0
        %s618 = scalar_select %p617, %s26, 0
        %s619 = sadd.s32 %s618, %s616
        %s620 = smul.addr %s619, 4
        %s621 = scalar_lea.vmem %s3, %s620
      $region52: #{bb_bart_encoder_layer.15} parent=47 // pred_fallthru
        _
    $region48: #{bb_bart_encoder_layer.15} parent=5 // pred_fallthru
      _
  $region6: #{bb_bart_encoder_layer.15} parent=0 // loop_footer
    %s13 = sadd.s32 1, %s9
  $region7: #{bb_bart_encoder_layer.15} parent=0 // loop_footer_branch
    %8 = sbr.rel target = $region3
  $region8: #{bb_bart_encoder_layer.15} parent=0 // loop_exit
    _

</llo_original>
